<compile_context>
chip_gen: v7x
topology: tpu7x:2x2x1
jax: 0.10.0
libtpu: 0.0.40
codegen_flags: <defaults>
</compile_context>

<pallas_src>
import functools

import jax
import jax.numpy as jnp
from jax.experimental import pallas as pl
from jax.experimental.pallas import tpu as pltpu


# ------------------------------ tiling helpers ------------------------------

def _pick_row_block(H, W, target_rows=128):
    """Largest TH dividing H with TH*W a multiple of 8 and TH*W <= target."""
    best = None
    for th in range(1, H + 1):
        if H % th == 0 and (th * W) % 8 == 0 and th * W <= target_rows:
            best = th
    if best is None:                 # full-dim block is always legal
        best = H
    return best


def _pick_rows(M, max_rows=2048):
    """Row-block for elementwise kernels: multiple of 8, divides M, large
    enough for DMA efficiency, small enough to leave >= 2 parallel blocks."""
    target = max(8, min(max_rows, M // 2 if M >= 16 else M))
    best = M
    for tm in range(8, min(target, M) + 1, 8):
        if M % tm == 0:
            best = tm
    return best


# ------------------- fused 3x3 conv + BN-statistics kernel ------------------

def _conv3x3_stats_kernel(x_ref, w_ref, o_ref, stats_ref, acc_ref, *, TH, W, C):
    # x_ref: (1, H+2, W+2, C) bf16 (whole padded sample, resident across the
    #         row-block axis so it is DMA'd only once per sample)
    # w_ref: (9, C, Cout) bf16 (resident for the whole grid)
    # o_ref: (1, TH*W, Cout) f32 conv output rows for this (sample, row-block)
    # stats_ref: (1, 1, 2, Cout) partial [sum, sum_sq] over this block's rows
    h0 = pl.program_id(1) * TH
    acc_ref[...] = jnp.zeros_like(acc_ref)
    for di in range(3):
        for dj in range(3):
            # Implicit im2col: gather tap (di, dj) straight from VMEM.
            patch = x_ref[0, pl.ds(h0 + di, TH), dj:dj + W, :]      # (TH, W, C)
            a = patch.reshape(TH * W, C)                            # bf16
            acc_ref[...] += jnp.dot(a, w_ref[di * 3 + dj],
                                    preferred_element_type=jnp.float32)
    acc = acc_ref[...]
    o_ref[0] = acc
    # BN partial statistics in the epilogue (XLU work, rides under the MXU).
    stats_ref[0, 0, 0:1, :] = jnp.sum(acc, axis=0, keepdims=True)
    stats_ref[0, 0, 1:2, :] = jnp.sum(acc * acc, axis=0, keepdims=True)


def conv3x3_stats(x_pad, w_taps, *, target_rows=128):
    """3x3 / stride-1 conv of a spatially padded NHWC bf16 input.

    Returns (conv_out (N, H*W, Cout) f32, partial_stats (N, n_hb, 2, Cout))."""
    N, Hp, Wp, C = x_pad.shape
    H, W = Hp - 2, Wp - 2
    KK, Cin, Cout = w_taps.shape
    assert KK == 9 and Cin == C
    TH = _pick_row_block(H, W, target_rows)
    n_hb = H // TH
    kernel = functools.partial(_conv3x3_stats_kernel, TH=TH, W=W, C=C)
    return pl.pallas_call(
        kernel,
        out_shape=(jax.ShapeDtypeStruct((N, H * W, Cout), jnp.float32),
                   jax.ShapeDtypeStruct((N, n_hb, 2, Cout), jnp.float32)),
        grid_spec=pltpu.PrefetchScalarGridSpec(
            num_scalar_prefetch=0,
            grid=(N, n_hb),
            in_specs=[
                # Whole padded sample; block index constant over hb -> one DMA
                # per sample, auto-pipelined across the batch axis.
                pl.BlockSpec((1, Hp, Wp, C), lambda n, hb: (n, 0, 0, 0)),
                pl.BlockSpec((9, C, Cout), lambda n, hb: (0, 0, 0)),
            ],
            out_specs=[
                pl.BlockSpec((1, TH * W, Cout), lambda n, hb: (n, hb, 0)),
                pl.BlockSpec((1, 1, 2, Cout), lambda n, hb: (n, hb, 0, 0)),
            ],
            scratch_shapes=[pltpu.VMEM((TH * W, Cout), jnp.float32)]),
        compiler_params=pltpu.CompilerParams(
            dimension_semantics=("parallel", "parallel")),
    )(x_pad, w_taps)


# -------------- fused BN-normalize (+ PReLU) (+ residual) kernel ------------

def _bn_act_kernel(*refs, apply_prelu, add_residual):
    idx = 0
    y_ref = refs[idx]; idx += 1
    scale_ref = refs[idx]; idx += 1
    shift_ref = refs[idx]; idx += 1
    alpha_ref = None
    if apply_prelu:
        alpha_ref = refs[idx]; idx += 1
    res_ref = None
    if add_residual:
        res_ref = refs[idx]; idx += 1
    o_ref = refs[idx]

    y = y_ref[...] * scale_ref[...] + shift_ref[...]
    if apply_prelu:
        a = alpha_ref[...]                       # (1, 1) broadcast
        y = jnp.where(y >= 0.0, y, a * y)
    if add_residual:
        y = y + res_ref[...]
    o_ref[...] = y.astype(o_ref.dtype)


def bn_prelu_residual(y2d, scale, shift, alpha=None, residual=None,
                      out_dtype=jnp.float32):
    """Row-tiled, lane-dense fused BatchNorm affine + PReLU + residual add."""
    M, C = y2d.shape
    TM = _pick_rows(M)
    apply_prelu = alpha is not None
    add_residual = residual is not None

    operands = [y2d, scale, shift]
    in_specs = [pl.BlockSpec((TM, C), lambda i: (i, 0)),
                pl.BlockSpec((1, C), lambda i: (0, 0)),
                pl.BlockSpec((1, C), lambda i: (0, 0))]
    if apply_prelu:
        operands.append(jnp.reshape(alpha, (1, 1)).astype(jnp.float32))
        in_specs.append(pl.BlockSpec((1, 1), lambda i: (0, 0)))
    if add_residual:
        operands.append(residual)
        in_specs.append(pl.BlockSpec((TM, C), lambda i: (i, 0)))

    kernel = functools.partial(_bn_act_kernel, apply_prelu=apply_prelu,
                               add_residual=add_residual)
    return pl.pallas_call(
        kernel,
        out_shape=jax.ShapeDtypeStruct((M, C), out_dtype),
        grid_spec=pltpu.PrefetchScalarGridSpec(
            num_scalar_prefetch=0,
            grid=(M // TM,),
            in_specs=in_specs,
            out_specs=pl.BlockSpec((TM, C), lambda i: (i, 0))),
        compiler_params=pltpu.CompilerParams(
            dimension_semantics=("parallel",)),
    )(*operands)


# ------------------------------- glue helpers -------------------------------

def prep_conv_weight(w_oihw):
    """(Cout, Cin, 3, 3) OIHW -> (9, Cin, Cout) bf16 tap matrices (hoisted)."""
    co, ci, kh, kw = w_oihw.shape
    w = jnp.transpose(w_oihw, (2, 3, 1, 0)).reshape(kh * kw, ci, co)
    return w.astype(jnp.bfloat16)


def _bn_scale_shift(stats, count, gamma, beta, eps=1e-5):
    """Combine per-block partial stats into per-channel scale/shift (O(C))."""
    s = jnp.sum(stats[:, :, 0, :], axis=(0, 1))
    sq = jnp.sum(stats[:, :, 1, :], axis=(0, 1))
    mean = s / count
    var = jnp.maximum(sq / count - mean * mean, 0.0)   # biased (training mode)
    scale = gamma * jax.lax.rsqrt(var + eps)
    shift = beta - mean * scale
    return scale.reshape(1, -1), shift.reshape(1, -1)


# ------------------------------ ResBlock forward -----------------------------

def res_block_forward(params, x_nchw):
    x = jnp.transpose(x_nchw, (0, 2, 3, 1)).astype(jnp.float32)      # NHWC
    N, H, W, C = x.shape
    w_taps = prep_conv_weight(params['conv_w'])     # shared by both convs
    gamma = params['bn_gamma'].astype(jnp.float32)
    beta = params['bn_beta'].astype(jnp.float32)
    alpha = params['prelu_alpha']
    count = N * H * W

    # conv1 + in-kernel partial BN stats
    xp = jnp.pad(x, ((0, 0), (1, 1), (1, 1), (0, 0))).astype(jnp.bfloat16)
    y1, st1 = conv3x3_stats(xp, w_taps)
    scale1, shift1 = _bn_scale_shift(st1, count, gamma, beta)
    # fused BN + PReLU, emitted as bf16 to feed conv2's MXU directly
    h1 = bn_prelu_residual(y1.reshape(N * H * W, C), scale1, shift1,
                           alpha=alpha, out_dtype=jnp.bfloat16)

    # conv2 (same weight) + stats
    h1p = jnp.pad(h1.reshape(N, H, W, C), ((0, 0), (1, 1), (1, 1), (0, 0)))
    y2, st2 = conv3x3_stats(h1p, w_taps)
    scale2, shift2 = _bn_scale_shift(st2, count, gamma, beta)
    # fused BN + residual add (no activation on the second application)
    out = bn_prelu_residual(y2.reshape(N * H * W, C), scale2, shift2,
                            alpha=None, residual=x.reshape(N * H * W, C),
                            out_dtype=jnp.float32)
    return jnp.transpose(out.reshape(N, H, W, C), (0, 3, 1, 2))


# --------------------- pure-XLA reference (sanity check) ---------------------

def _reference_resblock(params, x_nchw):
    """Same bf16-input / f32-accumulate convention, via lax.conv, for checking."""
    x = jnp.transpose(x_nchw, (0, 2, 3, 1)).astype(jnp.float32)
    w = jnp.transpose(params['conv_w'], (2, 3, 1, 0)).astype(jnp.bfloat16)  # HWIO
    gamma, beta, alpha = params['bn_gamma'], params['bn_beta'], params['prelu_alpha']

    def conv(v):
        return jax.lax.conv_general_dilated(
            v.astype(jnp.bfloat16), w, window_strides=(1, 1), padding='SAME',
            dimension_numbers=('NHWC', 'HWIO', 'NHWC'),
            preferred_element_type=jnp.float32)

    def bn(v):
        mean = jnp.mean(v, axis=(0, 1, 2))
        var = jnp.var(v, axis=(0, 1, 2))
        return (v - mean) * jax.lax.rsqrt(var + 1e-5) * gamma + beta

    y = bn(conv(x))
    y = jnp.where(y >= 0.0, y, alpha * y)
    y = bn(conv(y))
    return jnp.transpose(y + x, (0, 3, 1, 2))


# ----------------------------------- main ------------------------------------

if __name__ == "__main__":
    key = jax.random.PRNGKey(0)
    k_w, k_x, k_g, k_b = jax.random.split(key, 4)
    N, C, H, W = 2, 128, 16, 16            # ResBlock requires 128 channels

    params = {
        'conv_w': 0.05 * jax.random.normal(k_w, (C, C, 3, 3), jnp.float32),
        'bn_gamma': 1.0 + 0.1 * jax.random.normal(k_g, (C,), jnp.float32),
        'bn_beta': 0.1 * jax.random.normal(k_b, (C,), jnp.float32),
        'prelu_alpha': jnp.float32(0.25),   # nn.PReLU() default init
    }
    x = jax.random.normal(k_x, (N, C, H, W), jnp.float32)

    fwd = jax.jit(res_block_forward)
    out = fwd(params, x)
    jax.block_until_ready(out)
    assert out.shape == (N, C, H, W) and out.dtype == jnp.float32

    ref = _reference_resblock(params, x)
    max_err = float(jnp.max(jnp.abs(out - ref)))
    assert max_err < 2e-2, f"mismatch vs reference: {max_err}"
    print("KERNEL_OK")
</pallas_src>

<mosaic_0001>
module attributes {stable_mosaic.version = 11 : i64} {
  func.func @_conv3x3_stats_kernel(%arg0: i32, %arg1: i32, %arg2: memref<1x18x18x128xbf16, #tpu.memory_space<vmem>>, %arg3: memref<9x128x128xbf16, #tpu.memory_space<vmem>>, %arg4: memref<1x128x128xf32, #tpu.memory_space<vmem>>, %arg5: memref<1x1x2x128xf32, #tpu.memory_space<vmem>>, %arg6: memref<128x128xf32, #tpu.memory_space<vmem>>) attributes {dimension_semantics = [#tpu.dimension_semantics<parallel>, #tpu.dimension_semantics<parallel>], iteration_bounds = array<i64: 2, 2>, scalar_prefetch = 0 : i64, scratch_operands = 1 : i64, tpu.core_type = #tpu.core_type<tc>, window_params = [{transform_indices = @transform_0, window_bounds = array<i64: 1, 18, 18, 128>}, {pipeline_mode = #tpu.pipeline_mode<synchronous>, transform_indices = @transform_1, window_bounds = array<i64: 9, 128, 128>}, {transform_indices = @transform_2, window_bounds = array<i64: 1, 128, 128>}, {transform_indices = @transform_3, window_bounds = array<i64: 1, 1, 2, 128>}]} {
    %c8_i32 = arith.constant 8 : i32
    %0 = arith.muli %arg1, %c8_i32 : i32
    %cst = arith.constant 0.000000e+00 : f32
    %1 = vector.broadcast %cst : f32 to vector<128x128xf32>
    %c0 = arith.constant 0 : index
    %c0_0 = arith.constant 0 : index
    %2 = vector.load %arg6[%c0, %c0_0] : memref<128x128xf32, #tpu.memory_space<vmem>>, vector<128x128xf32>
    tpu.vector_store %arg6[%c0, %c0_0], %1 {strides = array<i32>} : memref<128x128xf32, #tpu.memory_space<vmem>>, vector<128x128xf32>,
    %c0_i32 = arith.constant 0 : i32
    %3 = arith.addi %0, %c0_i32 : i32
    %c0_1 = arith.constant 0 : index
    %4 = arith.index_cast %3 : i32 to index
    %c0_2 = arith.constant 0 : index
    %c0_3 = arith.constant 0 : index
    %5 = vector.load %arg2[%c0_1, %4, %c0_2, %c0_3] : memref<1x18x18x128xbf16, #tpu.memory_space<vmem>>, vector<1x8x16x128xbf16>
    %6 = vector.shape_cast %5 : vector<1x8x16x128xbf16> to vector<8x16x128xbf16>
    %7 = vector.shape_cast %6 : vector<8x16x128xbf16> to vector<128x128xbf16>
    %c0_4 = arith.constant 0 : index
    %c0_5 = arith.constant 0 : index
    %8 = vector.load %arg6[%c0_4, %c0_5] : memref<128x128xf32, #tpu.memory_space<vmem>>, vector<128x128xf32>
    %c0_6 = arith.constant 0 : index
    %c0_7 = arith.constant 0 : index
    %c0_8 = arith.constant 0 : index
    %9 = vector.load %arg3[%c0_6, %c0_7, %c0_8] : memref<9x128x128xbf16, #tpu.memory_space<vmem>>, vector<1x128x128xbf16>
    %10 = vector.shape_cast %9 : vector<1x128x128xbf16> to vector<128x128xbf16>
    %cst_9 = arith.constant dense<0.000000e+00> : vector<128x128xf32>
    %11 = tpu.matmul %7, %10, %cst_9 {dimension_numbers = #tpu.dot_dimension_numbers<[1], [0], [0], [1], [0, 0, 1, 1], [], []>} : vector<128x128xbf16>, vector<128x128xbf16>, vector<128x128xf32> -> vector<128x128xf32>
    %12 = arith.addf %8, %11 : vector<128x128xf32>
    %c0_10 = arith.constant 0 : index
    %c0_11 = arith.constant 0 : index
    %13 = vector.load %arg6[%c0_10, %c0_11] : memref<128x128xf32, #tpu.memory_space<vmem>>, vector<128x128xf32>
    tpu.vector_store %arg6[%c0_10, %c0_11], %12 {strides = array<i32>} : memref<128x128xf32, #tpu.memory_space<vmem>>, vector<128x128xf32>,
    %c0_i32_12 = arith.constant 0 : i32
    %14 = arith.addi %0, %c0_i32_12 : i32
    %c0_13 = arith.constant 0 : index
    %15 = arith.index_cast %14 : i32 to index
    %c1 = arith.constant 1 : index
    %c0_14 = arith.constant 0 : index
    %16 = vector.load %arg2[%c0_13, %15, %c1, %c0_14] : memref<1x18x18x128xbf16, #tpu.memory_space<vmem>>, vector<1x8x16x128xbf16>
    %17 = vector.shape_cast %16 : vector<1x8x16x128xbf16> to vector<8x16x128xbf16>
    %18 = vector.shape_cast %17 : vector<8x16x128xbf16> to vector<128x128xbf16>
    %c0_15 = arith.constant 0 : index
    %c0_16 = arith.constant 0 : index
    %19 = vector.load %arg6[%c0_15, %c0_16] : memref<128x128xf32, #tpu.memory_space<vmem>>, vector<128x128xf32>
    %c1_17 = arith.constant 1 : index
    %c0_18 = arith.constant 0 : index
    %c0_19 = arith.constant 0 : index
    %20 = vector.load %arg3[%c1_17, %c0_18, %c0_19] : memref<9x128x128xbf16, #tpu.memory_space<vmem>>, vector<1x128x128xbf16>
    %21 = vector.shape_cast %20 : vector<1x128x128xbf16> to vector<128x128xbf16>
    %cst_20 = arith.constant dense<0.000000e+00> : vector<128x128xf32>
    %22 = tpu.matmul %18, %21, %cst_20 {dimension_numbers = #tpu.dot_dimension_numbers<[1], [0], [0], [1], [0, 0, 1, 1], [], []>} : vector<128x128xbf16>, vector<128x128xbf16>, vector<128x128xf32> -> vector<128x128xf32>
    %23 = arith.addf %19, %22 : vector<128x128xf32>
    %c0_21 = arith.constant 0 : index
    %c0_22 = arith.constant 0 : index
    %24 = vector.load %arg6[%c0_21, %c0_22] : memref<128x128xf32, #tpu.memory_space<vmem>>, vector<128x128xf32>
    tpu.vector_store %arg6[%c0_21, %c0_22], %23 {strides = array<i32>} : memref<128x128xf32, #tpu.memory_space<vmem>>, vector<128x128xf32>,
    %c0_i32_23 = arith.constant 0 : i32
    %25 = arith.addi %0, %c0_i32_23 : i32
    %c0_24 = arith.constant 0 : index
    %26 = arith.index_cast %25 : i32 to index
    %c2 = arith.constant 2 : index
    %c0_25 = arith.constant 0 : index
    %27 = vector.load %arg2[%c0_24, %26, %c2, %c0_25] : memref<1x18x18x128xbf16, #tpu.memory_space<vmem>>, vector<1x8x16x128xbf16>
    %28 = vector.shape_cast %27 : vector<1x8x16x128xbf16> to vector<8x16x128xbf16>
    %29 = vector.shape_cast %28 : vector<8x16x128xbf16> to vector<128x128xbf16>
    %c0_26 = arith.constant 0 : index
    %c0_27 = arith.constant 0 : index
    %30 = vector.load %arg6[%c0_26, %c0_27] : memref<128x128xf32, #tpu.memory_space<vmem>>, vector<128x128xf32>
    %c2_28 = arith.constant 2 : index
    %c0_29 = arith.constant 0 : index
    %c0_30 = arith.constant 0 : index
    %31 = vector.load %arg3[%c2_28, %c0_29, %c0_30] : memref<9x128x128xbf16, #tpu.memory_space<vmem>>, vector<1x128x128xbf16>
    %32 = vector.shape_cast %31 : vector<1x128x128xbf16> to vector<128x128xbf16>
    %cst_31 = arith.constant dense<0.000000e+00> : vector<128x128xf32>
    %33 = tpu.matmul %29, %32, %cst_31 {dimension_numbers = #tpu.dot_dimension_numbers<[1], [0], [0], [1], [0, 0, 1, 1], [], []>} : vector<128x128xbf16>, vector<128x128xbf16>, vector<128x128xf32> -> vector<128x128xf32>
    %34 = arith.addf %30, %33 : vector<128x128xf32>
    %c0_32 = arith.constant 0 : index
    %c0_33 = arith.constant 0 : index
    %35 = vector.load %arg6[%c0_32, %c0_33] : memref<128x128xf32, #tpu.memory_space<vmem>>, vector<128x128xf32>
    tpu.vector_store %arg6[%c0_32, %c0_33], %34 {strides = array<i32>} : memref<128x128xf32, #tpu.memory_space<vmem>>, vector<128x128xf32>,
    %c1_i32 = arith.constant 1 : i32
    %36 = arith.addi %0, %c1_i32 : i32
    %c0_34 = arith.constant 0 : index
    %37 = arith.index_cast %36 : i32 to index
    %c0_35 = arith.constant 0 : index
    %c0_36 = arith.constant 0 : index
    %38 = vector.load %arg2[%c0_34, %37, %c0_35, %c0_36] : memref<1x18x18x128xbf16, #tpu.memory_space<vmem>>, vector<1x8x16x128xbf16>
    %39 = vector.shape_cast %38 : vector<1x8x16x128xbf16> to vector<8x16x128xbf16>
    %40 = vector.shape_cast %39 : vector<8x16x128xbf16> to vector<128x128xbf16>
    %c0_37 = arith.constant 0 : index
    %c0_38 = arith.constant 0 : index
    %41 = vector.load %arg6[%c0_37, %c0_38] : memref<128x128xf32, #tpu.memory_space<vmem>>, vector<128x128xf32>
    %c3 = arith.constant 3 : index
    %c0_39 = arith.constant 0 : index
    %c0_40 = arith.constant 0 : index
    %42 = vector.load %arg3[%c3, %c0_39, %c0_40] : memref<9x128x128xbf16, #tpu.memory_space<vmem>>, vector<1x128x128xbf16>
    %43 = vector.shape_cast %42 : vector<1x128x128xbf16> to vector<128x128xbf16>
    %cst_41 = arith.constant dense<0.000000e+00> : vector<128x128xf32>
    %44 = tpu.matmul %40, %43, %cst_41 {dimension_numbers = #tpu.dot_dimension_numbers<[1], [0], [0], [1], [0, 0, 1, 1], [], []>} : vector<128x128xbf16>, vector<128x128xbf16>, vector<128x128xf32> -> vector<128x128xf32>
    %45 = arith.addf %41, %44 : vector<128x128xf32>
    %c0_42 = arith.constant 0 : index
    %c0_43 = arith.constant 0 : index
    %46 = vector.load %arg6[%c0_42, %c0_43] : memref<128x128xf32, #tpu.memory_space<vmem>>, vector<128x128xf32>
    tpu.vector_store %arg6[%c0_42, %c0_43], %45 {strides = array<i32>} : memref<128x128xf32, #tpu.memory_space<vmem>>, vector<128x128xf32>,
    %c1_i32_44 = arith.constant 1 : i32
    %47 = arith.addi %0, %c1_i32_44 : i32
    %c0_45 = arith.constant 0 : index
    %48 = arith.index_cast %47 : i32 to index
    %c1_46 = arith.constant 1 : index
    %c0_47 = arith.constant 0 : index
    %49 = vector.load %arg2[%c0_45, %48, %c1_46, %c0_47] : memref<1x18x18x128xbf16, #tpu.memory_space<vmem>>, vector<1x8x16x128xbf16>
    %50 = vector.shape_cast %49 : vector<1x8x16x128xbf16> to vector<8x16x128xbf16>
    %51 = vector.shape_cast %50 : vector<8x16x128xbf16> to vector<128x128xbf16>
    %c0_48 = arith.constant 0 : index
    %c0_49 = arith.constant 0 : index
    %52 = vector.load %arg6[%c0_48, %c0_49] : memref<128x128xf32, #tpu.memory_space<vmem>>, vector<128x128xf32>
    %c4 = arith.constant 4 : index
    %c0_50 = arith.constant 0 : index
    %c0_51 = arith.constant 0 : index
    %53 = vector.load %arg3[%c4, %c0_50, %c0_51] : memref<9x128x128xbf16, #tpu.memory_space<vmem>>, vector<1x128x128xbf16>
    %54 = vector.shape_cast %53 : vector<1x128x128xbf16> to vector<128x128xbf16>
    %cst_52 = arith.constant dense<0.000000e+00> : vector<128x128xf32>
    %55 = tpu.matmul %51, %54, %cst_52 {dimension_numbers = #tpu.dot_dimension_numbers<[1], [0], [0], [1], [0, 0, 1, 1], [], []>} : vector<128x128xbf16>, vector<128x128xbf16>, vector<128x128xf32> -> vector<128x128xf32>
    %56 = arith.addf %52, %55 : vector<128x128xf32>
    %c0_53 = arith.constant 0 : index
    %c0_54 = arith.constant 0 : index
    %57 = vector.load %arg6[%c0_53, %c0_54] : memref<128x128xf32, #tpu.memory_space<vmem>>, vector<128x128xf32>
    tpu.vector_store %arg6[%c0_53, %c0_54], %56 {strides = array<i32>} : memref<128x128xf32, #tpu.memory_space<vmem>>, vector<128x128xf32>,
    %c1_i32_55 = arith.constant 1 : i32
    %58 = arith.addi %0, %c1_i32_55 : i32
    %c0_56 = arith.constant 0 : index
    %59 = arith.index_cast %58 : i32 to index
    %c2_57 = arith.constant 2 : index
    %c0_58 = arith.constant 0 : index
    %60 = vector.load %arg2[%c0_56, %59, %c2_57, %c0_58] : memref<1x18x18x128xbf16, #tpu.memory_space<vmem>>, vector<1x8x16x128xbf16>
    %61 = vector.shape_cast %60 : vector<1x8x16x128xbf16> to vector<8x16x128xbf16>
    %62 = vector.shape_cast %61 : vector<8x16x128xbf16> to vector<128x128xbf16>
    %c0_59 = arith.constant 0 : index
    %c0_60 = arith.constant 0 : index
    %63 = vector.load %arg6[%c0_59, %c0_60] : memref<128x128xf32, #tpu.memory_space<vmem>>, vector<128x128xf32>
    %c5 = arith.constant 5 : index
    %c0_61 = arith.constant 0 : index
    %c0_62 = arith.constant 0 : index
    %64 = vector.load %arg3[%c5, %c0_61, %c0_62] : memref<9x128x128xbf16, #tpu.memory_space<vmem>>, vector<1x128x128xbf16>
    %65 = vector.shape_cast %64 : vector<1x128x128xbf16> to vector<128x128xbf16>
    %cst_63 = arith.constant dense<0.000000e+00> : vector<128x128xf32>
    %66 = tpu.matmul %62, %65, %cst_63 {dimension_numbers = #tpu.dot_dimension_numbers<[1], [0], [0], [1], [0, 0, 1, 1], [], []>} : vector<128x128xbf16>, vector<128x128xbf16>, vector<128x128xf32> -> vector<128x128xf32>
    %67 = arith.addf %63, %66 : vector<128x128xf32>
    %c0_64 = arith.constant 0 : index
    %c0_65 = arith.constant 0 : index
    %68 = vector.load %arg6[%c0_64, %c0_65] : memref<128x128xf32, #tpu.memory_space<vmem>>, vector<128x128xf32>
    tpu.vector_store %arg6[%c0_64, %c0_65], %67 {strides = array<i32>} : memref<128x128xf32, #tpu.memory_space<vmem>>, vector<128x128xf32>,
    %c2_i32 = arith.constant 2 : i32
    %69 = arith.addi %0, %c2_i32 : i32
    %c0_66 = arith.constant 0 : index
    %70 = arith.index_cast %69 : i32 to index
    %c0_67 = arith.constant 0 : index
    %c0_68 = arith.constant 0 : index
    %71 = vector.load %arg2[%c0_66, %70, %c0_67, %c0_68] : memref<1x18x18x128xbf16, #tpu.memory_space<vmem>>, vector<1x8x16x128xbf16>
    %72 = vector.shape_cast %71 : vector<1x8x16x128xbf16> to vector<8x16x128xbf16>
    %73 = vector.shape_cast %72 : vector<8x16x128xbf16> to vector<128x128xbf16>
    %c0_69 = arith.constant 0 : index
    %c0_70 = arith.constant 0 : index
    %74 = vector.load %arg6[%c0_69, %c0_70] : memref<128x128xf32, #tpu.memory_space<vmem>>, vector<128x128xf32>
    %c6 = arith.constant 6 : index
    %c0_71 = arith.constant 0 : index
    %c0_72 = arith.constant 0 : index
    %75 = vector.load %arg3[%c6, %c0_71, %c0_72] : memref<9x128x128xbf16, #tpu.memory_space<vmem>>, vector<1x128x128xbf16>
    %76 = vector.shape_cast %75 : vector<1x128x128xbf16> to vector<128x128xbf16>
    %cst_73 = arith.constant dense<0.000000e+00> : vector<128x128xf32>
    %77 = tpu.matmul %73, %76, %cst_73 {dimension_numbers = #tpu.dot_dimension_numbers<[1], [0], [0], [1], [0, 0, 1, 1], [], []>} : vector<128x128xbf16>, vector<128x128xbf16>, vector<128x128xf32> -> vector<128x128xf32>
    %78 = arith.addf %74, %77 : vector<128x128xf32>
    %c0_74 = arith.constant 0 : index
    %c0_75 = arith.constant 0 : index
    %79 = vector.load %arg6[%c0_74, %c0_75] : memref<128x128xf32, #tpu.memory_space<vmem>>, vector<128x128xf32>
    tpu.vector_store %arg6[%c0_74, %c0_75], %78 {strides = array<i32>} : memref<128x128xf32, #tpu.memory_space<vmem>>, vector<128x128xf32>,
    %c2_i32_76 = arith.constant 2 : i32
    %80 = arith.addi %0, %c2_i32_76 : i32
    %c0_77 = arith.constant 0 : index
    %81 = arith.index_cast %80 : i32 to index
    %c1_78 = arith.constant 1 : index
    %c0_79 = arith.constant 0 : index
    %82 = vector.load %arg2[%c0_77, %81, %c1_78, %c0_79] : memref<1x18x18x128xbf16, #tpu.memory_space<vmem>>, vector<1x8x16x128xbf16>
    %83 = vector.shape_cast %82 : vector<1x8x16x128xbf16> to vector<8x16x128xbf16>
    %84 = vector.shape_cast %83 : vector<8x16x128xbf16> to vector<128x128xbf16>
    %c0_80 = arith.constant 0 : index
    %c0_81 = arith.constant 0 : index
    %85 = vector.load %arg6[%c0_80, %c0_81] : memref<128x128xf32, #tpu.memory_space<vmem>>, vector<128x128xf32>
    %c7 = arith.constant 7 : index
    %c0_82 = arith.constant 0 : index
    %c0_83 = arith.constant 0 : index
    %86 = vector.load %arg3[%c7, %c0_82, %c0_83] : memref<9x128x128xbf16, #tpu.memory_space<vmem>>, vector<1x128x128xbf16>
    %87 = vector.shape_cast %86 : vector<1x128x128xbf16> to vector<128x128xbf16>
    %cst_84 = arith.constant dense<0.000000e+00> : vector<128x128xf32>
    %88 = tpu.matmul %84, %87, %cst_84 {dimension_numbers = #tpu.dot_dimension_numbers<[1], [0], [0], [1], [0, 0, 1, 1], [], []>} : vector<128x128xbf16>, vector<128x128xbf16>, vector<128x128xf32> -> vector<128x128xf32>
    %89 = arith.addf %85, %88 : vector<128x128xf32>
    %c0_85 = arith.constant 0 : index
    %c0_86 = arith.constant 0 : index
    %90 = vector.load %arg6[%c0_85, %c0_86] : memref<128x128xf32, #tpu.memory_space<vmem>>, vector<128x128xf32>
    tpu.vector_store %arg6[%c0_85, %c0_86], %89 {strides = array<i32>} : memref<128x128xf32, #tpu.memory_space<vmem>>, vector<128x128xf32>,
    %c2_i32_87 = arith.constant 2 : i32
    %91 = arith.addi %0, %c2_i32_87 : i32
    %c0_88 = arith.constant 0 : index
    %92 = arith.index_cast %91 : i32 to index
    %c2_89 = arith.constant 2 : index
    %c0_90 = arith.constant 0 : index
    %93 = vector.load %arg2[%c0_88, %92, %c2_89, %c0_90] : memref<1x18x18x128xbf16, #tpu.memory_space<vmem>>, vector<1x8x16x128xbf16>
    %94 = vector.shape_cast %93 : vector<1x8x16x128xbf16> to vector<8x16x128xbf16>
    %95 = vector.shape_cast %94 : vector<8x16x128xbf16> to vector<128x128xbf16>
    %c0_91 = arith.constant 0 : index
    %c0_92 = arith.constant 0 : index
    %96 = vector.load %arg6[%c0_91, %c0_92] : memref<128x128xf32, #tpu.memory_space<vmem>>, vector<128x128xf32>
    %c8 = arith.constant 8 : index
    %c0_93 = arith.constant 0 : index
    %c0_94 = arith.constant 0 : index
    %97 = vector.load %arg3[%c8, %c0_93, %c0_94] : memref<9x128x128xbf16, #tpu.memory_space<vmem>>, vector<1x128x128xbf16>
    %98 = vector.shape_cast %97 : vector<1x128x128xbf16> to vector<128x128xbf16>
    %cst_95 = arith.constant dense<0.000000e+00> : vector<128x128xf32>
    %99 = tpu.matmul %95, %98, %cst_95 {dimension_numbers = #tpu.dot_dimension_numbers<[1], [0], [0], [1], [0, 0, 1, 1], [], []>} : vector<128x128xbf16>, vector<128x128xbf16>, vector<128x128xf32> -> vector<128x128xf32>
    %100 = arith.addf %96, %99 : vector<128x128xf32>
    %c0_96 = arith.constant 0 : index
    %c0_97 = arith.constant 0 : index
    %101 = vector.load %arg6[%c0_96, %c0_97] : memref<128x128xf32, #tpu.memory_space<vmem>>, vector<128x128xf32>
    tpu.vector_store %arg6[%c0_96, %c0_97], %100 {strides = array<i32>} : memref<128x128xf32, #tpu.memory_space<vmem>>, vector<128x128xf32>,
    %c0_98 = arith.constant 0 : index
    %c0_99 = arith.constant 0 : index
    %102 = vector.load %arg6[%c0_98, %c0_99] : memref<128x128xf32, #tpu.memory_space<vmem>>, vector<128x128xf32>
    %c0_100 = arith.constant 0 : index
    %c0_101 = arith.constant 0 : index
    %c0_102 = arith.constant 0 : index
    %103 = vector.load %arg4[%c0_100, %c0_101, %c0_102] : memref<1x128x128xf32, #tpu.memory_space<vmem>>, vector<1x128x128xf32>
    %104 = vector.shape_cast %103 : vector<1x128x128xf32> to vector<128x128xf32>
    %105 = vector.shape_cast %102 : vector<128x128xf32> to vector<1x128x128xf32>
    tpu.vector_store %arg4[%c0_100, %c0_101, %c0_102], %105 {strides = array<i32>} : memref<1x128x128xf32, #tpu.memory_space<vmem>>, vector<1x128x128xf32>,
    %cst_103 = arith.constant dense<0.000000e+00> : vector<128xf32>
    %106 = vector.multi_reduction <add>, %102, %cst_103 [0] : vector<128x128xf32> to vector<128xf32>
    %107 = vector.shape_cast %106 : vector<128xf32> to vector<1x128xf32>
    %c0_104 = arith.constant 0 : index
    %c0_105 = arith.constant 0 : index
    %c0_106 = arith.constant 0 : index
    %c0_107 = arith.constant 0 : index
    %108 = vector.load %arg5[%c0_104, %c0_105, %c0_106, %c0_107] : memref<1x1x2x128xf32, #tpu.memory_space<vmem>>, vector<1x1x1x128xf32>
    %109 = vector.shape_cast %108 : vector<1x1x1x128xf32> to vector<1x128xf32>
    %110 = vector.shape_cast %107 : vector<1x128xf32> to vector<1x1x1x128xf32>
    tpu.vector_store %arg5[%c0_104, %c0_105, %c0_106, %c0_107], %110 {strides = array<i32>} : memref<1x1x2x128xf32, #tpu.memory_space<vmem>>, vector<1x1x1x128xf32>,
    %111 = arith.mulf %102, %102 : vector<128x128xf32>
    %cst_108 = arith.constant dense<0.000000e+00> : vector<128xf32>
    %112 = vector.multi_reduction <add>, %111, %cst_108 [0] : vector<128x128xf32> to vector<128xf32>
    %113 = vector.shape_cast %112 : vector<128xf32> to vector<1x128xf32>
    %c0_109 = arith.constant 0 : index
    %c0_110 = arith.constant 0 : index
    %c1_111 = arith.constant 1 : index
    %c0_112 = arith.constant 0 : index
    %114 = vector.load %arg5[%c0_109, %c0_110, %c1_111, %c0_112] : memref<1x1x2x128xf32, #tpu.memory_space<vmem>>, vector<1x1x1x128xf32>
    %115 = vector.shape_cast %114 : vector<1x1x1x128xf32> to vector<1x128xf32>
    %116 = vector.shape_cast %113 : vector<1x128xf32> to vector<1x1x1x128xf32>
    tpu.vector_store %arg5[%c0_109, %c0_110, %c1_111, %c0_112], %116 {strides = array<i32>} : memref<1x1x2x128xf32, #tpu.memory_space<vmem>>, vector<1x1x1x128xf32>,
    return
  }
  func.func @transform_0(%arg0: i32, %arg1: i32) -> (i32, i32, i32, i32) {
    %c0_i32 = arith.constant 0 : i32
    %c0_i32_0 = arith.constant 0 : i32
    %c0_i32_1 = arith.constant 0 : i32
    %c0_i32_2 = arith.constant 0 : i32
    return %arg0, %c0_i32, %c0_i32_0, %c0_i32_1 : i32, i32, i32, i32
  }
  func.func @transform_1(%arg0: i32, %arg1: i32) -> (i32, i32, i32) {
    %c0_i32 = arith.constant 0 : i32
    %c0_i32_0 = arith.constant 0 : i32
    %c0_i32_1 = arith.constant 0 : i32
    %c0_i32_2 = arith.constant 0 : i32
    return %c0_i32, %c0_i32_0, %c0_i32_1 : i32, i32, i32
  }
  func.func @transform_2(%arg0: i32, %arg1: i32) -> (i32, i32, i32) {
    %c0_i32 = arith.constant 0 : i32
    %c0_i32_0 = arith.constant 0 : i32
    return %arg0, %arg1, %c0_i32 : i32, i32, i32
  }
  func.func @transform_3(%arg0: i32, %arg1: i32) -> (i32, i32, i32, i32) {
    %c0_i32 = arith.constant 0 : i32
    %c0_i32_0 = arith.constant 0 : i32
    %c0_i32_1 = arith.constant 0 : i32
    return %arg0, %arg1, %c0_i32, %c0_i32_0 : i32, i32, i32, i32
  }
}

module attributes {stable_mosaic.version = 11 : i64} {
  func.func @_bn_act_kernel(%arg0: i32, %arg1: memref<256x128xf32, #tpu.memory_space<vmem>>, %arg2: memref<1x128xf32, #tpu.memory_space<vmem>>, %arg3: memref<1x128xf32, #tpu.memory_space<vmem>>, %arg4: memref<256x128xf32, #tpu.memory_space<vmem>>, %arg5: memref<256x128xf32, #tpu.memory_space<vmem>>) attributes {dimension_semantics = [#tpu.dimension_semantics<parallel>], iteration_bounds = array<i64: 2>, scalar_prefetch = 0 : i64, scratch_operands = 0 : i64, tpu.core_type = #tpu.core_type<tc>, window_params = [{transform_indices = @transform_0, window_bounds = array<i64: 256, 128>}, {pipeline_mode = #tpu.pipeline_mode<synchronous>, transform_indices = @transform_1, window_bounds = array<i64: 1, 128>}, {pipeline_mode = #tpu.pipeline_mode<synchronous>, transform_indices = @transform_2, window_bounds = array<i64: 1, 128>}, {transform_indices = @transform_3, window_bounds = array<i64: 256, 128>}, {transform_indices = @transform_4, window_bounds = array<i64: 256, 128>}]} {
    %c0 = arith.constant 0 : index
    %c0_0 = arith.constant 0 : index
    %0 = vector.load %arg1[%c0, %c0_0] : memref<256x128xf32, #tpu.memory_space<vmem>>, vector<256x128xf32>
    %c0_1 = arith.constant 0 : index
    %c0_2 = arith.constant 0 : index
    %1 = vector.load %arg2[%c0_1, %c0_2] : memref<1x128xf32, #tpu.memory_space<vmem>>, vector<1x128xf32>
    %2 = vector.broadcast %1 : vector<1x128xf32> to vector<256x128xf32>
    %3 = arith.mulf %0, %2 : vector<256x128xf32>
    %c0_3 = arith.constant 0 : index
    %c0_4 = arith.constant 0 : index
    %4 = vector.load %arg3[%c0_3, %c0_4] : memref<1x128xf32, #tpu.memory_space<vmem>>, vector<1x128xf32>
    %5 = vector.broadcast %4 : vector<1x128xf32> to vector<256x128xf32>
    %6 = arith.addf %3, %5 : vector<256x128xf32>
    %c0_5 = arith.constant 0 : index
    %c0_6 = arith.constant 0 : index
    %7 = vector.load %arg4[%c0_5, %c0_6] : memref<256x128xf32, #tpu.memory_space<vmem>>, vector<256x128xf32>
    %8 = arith.addf %6, %7 : vector<256x128xf32>
    %c0_7 = arith.constant 0 : index
    %c0_8 = arith.constant 0 : index
    %9 = vector.load %arg5[%c0_7, %c0_8] : memref<256x128xf32, #tpu.memory_space<vmem>>, vector<256x128xf32>
    tpu.vector_store %arg5[%c0_7, %c0_8], %8 {strides = array<i32>} : memref<256x128xf32, #tpu.memory_space<vmem>>, vector<256x128xf32>,
    return
  }
  func.func @transform_0(%arg0: i32) -> (i32, i32) {
    %c0_i32 = arith.constant 0 : i32
    %c0_i32_0 = arith.constant 0 : i32
    return %arg0, %c0_i32 : i32, i32
  }
  func.func @transform_1(%arg0: i32) -> (i32, i32) {
    %c0_i32 = arith.constant 0 : i32
    %c0_i32_0 = arith.constant 0 : i32
    %c0_i32_1 = arith.constant 0 : i32
    return %c0_i32, %c0_i32_0 : i32, i32
  }
  func.func @transform_2(%arg0: i32) -> (i32, i32) {
    %c0_i32 = arith.constant 0 : i32
    %c0_i32_0 = arith.constant 0 : i32
    %c0_i32_1 = arith.constant 0 : i32
    return %c0_i32, %c0_i32_0 : i32, i32
  }
  func.func @transform_3(%arg0: i32) -> (i32, i32) {
    %c0_i32 = arith.constant 0 : i32
    %c0_i32_0 = arith.constant 0 : i32
    return %arg0, %c0_i32 : i32, i32
  }
  func.func @transform_4(%arg0: i32) -> (i32, i32) {
    %c0_i32 = arith.constant 0 : i32
    %c0_i32_0 = arith.constant 0 : i32
    return %arg0, %c0_i32 : i32, i32
  }
}

module attributes {stable_mosaic.version = 11 : i64} {
  func.func @_bn_act_kernel(%arg0: i32, %arg1: memref<256x128xf32, #tpu.memory_space<vmem>>, %arg2: memref<1x128xf32, #tpu.memory_space<vmem>>, %arg3: memref<1x128xf32, #tpu.memory_space<vmem>>, %arg4: memref<1x1xf32, #tpu.memory_space<vmem>>, %arg5: memref<256x128xbf16, #tpu.memory_space<vmem>>) attributes {dimension_semantics = [#tpu.dimension_semantics<parallel>], iteration_bounds = array<i64: 2>, scalar_prefetch = 0 : i64, scratch_operands = 0 : i64, tpu.core_type = #tpu.core_type<tc>, window_params = [{transform_indices = @transform_0, window_bounds = array<i64: 256, 128>}, {pipeline_mode = #tpu.pipeline_mode<synchronous>, transform_indices = @transform_1, window_bounds = array<i64: 1, 128>}, {pipeline_mode = #tpu.pipeline_mode<synchronous>, transform_indices = @transform_2, window_bounds = array<i64: 1, 128>}, {pipeline_mode = #tpu.pipeline_mode<synchronous>, transform_indices = @transform_3, window_bounds = array<i64: 1, 1>}, {transform_indices = @transform_4, window_bounds = array<i64: 256, 128>}]} {
    %c0 = arith.constant 0 : index
    %c0_0 = arith.constant 0 : index
    %0 = vector.load %arg1[%c0, %c0_0] : memref<256x128xf32, #tpu.memory_space<vmem>>, vector<256x128xf32>
    %c0_1 = arith.constant 0 : index
    %c0_2 = arith.constant 0 : index
    %1 = vector.load %arg2[%c0_1, %c0_2] : memref<1x128xf32, #tpu.memory_space<vmem>>, vector<1x128xf32>
    %2 = vector.broadcast %1 : vector<1x128xf32> to vector<256x128xf32>
    %3 = arith.mulf %0, %2 : vector<256x128xf32>
    %c0_3 = arith.constant 0 : index
    %c0_4 = arith.constant 0 : index
    %4 = vector.load %arg3[%c0_3, %c0_4] : memref<1x128xf32, #tpu.memory_space<vmem>>, vector<1x128xf32>
    %5 = vector.broadcast %4 : vector<1x128xf32> to vector<256x128xf32>
    %6 = arith.addf %3, %5 : vector<256x128xf32>
    %c0_5 = arith.constant 0 : index
    %c0_6 = arith.constant 0 : index
    %7 = vector.load %arg4[%c0_5, %c0_6] : memref<1x1xf32, #tpu.memory_space<vmem>>, vector<1x1xf32>
    %cst = arith.constant 0.000000e+00 : f32
    %8 = vector.broadcast %cst : f32 to vector<256x128xf32>
    %9 = arith.cmpf oge, %6, %8 : vector<256x128xf32>
    %10 = vector.broadcast %7 : vector<1x1xf32> to vector<256x128xf32>
    %11 = arith.mulf %10, %6 : vector<256x128xf32>
    %12 = arith.select %9, %6, %11 : vector<256x128xi1>, vector<256x128xf32>
    %13 = arith.truncf %12 : vector<256x128xf32> to vector<256x128xbf16>
    %c0_7 = arith.constant 0 : index
    %c0_8 = arith.constant 0 : index
    %14 = vector.load %arg5[%c0_7, %c0_8] : memref<256x128xbf16, #tpu.memory_space<vmem>>, vector<256x128xbf16>
    tpu.vector_store %arg5[%c0_7, %c0_8], %13 {strides = array<i32>} : memref<256x128xbf16, #tpu.memory_space<vmem>>, vector<256x128xbf16>,
    return
  }
  func.func @transform_0(%arg0: i32) -> (i32, i32) {
    %c0_i32 = arith.constant 0 : i32
    %c0_i32_0 = arith.constant 0 : i32
    return %arg0, %c0_i32 : i32, i32
  }
  func.func @transform_1(%arg0: i32) -> (i32, i32) {
    %c0_i32 = arith.constant 0 : i32
    %c0_i32_0 = arith.constant 0 : i32
    %c0_i32_1 = arith.constant 0 : i32
    return %c0_i32, %c0_i32_0 : i32, i32
  }
  func.func @transform_2(%arg0: i32) -> (i32, i32) {
    %c0_i32 = arith.constant 0 : i32
    %c0_i32_0 = arith.constant 0 : i32
    %c0_i32_1 = arith.constant 0 : i32
    return %c0_i32, %c0_i32_0 : i32, i32
  }
  func.func @transform_3(%arg0: i32) -> (i32, i32) {
    %c0_i32 = arith.constant 0 : i32
    %c0_i32_0 = arith.constant 0 : i32
    %c0_i32_1 = arith.constant 0 : i32
    return %c0_i32, %c0_i32_0 : i32, i32
  }
  func.func @transform_4(%arg0: i32) -> (i32, i32) {
    %c0_i32 = arith.constant 0 : i32
    %c0_i32_0 = arith.constant 0 : i32
    return %arg0, %c0_i32 : i32, i32
  }
}

</mosaic_0001>

<llo_original>
// kernel: res_block_forward.7
$region0: #{res_block_forward.7}
  #allocation0 [shape = 'u32[]', space=smem, size = 0x4, offset = 0x4, fixed_abs, tag = 'smem constant byte address 0x4 - core index']
  #allocation1 [shape = 'u32[144,128]{1,0:T(1,128)}', space=vmem, size = 0x12000, scoped, tag = 'internal scratch']
  %s0 = inlined_call_operand.vmem [shape: f32[512,128], index: 0, kind: input, shape index: {}]
  %s1 = inlined_call_operand.vmem [shape: f32[1,128], index: 1, kind: input, shape index: {}]
  %s2 = inlined_call_operand.vmem [shape: f32[1,128], index: 2, kind: input, shape index: {}]
  %s3 = inlined_call_operand.vmem [shape: f32[512,128], index: 3, kind: input, shape index: {}]
  %s4 = inlined_call_operand.hbm [shape: f32[512,128], index: 4, kind: output, shape index: {}]
  %s5 = sld [smem:[#allocation0]]
  $region49: #{res_block_forward.7} parent=0
    _
  %s7 = ssub.s32 1, %s5
  %s8 = scalar_select 0, %s7, %s5
  $region1: #{res_block_forward.7} parent=0
    #allocation2 [shape = 'u8[262144]{0}', space=vmem, size = 0x40000, scoped, tag = 'output window, operand 0']
    #allocation3 [shape = 's32[2]{0}', space=sflag, size = 0x8, scoped, tag = 'scoped memory for res_block_forward.7']
    %9 = vsyncpa [#allocation3], 0
    %s10 = scalar_lea.sflag [#allocation3], 1
    %11 = vsyncpa %s10, 0
    loop: start=0, step=1, limit=4
    $region2: #{res_block_forward.7} parent=1 // loop_pre_header
      _
    $region3: #{res_block_forward.7} parent=1 // loop_header
      %s13 = sphi 0, %s17
      %p14 = scmp.ge.s32.totalorder %s13, 4
      %s23 = sphi 0, %s25
      %s26 = sphi 0, %s23
      %s27 = sphi 0, %s26
      %s43 = sphi 0, %s27
      %s47 = sphi 0, %s47
      %s49 = sphi 0, %s47
      %s50 = sphi 0, %s49
      %s64 = sphi 0, %s50
      %s68 = sphi 0, %s68
      %s70 = sphi 0, %s68
      %s71 = sphi 0, %s70
      %s85 = sphi 0, %s71
      %s91 = sphi 0, %s93
      %s94 = sphi 0, %s91
      %s95 = sphi 0, %s94
      %s111 = sphi 0, %s95
      %s117 = sphi 0, %s119
      %s120 = sphi 0, %s117
      %s121 = sphi 0, %s120
      %s137 = sphi 0, %s121
    $region4: #{res_block_forward.7} parent=1 // loop_header_branch
      %16 = sbr.rel (%p14) target = $region8
    $region5: #{res_block_forward.7} parent=1 // loop_body
      %s18 = ssub.s32 %s13, 1
      %s19 = ssub.s32 %s13, 2
      %s20 = sadd.s32 %s13, 1
      %s21 = ssub.s32 %s13, %s20
      %p22 = scmp.eq.s32.totalorder %s21, 0
      %s24 = sadd.s32 %s23, 1
      %s25 = scalar_select %p22, %s23, %s24
      %p28 = pneg %p22
      %p29 = scmp.eq.s32.totalorder %s13, 1
      %p30 = por %p28, %p29
      %p31 = scmp.ne.s32.totalorder %s23, %s26
      %p32 = scmp.eq.s32.totalorder %s13, 0
      %p33 = por %p31, %p32
      %p34 = scmp.ne.s32.totalorder %s23, %s26
      %p35 = scmp.eq.s32.totalorder %s18, 1
      %p36 = por %p34, %p35
      %p37 = scmp.ne.s32.totalorder %s26, %s27
      %p38 = scmp.eq.s32.totalorder %s18, 0
      %p39 = por %p37, %p38
      %p40 = scmp.ne.s32.totalorder %s26, %s27
      %p41 = scmp.eq.s32.totalorder %s19, 1
      %p42 = por %p40, %p41
      %p44 = scmp.ne.s32.totalorder %s27, %s43
      %p45 = scmp.eq.s32.totalorder %s19, 0
      %p46 = por %p44, %p45
      %s48 = sadd.s32 %s47, 1
      %p51 = scmp.eq.s32.totalorder %s13, 1
      %p52 = scmp.ne.s32.totalorder %s47, %s49
      %p53 = scmp.eq.s32.totalorder %s13, 0
      %p54 = por %p52, %p53
      %p55 = scmp.ne.s32.totalorder %s47, %s49
      %p56 = scmp.eq.s32.totalorder %s18, 1
      %p57 = por %p55, %p56
      %p58 = scmp.ne.s32.totalorder %s49, %s50
      %p59 = scmp.eq.s32.totalorder %s18, 0
      %p60 = por %p58, %p59
      %p61 = scmp.ne.s32.totalorder %s49, %s50
      %p62 = scmp.eq.s32.totalorder %s19, 1
      %p63 = por %p61, %p62
      %p65 = scmp.ne.s32.totalorder %s50, %s64
      %p66 = scmp.eq.s32.totalorder %s19, 0
      %p67 = por %p65, %p66
      %s69 = sadd.s32 %s68, 1
      %p72 = scmp.eq.s32.totalorder %s13, 1
      %p73 = scmp.ne.s32.totalorder %s68, %s70
      %p74 = scmp.eq.s32.totalorder %s13, 0
      %p75 = por %p73, %p74
      %p76 = scmp.ne.s32.totalorder %s68, %s70
      %p77 = scmp.eq.s32.totalorder %s18, 1
      %p78 = por %p76, %p77
      %p79 = scmp.ne.s32.totalorder %s70, %s71
      %p80 = scmp.eq.s32.totalorder %s18, 0
      %p81 = por %p79, %p80
      %p82 = scmp.ne.s32.totalorder %s70, %s71
      %p83 = scmp.eq.s32.totalorder %s19, 1
      %p84 = por %p82, %p83
      %p86 = scmp.ne.s32.totalorder %s71, %s85
      %p87 = scmp.eq.s32.totalorder %s19, 0
      %p88 = por %p86, %p87
      %s89 = ssub.s32 %s13, %s20
      %p90 = scmp.eq.s32.totalorder %s89, 0
      %s92 = sadd.s32 %s91, 1
      %s93 = scalar_select %p90, %s91, %s92
      %p96 = pneg %p90
      %p97 = scmp.eq.s32.totalorder %s13, 1
      %p98 = por %p96, %p97
      %p99 = scmp.ne.s32.totalorder %s91, %s94
      %p100 = scmp.eq.s32.totalorder %s13, 0
      %p101 = por %p99, %p100
      %p102 = scmp.ne.s32.totalorder %s91, %s94
      %p103 = scmp.eq.s32.totalorder %s18, 1
      %p104 = por %p102, %p103
      %p105 = scmp.ne.s32.totalorder %s94, %s95
      %p106 = scmp.eq.s32.totalorder %s18, 0
      %p107 = por %p105, %p106
      %p108 = scmp.ne.s32.totalorder %s94, %s95
      %p109 = scmp.eq.s32.totalorder %s19, 1
      %p110 = por %p108, %p109
      %p112 = scmp.ne.s32.totalorder %s95, %s111
      %p113 = scmp.eq.s32.totalorder %s19, 0
      %p114 = por %p112, %p113
      %s115 = ssub.s32 %s13, %s20
      %p116 = scmp.eq.s32.totalorder %s115, 0
      %s118 = sadd.s32 %s117, 1
      %s119 = scalar_select %p116, %s117, %s118
      %p122 = pneg %p116
      %p123 = scmp.eq.s32.totalorder %s13, 1
      %p124 = por %p122, %p123
      %p125 = scmp.ne.s32.totalorder %s117, %s120
      %p126 = scmp.eq.s32.totalorder %s13, 0
      %p127 = por %p125, %p126
      %p128 = scmp.ne.s32.totalorder %s117, %s120
      %p129 = scmp.eq.s32.totalorder %s18, 1
      %p130 = por %p128, %p129
      %p131 = scmp.ne.s32.totalorder %s120, %s121
      %p132 = scmp.eq.s32.totalorder %s18, 0
      %p133 = por %p131, %p132
      %p134 = scmp.ne.s32.totalorder %s120, %s121
      %p135 = scmp.eq.s32.totalorder %s19, 1
      %p136 = por %p134, %p135
      %p138 = scmp.ne.s32.totalorder %s121, %s137
      %p139 = scmp.eq.s32.totalorder %s19, 0
      %p140 = por %p138, %p139
      %p141 = scmp.le.s32.totalorder 1, %s13
      %p142 = scmp.lt.s32.totalorder %s13, 3
      %p143 = pnand %p141, %p142
      %p144 = pneg %p143
      // Predicated region
      $region9: #{res_block_forward.7} parent=5 // pred_check
        _
      $region10: #{res_block_forward.7} parent=5 // pred_check_branch
        %146 = sbr.rel (%p143) target = $region12
      $region11: #{res_block_forward.7} parent=5 // pred_region
        %s147 = ssub.s32 %s13, 1
        // Predicated region
        $region13: #{res_block_forward.7} parent=11 // pred_check
          %p148 = pneg %p60
        $region14: #{res_block_forward.7} parent=11 // pred_check_branch
          %150 = sbr.rel (%p148) target = $region16
        $region15: #{res_block_forward.7} parent=11 // pred_region
          _
        $region16: #{res_block_forward.7} parent=11 // pred_fallthru
          _
        // Predicated region
        $region17: #{res_block_forward.7} parent=11 // pred_check
          %p151 = pneg %p81
        $region18: #{res_block_forward.7} parent=11 // pred_check_branch
          %153 = sbr.rel (%p151) target = $region20
        $region19: #{res_block_forward.7} parent=11 // pred_region
          _
        $region20: #{res_block_forward.7} parent=11 // pred_fallthru
          _
      $region12: #{res_block_forward.7} parent=5 // pred_fallthru
        _
      %p154 = scmp.lt.s32.totalorder %s13, 2
      // Predicated region
      $region21: #{res_block_forward.7} parent=5 // pred_check
        %p155 = pneg %p154
      $region22: #{res_block_forward.7} parent=5 // pred_check_branch
        %157 = sbr.rel (%p155) target = $region24
      $region23: #{res_block_forward.7} parent=5 // pred_region
        // Predicated region
        $region25: #{res_block_forward.7} parent=23 // pred_check
          %p158 = pneg %p33
        $region26: #{res_block_forward.7} parent=23 // pred_check_branch
          %160 = sbr.rel (%p158) target = $region28
        $region27: #{res_block_forward.7} parent=23 // pred_region
          %s161 = smul.u32 32, %s13
          %p162 = scmp.lt.s32.totalorder %s161, 63
          %s163 = scalar_select %p162, %s161, 63
          %s164 = smul.addr %s163, 8
          %s165 = scalar_lea.vmem %s0, %s164
          %s166 = smul.u32 32, %s13
        $region28: #{res_block_forward.7} parent=23 // pred_fallthru
          _
        // Predicated region
        $region29: #{res_block_forward.7} parent=23 // pred_check
          %p167 = pneg %p101
        $region30: #{res_block_forward.7} parent=23 // pred_check_branch
          %169 = sbr.rel (%p167) target = $region32
        $region31: #{res_block_forward.7} parent=23 // pred_region
          %s170 = smul.u32 32, %s13
          %p171 = scmp.lt.s32.totalorder %s170, 63
          %s172 = scalar_select %p171, %s170, 63
          %s173 = smul.addr %s172, 8
          %s174 = scalar_lea.vmem %s3, %s173
          %s175 = smul.u32 32, %s13
        $region32: #{res_block_forward.7} parent=23 // pred_fallthru
          _
      $region24: #{res_block_forward.7} parent=5 // pred_fallthru
        _
      %p176 = scmp.le.s32.totalorder 1, %s13
      %p177 = scmp.lt.s32.totalorder %s13, 3
      %p178 = pnand %p176, %p177
      %p179 = pneg %p178
      // Predicated region
      $region33: #{res_block_forward.7} parent=5 // pred_check
        _
      $region34: #{res_block_forward.7} parent=5 // pred_check_branch
        %181 = sbr.rel (%p178) target = $region36
      $region35: #{res_block_forward.7} parent=5 // pred_region
        %s182 = ssub.s32 %s13, 1
        %s183 = smul.u32 32, %s18
        %p184 = scmp.lt.s32.totalorder %s183, 63
        %s185 = scalar_select %p184, %s183, 63
        %s186 = smul.addr %s185, 8
        %s187 = scalar_lea.vmem %s0, %s186
        %p188 = pneg %p39
        %p189 = pneg %p36
        %p190 = pneg %p60
        %p191 = pneg %p57
        %p192 = pneg %p81
        %p193 = pneg %p78
        %s194 = smul.u32 32, %s18
        %p195 = scmp.lt.s32.totalorder %s194, 63
        %s196 = scalar_select %p195, %s194, 63
        %s197 = smul.addr %s196, 8
        %s198 = scalar_lea.vmem %s3, %s197
        %p199 = pneg %p107
        %p200 = pneg %p104
        %p201 = pneg %p133
        %p202 = pneg %p130
        %s203 = sand.u32 %s120, 1
        %s204 = scalar_lea.sflag [#allocation3], %s203
        %s205 = sand.u32 %s120, 1
        %s206 = smul.addr %s205, 256
        %s207 = scalar_lea.vmem [#allocation2], %s206
        %s208 = smul.u32 32, %s18
        %p209 = scmp.lt.s32.totalorder %s208, 63
        %s210 = scalar_select %p209, %s208, 63
        %s211 = smul.addr %s210, 8
        %s212 = scalar_lea.vmem %s0, %s211
        %s213 = smul.u32 32, %s18
        %s214 = smul.u32 32, %s18
        %p215 = scmp.lt.s32.totalorder %s214, 63
        %s216 = scalar_select %p215, %s214, 63
        %s217 = smul.addr %s216, 8
        %s218 = scalar_lea.vmem %s3, %s217
        %s219 = smul.u32 32, %s18
        %s220 = smul.u32 32, %s18
        %v221 = vld [vmem:[%s212] sm:$0xff]
        %v222 = vld [vmem:[%s212 + $0x8] sm:$0xff]
        %v223 = vld [vmem:[%s212 + $0x10] sm:$0xff]
        %v224 = vld [vmem:[%s212 + $0x18] sm:$0xff]
        %v225 = vld [vmem:[%s212 + $0x20] sm:$0xff]
        %v226 = vld [vmem:[%s212 + $0x28] sm:$0xff]
        %v227 = vld [vmem:[%s212 + $0x30] sm:$0xff]
        %v228 = vld [vmem:[%s212 + $0x38] sm:$0xff]
        %v229 = vld [vmem:[%s212 + $0x40] sm:$0xff]
        %v230 = vld [vmem:[%s212 + $0x48] sm:$0xff]
        %v231 = vld [vmem:[%s212 + $0x50] sm:$0xff]
        %v232 = vld [vmem:[%s212 + $0x58] sm:$0xff]
        %v233 = vld [vmem:[%s212 + $0x60] sm:$0xff]
        %v234 = vld [vmem:[%s212 + $0x68] sm:$0xff]
        %v235 = vld [vmem:[%s212 + $0x70] sm:$0xff]
        %v236 = vld [vmem:[%s212 + $0x78] sm:$0xff]
        %v237 = vld [vmem:[%s212 + $0x80] sm:$0xff]
        %v238 = vld [vmem:[%s212 + $0x88] sm:$0xff]
        %v239 = vld [vmem:[%s212 + $0x90] sm:$0xff]
        %v240 = vld [vmem:[%s212 + $0x98] sm:$0xff]
        %v241 = vld [vmem:[%s212 + $0xa0] sm:$0xff]
        %v242 = vld [vmem:[%s212 + $0xa8] sm:$0xff]
        %v243 = vld [vmem:[%s212 + $0xb0] sm:$0xff]
        %v244 = vld [vmem:[%s212 + $0xb8] sm:$0xff]
        %v245 = vld [vmem:[%s212 + $0xc0] sm:$0xff]
        %v246 = vld [vmem:[%s212 + $0xc8] sm:$0xff]
        %v247 = vld [vmem:[%s212 + $0xd0] sm:$0xff]
        %v248 = vld [vmem:[%s212 + $0xd8] sm:$0xff]
        %v249 = vld [vmem:[%s212 + $0xe0] sm:$0xff]
        %v250 = vld [vmem:[%s212 + $0xe8] sm:$0xff]
        %v251 = vld [vmem:[%s212 + $0xf0] sm:$0xff]
        %v252 = vld [vmem:[%s212 + $0xf8] sm:$0xff]
        %v253 = vld [vmem:[%s1] sm:$0x1]
        %v255 = vlaneseq
        %v256 = vshrl.u32 %v255, 7
        %v257 = vsub.s32 0, %v256
        %v258 = vrot.slane %v253, %v257
        %v260 = vmul.f32 %v221, %v258
        %v261 = vmul.f32 %v222, %v258
        %v262 = vmul.f32 %v223, %v258
        %v263 = vmul.f32 %v224, %v258
        %v264 = vmul.f32 %v225, %v258
        %v265 = vmul.f32 %v226, %v258
        %v266 = vmul.f32 %v227, %v258
        %v267 = vmul.f32 %v228, %v258
        %v268 = vmul.f32 %v229, %v258
        %v269 = vmul.f32 %v230, %v258
        %v270 = vmul.f32 %v231, %v258
        %v271 = vmul.f32 %v232, %v258
        %v272 = vmul.f32 %v233, %v258
        %v273 = vmul.f32 %v234, %v258
        %v274 = vmul.f32 %v235, %v258
        %v275 = vmul.f32 %v236, %v258
        %v276 = vmul.f32 %v237, %v258
        %v277 = vmul.f32 %v238, %v258
        %v278 = vmul.f32 %v239, %v258
        %v279 = vmul.f32 %v240, %v258
        %v280 = vmul.f32 %v241, %v258
        %v281 = vmul.f32 %v242, %v258
        %v282 = vmul.f32 %v243, %v258
        %v283 = vmul.f32 %v244, %v258
        %v284 = vmul.f32 %v245, %v258
        %v285 = vmul.f32 %v246, %v258
        %v286 = vmul.f32 %v247, %v258
        %v287 = vmul.f32 %v248, %v258
        %v288 = vmul.f32 %v249, %v258
        %v289 = vmul.f32 %v250, %v258
        %v290 = vmul.f32 %v251, %v258
        %v291 = vmul.f32 %v252, %v258
        %v292 = vld [vmem:[%s2] sm:$0x1]
        %v294 = vlaneseq
        %v295 = vshrl.u32 %v294, 7
        %v296 = vsub.s32 0, %v295
        %v297 = vrot.slane %v292, %v296
        %v299 = vadd.f32 %v260, %v297
        %v300 = vadd.f32 %v261, %v297
        %v301 = vadd.f32 %v262, %v297
        %v302 = vadd.f32 %v263, %v297
        %v303 = vadd.f32 %v264, %v297
        %v304 = vadd.f32 %v265, %v297
        %v305 = vadd.f32 %v266, %v297
        %v306 = vadd.f32 %v267, %v297
        %v307 = vadd.f32 %v268, %v297
        %v308 = vadd.f32 %v269, %v297
        %v309 = vadd.f32 %v270, %v297
        %v310 = vadd.f32 %v271, %v297
        %v311 = vadd.f32 %v272, %v297
        %v312 = vadd.f32 %v273, %v297
        %v313 = vadd.f32 %v274, %v297
        %v314 = vadd.f32 %v275, %v297
        %v315 = vadd.f32 %v276, %v297
        %v316 = vadd.f32 %v277, %v297
        %v317 = vadd.f32 %v278, %v297
        %v318 = vadd.f32 %v279, %v297
        %v319 = vadd.f32 %v280, %v297
        %v320 = vadd.f32 %v281, %v297
        %v321 = vadd.f32 %v282, %v297
        %v322 = vadd.f32 %v283, %v297
        %v323 = vadd.f32 %v284, %v297
        %v324 = vadd.f32 %v285, %v297
        %v325 = vadd.f32 %v286, %v297
        %v326 = vadd.f32 %v287, %v297
        %v327 = vadd.f32 %v288, %v297
        %v328 = vadd.f32 %v289, %v297
        %v329 = vadd.f32 %v290, %v297
        %v330 = vadd.f32 %v291, %v297
        %v331 = vld [vmem:[%s218] sm:$0xff]
        %v332 = vld [vmem:[%s218 + $0x8] sm:$0xff]
        %v333 = vld [vmem:[%s218 + $0x10] sm:$0xff]
        %v334 = vld [vmem:[%s218 + $0x18] sm:$0xff]
        %v335 = vld [vmem:[%s218 + $0x20] sm:$0xff]
        %v336 = vld [vmem:[%s218 + $0x28] sm:$0xff]
        %v337 = vld [vmem:[%s218 + $0x30] sm:$0xff]
        %v338 = vld [vmem:[%s218 + $0x38] sm:$0xff]
        %v339 = vld [vmem:[%s218 + $0x40] sm:$0xff]
        %v340 = vld [vmem:[%s218 + $0x48] sm:$0xff]
        %v341 = vld [vmem:[%s218 + $0x50] sm:$0xff]
        %v342 = vld [vmem:[%s218 + $0x58] sm:$0xff]
        %v343 = vld [vmem:[%s218 + $0x60] sm:$0xff]
        %v344 = vld [vmem:[%s218 + $0x68] sm:$0xff]
        %v345 = vld [vmem:[%s218 + $0x70] sm:$0xff]
        %v346 = vld [vmem:[%s218 + $0x78] sm:$0xff]
        %v347 = vld [vmem:[%s218 + $0x80] sm:$0xff]
        %v348 = vld [vmem:[%s218 + $0x88] sm:$0xff]
        %v349 = vld [vmem:[%s218 + $0x90] sm:$0xff]
        %v350 = vld [vmem:[%s218 + $0x98] sm:$0xff]
        %v351 = vld [vmem:[%s218 + $0xa0] sm:$0xff]
        %v352 = vld [vmem:[%s218 + $0xa8] sm:$0xff]
        %v353 = vld [vmem:[%s218 + $0xb0] sm:$0xff]
        %v354 = vld [vmem:[%s218 + $0xb8] sm:$0xff]
        %v355 = vld [vmem:[%s218 + $0xc0] sm:$0xff]
        %v356 = vld [vmem:[%s218 + $0xc8] sm:$0xff]
        %v357 = vld [vmem:[%s218 + $0xd0] sm:$0xff]
        %v358 = vld [vmem:[%s218 + $0xd8] sm:$0xff]
        %v359 = vld [vmem:[%s218 + $0xe0] sm:$0xff]
        %v360 = vld [vmem:[%s218 + $0xe8] sm:$0xff]
        %v361 = vld [vmem:[%s218 + $0xf0] sm:$0xff]
        %v362 = vld [vmem:[%s218 + $0xf8] sm:$0xff]
        %v363 = vadd.f32 %v299, %v331
        %v364 = vadd.f32 %v300, %v332
        %v365 = vadd.f32 %v301, %v333
        %v366 = vadd.f32 %v302, %v334
        %v367 = vadd.f32 %v303, %v335
        %v368 = vadd.f32 %v304, %v336
        %v369 = vadd.f32 %v305, %v337
        %v370 = vadd.f32 %v306, %v338
        %v371 = vadd.f32 %v307, %v339
        %v372 = vadd.f32 %v308, %v340
        %v373 = vadd.f32 %v309, %v341
        %v374 = vadd.f32 %v310, %v342
        %v375 = vadd.f32 %v311, %v343
        %v376 = vadd.f32 %v312, %v344
        %v377 = vadd.f32 %v313, %v345
        %v378 = vadd.f32 %v314, %v346
        %v379 = vadd.f32 %v315, %v347
        %v380 = vadd.f32 %v316, %v348
        %v381 = vadd.f32 %v317, %v349
        %v382 = vadd.f32 %v318, %v350
        %v383 = vadd.f32 %v319, %v351
        %v384 = vadd.f32 %v320, %v352
        %v385 = vadd.f32 %v321, %v353
        %v386 = vadd.f32 %v322, %v354
        %v387 = vadd.f32 %v323, %v355
        %v388 = vadd.f32 %v324, %v356
        %v389 = vadd.f32 %v325, %v357
        %v390 = vadd.f32 %v326, %v358
        %v391 = vadd.f32 %v327, %v359
        %v392 = vadd.f32 %v328, %v360
        %v393 = vadd.f32 %v329, %v361
        %v394 = vadd.f32 %v330, %v362
        %395 = vst [vmem:[%s207] sm:$0xff] %v363
        %396 = vst [vmem:[%s207 + $0x8] sm:$0xff] %v364
        %397 = vst [vmem:[%s207 + $0x10] sm:$0xff] %v365
        %398 = vst [vmem:[%s207 + $0x18] sm:$0xff] %v366
        %399 = vst [vmem:[%s207 + $0x20] sm:$0xff] %v367
        %400 = vst [vmem:[%s207 + $0x28] sm:$0xff] %v368
        %401 = vst [vmem:[%s207 + $0x30] sm:$0xff] %v369
        %402 = vst [vmem:[%s207 + $0x38] sm:$0xff] %v370
        %403 = vst [vmem:[%s207 + $0x40] sm:$0xff] %v371
        %404 = vst [vmem:[%s207 + $0x48] sm:$0xff] %v372
        %405 = vst [vmem:[%s207 + $0x50] sm:$0xff] %v373
        %406 = vst [vmem:[%s207 + $0x58] sm:$0xff] %v374
        %407 = vst [vmem:[%s207 + $0x60] sm:$0xff] %v375
        %408 = vst [vmem:[%s207 + $0x68] sm:$0xff] %v376
        %409 = vst [vmem:[%s207 + $0x70] sm:$0xff] %v377
        %410 = vst [vmem:[%s207 + $0x78] sm:$0xff] %v378
        %411 = vst [vmem:[%s207 + $0x80] sm:$0xff] %v379
        %412 = vst [vmem:[%s207 + $0x88] sm:$0xff] %v380
        %413 = vst [vmem:[%s207 + $0x90] sm:$0xff] %v381
        %414 = vst [vmem:[%s207 + $0x98] sm:$0xff] %v382
        %415 = vst [vmem:[%s207 + $0xa0] sm:$0xff] %v383
        %416 = vst [vmem:[%s207 + $0xa8] sm:$0xff] %v384
        %417 = vst [vmem:[%s207 + $0xb0] sm:$0xff] %v385
        %418 = vst [vmem:[%s207 + $0xb8] sm:$0xff] %v386
        %419 = vst [vmem:[%s207 + $0xc0] sm:$0xff] %v387
        %420 = vst [vmem:[%s207 + $0xc8] sm:$0xff] %v388
        %421 = vst [vmem:[%s207 + $0xd0] sm:$0xff] %v389
        %422 = vst [vmem:[%s207 + $0xd8] sm:$0xff] %v390
        %423 = vst [vmem:[%s207 + $0xe0] sm:$0xff] %v391
        %424 = vst [vmem:[%s207 + $0xe8] sm:$0xff] %v392
        %425 = vst [vmem:[%s207 + $0xf0] sm:$0xff] %v393
        %426 = vst [vmem:[%s207 + $0xf8] sm:$0xff] %v394
        %s427 = sand.u32 %s120, 1
        %s428 = scalar_lea.sflag [#allocation3], %s427
        %s429 = sand.u32 %s120, 1
        %s430 = smul.addr %s429, 256
        %s431 = scalar_lea.vmem [#allocation2], %s430
        // Predicated region
        $region37: #{res_block_forward.7} parent=35 // pred_check
          %p432 = pneg %p130
        $region38: #{res_block_forward.7} parent=35 // pred_check_branch
          %434 = sbr.rel (%p432) target = $region40
        $region39: #{res_block_forward.7} parent=35 // pred_region
          %s435 = smul.u32 32, %s18
          %s437 = ssub.s32 4096, 4096
          %438 = vsyncadd %s428, %s437
          %s439 = smul.addr %s435, 128
          %s440 = scalar_lea.hbm %s4, %s439
          %s441 = sshll.u32 %s431, 4
          %s442 = int_to_ptr.vmem [resolvable:$true] %s441
          %447 = dma.vmem_to_hbm [thread:$0]  %s442, 4096, %s440, %s428, 128, 128, 8
        $region40: #{res_block_forward.7} parent=35 // pred_fallthru
          _
      $region36: #{res_block_forward.7} parent=5 // pred_fallthru
        _
      %p448 = scmp.le.s32.totalorder 2, %s13
      // Predicated region
      $region41: #{res_block_forward.7} parent=5 // pred_check
        %p449 = pneg %p448
      $region42: #{res_block_forward.7} parent=5 // pred_check_branch
        %451 = sbr.rel (%p449) target = $region44
      $region43: #{res_block_forward.7} parent=5 // pred_region
        %s452 = ssub.s32 %s13, 2
        // Predicated region
        $region45: #{res_block_forward.7} parent=43 // pred_check
          %p453 = pneg %p136
        $region46: #{res_block_forward.7} parent=43 // pred_check_branch
          %455 = sbr.rel (%p453) target = $region48
        $region47: #{res_block_forward.7} parent=43 // pred_region
          %s456 = sand.u32 %s121, 1
          %s457 = scalar_lea.sflag [#allocation3], %s456
          %s458 = sand.u32 %s121, 1
          %s459 = smul.addr %s458, 256
          %s460 = scalar_lea.vmem [#allocation2], %s459
          %461 = dma.done %s457, 4096
        $region48: #{res_block_forward.7} parent=43 // pred_fallthru
          _
      $region44: #{res_block_forward.7} parent=5 // pred_fallthru
        _
    $region6: #{res_block_forward.7} parent=1 // loop_footer
      %s17 = sadd.s32 1, %s13
    $region7: #{res_block_forward.7} parent=1 // loop_footer_branch
      %12 = sbr.rel target = $region3
    $region8: #{res_block_forward.7} parent=1 // loop_exit
      _
    %462 = vsyncpa [#allocation3], 1
    %s463 = scalar_lea.sflag [#allocation3], 1
    %464 = vsyncpa %s463, 1

// kernel: res_block_forward.5
$region0: #{res_block_forward.5}
  #allocation0 [shape = 'u32[]', space=smem, size = 0x4, offset = 0x4, fixed_abs, tag = 'smem constant byte address 0x4 - core index']
  #allocation1 [shape = 'u32[144,128]{1,0:T(1,128)}', space=vmem, size = 0x12000, scoped, tag = 'internal scratch']
  #allocation2 [shape = 'f32[1,1]{1,0:T(1,128)S(1)}', space=vmem, size = 0x200, scoped, tag = 'scoped memory for res_block_forward.5']
  %s0 = inlined_call_operand.vmem [shape: f32[512,128], index: 0, kind: input, shape index: {}]
  %s1 = inlined_call_operand.vmem [shape: f32[1,128], index: 1, kind: input, shape index: {}]
  %s2 = inlined_call_operand.vmem [shape: f32[1,128], index: 2, kind: input, shape index: {}]
  %s3 = inlined_call_operand.<no memory space> [shape: f32[1,1], index: 3, kind: input, shape index: {}]
  %s4 = inlined_call_operand.vmem [shape: bf16[512,128], index: 4, kind: output, shape index: {}]
  %s5 = sld [smem:[#allocation0]]
  $region49: #{res_block_forward.5} parent=0
    _
  %s7 = ssub.s32 1, %s5
  %s8 = scalar_select 0, %s7, %s5
  %v9 = vstv %s3
  %10 = vst [vmem:[#allocation2] sm:$0x1] %v9
  loop: start=0, step=1, limit=4
  $region2: #{res_block_forward.5} parent=0 // loop_pre_header
    _
  $region3: #{res_block_forward.5} parent=0 // loop_header
    %s12 = sphi 0, %s16
    %p13 = scmp.ge.s32.totalorder %s12, 4
    %s22 = sphi 0, %s24
    %s25 = sphi 0, %s22
    %s26 = sphi 0, %s25
    %s42 = sphi 0, %s26
    %s46 = sphi 0, %s46
    %s48 = sphi 0, %s46
    %s49 = sphi 0, %s48
    %s63 = sphi 0, %s49
    %s67 = sphi 0, %s67
    %s69 = sphi 0, %s67
    %s70 = sphi 0, %s69
    %s84 = sphi 0, %s70
    %s88 = sphi 0, %s88
    %s90 = sphi 0, %s88
    %s91 = sphi 0, %s90
    %s105 = sphi 0, %s91
    %s111 = sphi 0, %s113
    %s114 = sphi 0, %s111
    %s115 = sphi 0, %s114
    %s131 = sphi 0, %s115
  $region4: #{res_block_forward.5} parent=0 // loop_header_branch
    %15 = sbr.rel (%p13) target = $region8
  $region5: #{res_block_forward.5} parent=0 // loop_body
    %s17 = ssub.s32 %s12, 1
    %s18 = ssub.s32 %s12, 2
    %s19 = sadd.s32 %s12, 1
    %s20 = ssub.s32 %s12, %s19
    %p21 = scmp.eq.s32.totalorder %s20, 0
    %s23 = sadd.s32 %s22, 1
    %s24 = scalar_select %p21, %s22, %s23
    %p27 = pneg %p21
    %p28 = scmp.eq.s32.totalorder %s12, 1
    %p29 = por %p27, %p28
    %p30 = scmp.ne.s32.totalorder %s22, %s25
    %p31 = scmp.eq.s32.totalorder %s12, 0
    %p32 = por %p30, %p31
    %p33 = scmp.ne.s32.totalorder %s22, %s25
    %p34 = scmp.eq.s32.totalorder %s17, 1
    %p35 = por %p33, %p34
    %p36 = scmp.ne.s32.totalorder %s25, %s26
    %p37 = scmp.eq.s32.totalorder %s17, 0
    %p38 = por %p36, %p37
    %p39 = scmp.ne.s32.totalorder %s25, %s26
    %p40 = scmp.eq.s32.totalorder %s18, 1
    %p41 = por %p39, %p40
    %p43 = scmp.ne.s32.totalorder %s26, %s42
    %p44 = scmp.eq.s32.totalorder %s18, 0
    %p45 = por %p43, %p44
    %s47 = sadd.s32 %s46, 1
    %p50 = scmp.eq.s32.totalorder %s12, 1
    %p51 = scmp.ne.s32.totalorder %s46, %s48
    %p52 = scmp.eq.s32.totalorder %s12, 0
    %p53 = por %p51, %p52
    %p54 = scmp.ne.s32.totalorder %s46, %s48
    %p55 = scmp.eq.s32.totalorder %s17, 1
    %p56 = por %p54, %p55
    %p57 = scmp.ne.s32.totalorder %s48, %s49
    %p58 = scmp.eq.s32.totalorder %s17, 0
    %p59 = por %p57, %p58
    %p60 = scmp.ne.s32.totalorder %s48, %s49
    %p61 = scmp.eq.s32.totalorder %s18, 1
    %p62 = por %p60, %p61
    %p64 = scmp.ne.s32.totalorder %s49, %s63
    %p65 = scmp.eq.s32.totalorder %s18, 0
    %p66 = por %p64, %p65
    %s68 = sadd.s32 %s67, 1
    %p71 = scmp.eq.s32.totalorder %s12, 1
    %p72 = scmp.ne.s32.totalorder %s67, %s69
    %p73 = scmp.eq.s32.totalorder %s12, 0
    %p74 = por %p72, %p73
    %p75 = scmp.ne.s32.totalorder %s67, %s69
    %p76 = scmp.eq.s32.totalorder %s17, 1
    %p77 = por %p75, %p76
    %p78 = scmp.ne.s32.totalorder %s69, %s70
    %p79 = scmp.eq.s32.totalorder %s17, 0
    %p80 = por %p78, %p79
    %p81 = scmp.ne.s32.totalorder %s69, %s70
    %p82 = scmp.eq.s32.totalorder %s18, 1
    %p83 = por %p81, %p82
    %p85 = scmp.ne.s32.totalorder %s70, %s84
    %p86 = scmp.eq.s32.totalorder %s18, 0
    %p87 = por %p85, %p86
    %s89 = sadd.s32 %s88, 1
    %p92 = scmp.eq.s32.totalorder %s12, 1
    %p93 = scmp.ne.s32.totalorder %s88, %s90
    %p94 = scmp.eq.s32.totalorder %s12, 0
    %p95 = por %p93, %p94
    %p96 = scmp.ne.s32.totalorder %s88, %s90
    %p97 = scmp.eq.s32.totalorder %s17, 1
    %p98 = por %p96, %p97
    %p99 = scmp.ne.s32.totalorder %s90, %s91
    %p100 = scmp.eq.s32.totalorder %s17, 0
    %p101 = por %p99, %p100
    %p102 = scmp.ne.s32.totalorder %s90, %s91
    %p103 = scmp.eq.s32.totalorder %s18, 1
    %p104 = por %p102, %p103
    %p106 = scmp.ne.s32.totalorder %s91, %s105
    %p107 = scmp.eq.s32.totalorder %s18, 0
    %p108 = por %p106, %p107
    %s109 = ssub.s32 %s12, %s19
    %p110 = scmp.eq.s32.totalorder %s109, 0
    %s112 = sadd.s32 %s111, 1
    %s113 = scalar_select %p110, %s111, %s112
    %p116 = pneg %p110
    %p117 = scmp.eq.s32.totalorder %s12, 1
    %p118 = por %p116, %p117
    %p119 = scmp.ne.s32.totalorder %s111, %s114
    %p120 = scmp.eq.s32.totalorder %s12, 0
    %p121 = por %p119, %p120
    %p122 = scmp.ne.s32.totalorder %s111, %s114
    %p123 = scmp.eq.s32.totalorder %s17, 1
    %p124 = por %p122, %p123
    %p125 = scmp.ne.s32.totalorder %s114, %s115
    %p126 = scmp.eq.s32.totalorder %s17, 0
    %p127 = por %p125, %p126
    %p128 = scmp.ne.s32.totalorder %s114, %s115
    %p129 = scmp.eq.s32.totalorder %s18, 1
    %p130 = por %p128, %p129
    %p132 = scmp.ne.s32.totalorder %s115, %s131
    %p133 = scmp.eq.s32.totalorder %s18, 0
    %p134 = por %p132, %p133
    %p135 = scmp.le.s32.totalorder 1, %s12
    %p136 = scmp.lt.s32.totalorder %s12, 3
    %p137 = pnand %p135, %p136
    %p138 = pneg %p137
    // Predicated region
    $region9: #{res_block_forward.5} parent=5 // pred_check
      _
    $region10: #{res_block_forward.5} parent=5 // pred_check_branch
      %140 = sbr.rel (%p137) target = $region12
    $region11: #{res_block_forward.5} parent=5 // pred_region
      %s141 = ssub.s32 %s12, 1
      // Predicated region
      $region13: #{res_block_forward.5} parent=11 // pred_check
        %p142 = pneg %p59
      $region14: #{res_block_forward.5} parent=11 // pred_check_branch
        %144 = sbr.rel (%p142) target = $region16
      $region15: #{res_block_forward.5} parent=11 // pred_region
        _
      $region16: #{res_block_forward.5} parent=11 // pred_fallthru
        _
      // Predicated region
      $region17: #{res_block_forward.5} parent=11 // pred_check
        %p145 = pneg %p80
      $region18: #{res_block_forward.5} parent=11 // pred_check_branch
        %147 = sbr.rel (%p145) target = $region20
      $region19: #{res_block_forward.5} parent=11 // pred_region
        _
      $region20: #{res_block_forward.5} parent=11 // pred_fallthru
        _
      // Predicated region
      $region21: #{res_block_forward.5} parent=11 // pred_check
        %p148 = pneg %p101
      $region22: #{res_block_forward.5} parent=11 // pred_check_branch
        %150 = sbr.rel (%p148) target = $region24
      $region23: #{res_block_forward.5} parent=11 // pred_region
        _
      $region24: #{res_block_forward.5} parent=11 // pred_fallthru
        _
    $region12: #{res_block_forward.5} parent=5 // pred_fallthru
      _
    %p151 = scmp.lt.s32.totalorder %s12, 2
    // Predicated region
    $region25: #{res_block_forward.5} parent=5 // pred_check
      %p152 = pneg %p151
    $region26: #{res_block_forward.5} parent=5 // pred_check_branch
      %154 = sbr.rel (%p152) target = $region28
    $region27: #{res_block_forward.5} parent=5 // pred_region
      // Predicated region
      $region29: #{res_block_forward.5} parent=27 // pred_check
        %p155 = pneg %p32
      $region30: #{res_block_forward.5} parent=27 // pred_check_branch
        %157 = sbr.rel (%p155) target = $region32
      $region31: #{res_block_forward.5} parent=27 // pred_region
        %s158 = smul.u32 32, %s12
        %p159 = scmp.lt.s32.totalorder %s158, 63
        %s160 = scalar_select %p159, %s158, 63
        %s161 = smul.addr %s160, 8
        %s162 = scalar_lea.vmem %s0, %s161
        %s163 = smul.u32 32, %s12
      $region32: #{res_block_forward.5} parent=27 // pred_fallthru
        _
    $region28: #{res_block_forward.5} parent=5 // pred_fallthru
      _
    %p164 = scmp.le.s32.totalorder 1, %s12
    %p165 = scmp.lt.s32.totalorder %s12, 3
    %p166 = pnand %p164, %p165
    %p167 = pneg %p166
    // Predicated region
    $region33: #{res_block_forward.5} parent=5 // pred_check
      _
    $region34: #{res_block_forward.5} parent=5 // pred_check_branch
      %169 = sbr.rel (%p166) target = $region36
    $region35: #{res_block_forward.5} parent=5 // pred_region
      %s170 = ssub.s32 %s12, 1
      %s171 = smul.u32 32, %s17
      %p172 = scmp.lt.s32.totalorder %s171, 63
      %s173 = scalar_select %p172, %s171, 63
      %s174 = smul.addr %s173, 8
      %s175 = scalar_lea.vmem %s0, %s174
      %p176 = pneg %p38
      %p177 = pneg %p35
      %p178 = pneg %p59
      %p179 = pneg %p56
      %p180 = pneg %p80
      %p181 = pneg %p77
      %p182 = pneg %p101
      %p183 = pneg %p98
      %p184 = pneg %p127
      %p185 = pneg %p124
      %s186 = smul.u32 32, %s17
      %p187 = scmp.lt.s32.totalorder %s186, 63
      %s188 = scalar_select %p187, %s186, 63
      %s189 = smul.addr %s188, 4
      %s190 = scalar_lea.vmem %s4, %s189
      %s191 = smul.u32 32, %s17
      %p192 = scmp.lt.s32.totalorder %s191, 63
      %s193 = scalar_select %p192, %s191, 63
      %s194 = smul.addr %s193, 8
      %s195 = scalar_lea.vmem %s0, %s194
      %s196 = smul.u32 32, %s17
      %s197 = smul.u32 32, %s17
      %p198 = scmp.lt.s32.totalorder %s197, 63
      %s199 = scalar_select %p198, %s197, 63
      %s200 = smul.addr %s199, 4
      %s201 = scalar_lea.vmem %s4, %s200
      %s202 = smul.u32 32, %s17
      %v203 = vld [vmem:[%s195] sm:$0xff]
      %v204 = vld [vmem:[%s195 + $0x8] sm:$0xff]
      %v205 = vld [vmem:[%s195 + $0x10] sm:$0xff]
      %v206 = vld [vmem:[%s195 + $0x18] sm:$0xff]
      %v207 = vld [vmem:[%s195 + $0x20] sm:$0xff]
      %v208 = vld [vmem:[%s195 + $0x28] sm:$0xff]
      %v209 = vld [vmem:[%s195 + $0x30] sm:$0xff]
      %v210 = vld [vmem:[%s195 + $0x38] sm:$0xff]
      %v211 = vld [vmem:[%s195 + $0x40] sm:$0xff]
      %v212 = vld [vmem:[%s195 + $0x48] sm:$0xff]
      %v213 = vld [vmem:[%s195 + $0x50] sm:$0xff]
      %v214 = vld [vmem:[%s195 + $0x58] sm:$0xff]
      %v215 = vld [vmem:[%s195 + $0x60] sm:$0xff]
      %v216 = vld [vmem:[%s195 + $0x68] sm:$0xff]
      %v217 = vld [vmem:[%s195 + $0x70] sm:$0xff]
      %v218 = vld [vmem:[%s195 + $0x78] sm:$0xff]
      %v219 = vld [vmem:[%s195 + $0x80] sm:$0xff]
      %v220 = vld [vmem:[%s195 + $0x88] sm:$0xff]
      %v221 = vld [vmem:[%s195 + $0x90] sm:$0xff]
      %v222 = vld [vmem:[%s195 + $0x98] sm:$0xff]
      %v223 = vld [vmem:[%s195 + $0xa0] sm:$0xff]
      %v224 = vld [vmem:[%s195 + $0xa8] sm:$0xff]
      %v225 = vld [vmem:[%s195 + $0xb0] sm:$0xff]
      %v226 = vld [vmem:[%s195 + $0xb8] sm:$0xff]
      %v227 = vld [vmem:[%s195 + $0xc0] sm:$0xff]
      %v228 = vld [vmem:[%s195 + $0xc8] sm:$0xff]
      %v229 = vld [vmem:[%s195 + $0xd0] sm:$0xff]
      %v230 = vld [vmem:[%s195 + $0xd8] sm:$0xff]
      %v231 = vld [vmem:[%s195 + $0xe0] sm:$0xff]
      %v232 = vld [vmem:[%s195 + $0xe8] sm:$0xff]
      %v233 = vld [vmem:[%s195 + $0xf0] sm:$0xff]
      %v234 = vld [vmem:[%s195 + $0xf8] sm:$0xff]
      %v235 = vld [vmem:[%s1] sm:$0x1]
      %v237 = vlaneseq
      %v238 = vshrl.u32 %v237, 7
      %v239 = vsub.s32 0, %v238
      %v240 = vrot.slane %v235, %v239
      %v242 = vmul.f32 %v203, %v240
      %v243 = vmul.f32 %v204, %v240
      %v244 = vmul.f32 %v205, %v240
      %v245 = vmul.f32 %v206, %v240
      %v246 = vmul.f32 %v207, %v240
      %v247 = vmul.f32 %v208, %v240
      %v248 = vmul.f32 %v209, %v240
      %v249 = vmul.f32 %v210, %v240
      %v250 = vmul.f32 %v211, %v240
      %v251 = vmul.f32 %v212, %v240
      %v252 = vmul.f32 %v213, %v240
      %v253 = vmul.f32 %v214, %v240
      %v254 = vmul.f32 %v215, %v240
      %v255 = vmul.f32 %v216, %v240
      %v256 = vmul.f32 %v217, %v240
      %v257 = vmul.f32 %v218, %v240
      %v258 = vmul.f32 %v219, %v240
      %v259 = vmul.f32 %v220, %v240
      %v260 = vmul.f32 %v221, %v240
      %v261 = vmul.f32 %v222, %v240
      %v262 = vmul.f32 %v223, %v240
      %v263 = vmul.f32 %v224, %v240
      %v264 = vmul.f32 %v225, %v240
      %v265 = vmul.f32 %v226, %v240
      %v266 = vmul.f32 %v227, %v240
      %v267 = vmul.f32 %v228, %v240
      %v268 = vmul.f32 %v229, %v240
      %v269 = vmul.f32 %v230, %v240
      %v270 = vmul.f32 %v231, %v240
      %v271 = vmul.f32 %v232, %v240
      %v272 = vmul.f32 %v233, %v240
      %v273 = vmul.f32 %v234, %v240
      %v274 = vld [vmem:[%s2] sm:$0x1]
      %v276 = vlaneseq
      %v277 = vshrl.u32 %v276, 7
      %v278 = vsub.s32 0, %v277
      %v279 = vrot.slane %v274, %v278
      %v281 = vadd.f32 %v242, %v279
      %v282 = vadd.f32 %v243, %v279
      %v283 = vadd.f32 %v244, %v279
      %v284 = vadd.f32 %v245, %v279
      %v285 = vadd.f32 %v246, %v279
      %v286 = vadd.f32 %v247, %v279
      %v287 = vadd.f32 %v248, %v279
      %v288 = vadd.f32 %v249, %v279
      %v289 = vadd.f32 %v250, %v279
      %v290 = vadd.f32 %v251, %v279
      %v291 = vadd.f32 %v252, %v279
      %v292 = vadd.f32 %v253, %v279
      %v293 = vadd.f32 %v254, %v279
      %v294 = vadd.f32 %v255, %v279
      %v295 = vadd.f32 %v256, %v279
      %v296 = vadd.f32 %v257, %v279
      %v297 = vadd.f32 %v258, %v279
      %v298 = vadd.f32 %v259, %v279
      %v299 = vadd.f32 %v260, %v279
      %v300 = vadd.f32 %v261, %v279
      %v301 = vadd.f32 %v262, %v279
      %v302 = vadd.f32 %v263, %v279
      %v303 = vadd.f32 %v264, %v279
      %v304 = vadd.f32 %v265, %v279
      %v305 = vadd.f32 %v266, %v279
      %v306 = vadd.f32 %v267, %v279
      %v307 = vadd.f32 %v268, %v279
      %v308 = vadd.f32 %v269, %v279
      %v309 = vadd.f32 %v270, %v279
      %v310 = vadd.f32 %v271, %v279
      %v311 = vadd.f32 %v272, %v279
      %v312 = vadd.f32 %v273, %v279
      %v313 = vld [vmem:[#allocation2] sm:$0x1]
      %vm314 = vcmp.ge.f32.partialorder %v281, 0.0
      %vm315 = vcmp.ge.f32.partialorder %v282, 0.0
      %vm316 = vcmp.ge.f32.partialorder %v283, 0.0
      %vm317 = vcmp.ge.f32.partialorder %v284, 0.0
      %vm318 = vcmp.ge.f32.partialorder %v285, 0.0
      %vm319 = vcmp.ge.f32.partialorder %v286, 0.0
      %vm320 = vcmp.ge.f32.partialorder %v287, 0.0
      %vm321 = vcmp.ge.f32.partialorder %v288, 0.0
      %vm322 = vcmp.ge.f32.partialorder %v289, 0.0
      %vm323 = vcmp.ge.f32.partialorder %v290, 0.0
      %vm324 = vcmp.ge.f32.partialorder %v291, 0.0
      %vm325 = vcmp.ge.f32.partialorder %v292, 0.0
      %vm326 = vcmp.ge.f32.partialorder %v293, 0.0
      %vm327 = vcmp.ge.f32.partialorder %v294, 0.0
      %vm328 = vcmp.ge.f32.partialorder %v295, 0.0
      %vm329 = vcmp.ge.f32.partialorder %v296, 0.0
      %vm330 = vcmp.ge.f32.partialorder %v297, 0.0
      %vm331 = vcmp.ge.f32.partialorder %v298, 0.0
      %vm332 = vcmp.ge.f32.partialorder %v299, 0.0
      %vm333 = vcmp.ge.f32.partialorder %v300, 0.0
      %vm334 = vcmp.ge.f32.partialorder %v301, 0.0
      %vm335 = vcmp.ge.f32.partialorder %v302, 0.0
      %vm336 = vcmp.ge.f32.partialorder %v303, 0.0
      %vm337 = vcmp.ge.f32.partialorder %v304, 0.0
      %vm338 = vcmp.ge.f32.partialorder %v305, 0.0
      %vm339 = vcmp.ge.f32.partialorder %v306, 0.0
      %vm340 = vcmp.ge.f32.partialorder %v307, 0.0
      %vm341 = vcmp.ge.f32.partialorder %v308, 0.0
      %vm342 = vcmp.ge.f32.partialorder %v309, 0.0
      %vm343 = vcmp.ge.f32.partialorder %v310, 0.0
      %vm344 = vcmp.ge.f32.partialorder %v311, 0.0
      %vm345 = vcmp.ge.f32.partialorder %v312, 0.0
      %v347 = vlaneseq
      %v348 = vshrl.u32 %v347, 7
      %v349 = vsub.s32 0, %v348
      %v350 = vrot.slane %v313, %v349
      %351 = vset.pattern.permute.xlu0 0
      %352 = vperm.xlu0 %351, %v350
      %v353 = vpop.permute.xlu0 %352
      %v355 = vmul.f32 %v353, %v281
      %v356 = vmul.f32 %v353, %v282
      %v357 = vmul.f32 %v353, %v283
      %v358 = vmul.f32 %v353, %v284
      %v359 = vmul.f32 %v353, %v285
      %v360 = vmul.f32 %v353, %v286
      %v361 = vmul.f32 %v353, %v287
      %v362 = vmul.f32 %v353, %v288
      %v363 = vmul.f32 %v353, %v289
      %v364 = vmul.f32 %v353, %v290
      %v365 = vmul.f32 %v353, %v291
      %v366 = vmul.f32 %v353, %v292
      %v367 = vmul.f32 %v353, %v293
      %v368 = vmul.f32 %v353, %v294
      %v369 = vmul.f32 %v353, %v295
      %v370 = vmul.f32 %v353, %v296
      %v371 = vmul.f32 %v353, %v297
      %v372 = vmul.f32 %v353, %v298
      %v373 = vmul.f32 %v353, %v299
      %v374 = vmul.f32 %v353, %v300
      %v375 = vmul.f32 %v353, %v301
      %v376 = vmul.f32 %v353, %v302
      %v377 = vmul.f32 %v353, %v303
      %v378 = vmul.f32 %v353, %v304
      %v379 = vmul.f32 %v353, %v305
      %v380 = vmul.f32 %v353, %v306
      %v381 = vmul.f32 %v353, %v307
      %v382 = vmul.f32 %v353, %v308
      %v383 = vmul.f32 %v353, %v309
      %v384 = vmul.f32 %v353, %v310
      %v385 = vmul.f32 %v353, %v311
      %v386 = vmul.f32 %v353, %v312
      %v387 = vsel %vm314, %v281, %v355
      %v388 = vsel %vm315, %v282, %v356
      %v389 = vsel %vm316, %v283, %v357
      %v390 = vsel %vm317, %v284, %v358
      %v391 = vsel %vm318, %v285, %v359
      %v392 = vsel %vm319, %v286, %v360
      %v393 = vsel %vm320, %v287, %v361
      %v394 = vsel %vm321, %v288, %v362
      %v395 = vsel %vm322, %v289, %v363
      %v396 = vsel %vm323, %v290, %v364
      %v397 = vsel %vm324, %v291, %v365
      %v398 = vsel %vm325, %v292, %v366
      %v399 = vsel %vm326, %v293, %v367
      %v400 = vsel %vm327, %v294, %v368
      %v401 = vsel %vm328, %v295, %v369
      %v402 = vsel %vm329, %v296, %v370
      %v403 = vsel %vm330, %v297, %v371
      %v404 = vsel %vm331, %v298, %v372
      %v405 = vsel %vm332, %v299, %v373
      %v406 = vsel %vm333, %v300, %v374
      %v407 = vsel %vm334, %v301, %v375
      %v408 = vsel %vm335, %v302, %v376
      %v409 = vsel %vm336, %v303, %v377
      %v410 = vsel %vm337, %v304, %v378
      %v411 = vsel %vm338, %v305, %v379
      %v412 = vsel %vm339, %v306, %v380
      %v413 = vsel %vm340, %v307, %v381
      %v414 = vsel %vm341, %v308, %v382
      %v415 = vsel %vm342, %v309, %v383
      %v416 = vsel %vm343, %v310, %v384
      %v417 = vsel %vm344, %v311, %v385
      %v418 = vsel %vm345, %v312, %v386
      %v419 = vpack.c.bf16 %v388, %v387
      %v420 = vpack.c.bf16 %v390, %v389
      %v421 = vpack.c.bf16 %v392, %v391
      %v422 = vpack.c.bf16 %v394, %v393
      %v423 = vpack.c.bf16 %v396, %v395
      %v424 = vpack.c.bf16 %v398, %v397
      %v425 = vpack.c.bf16 %v400, %v399
      %v426 = vpack.c.bf16 %v402, %v401
      %v427 = vpack.c.bf16 %v404, %v403
      %v428 = vpack.c.bf16 %v406, %v405
      %v429 = vpack.c.bf16 %v408, %v407
      %v430 = vpack.c.bf16 %v410, %v409
      %v431 = vpack.c.bf16 %v412, %v411
      %v432 = vpack.c.bf16 %v414, %v413
      %v433 = vpack.c.bf16 %v416, %v415
      %v434 = vpack.c.bf16 %v418, %v417
      %v451 = vunpack.c.l.b16 %v419
      %v452 = vunpack.c.h.b16 %v419
      %v453 = vunpack.c.l.b16 %v420
      %v454 = vunpack.c.h.b16 %v420
      %v455 = vunpack.c.l.b16 %v421
      %v456 = vunpack.c.h.b16 %v421
      %v457 = vunpack.c.l.b16 %v422
      %v458 = vunpack.c.h.b16 %v422
      %v459 = vunpack.c.l.b16 %v423
      %v460 = vunpack.c.h.b16 %v423
      %v461 = vunpack.c.l.b16 %v424
      %v462 = vunpack.c.h.b16 %v424
      %v463 = vunpack.c.l.b16 %v425
      %v464 = vunpack.c.h.b16 %v425
      %v465 = vunpack.c.l.b16 %v426
      %v466 = vunpack.c.h.b16 %v426
      %v467 = vunpack.c.l.b16 %v427
      %v468 = vunpack.c.h.b16 %v427
      %v469 = vunpack.c.l.b16 %v428
      %v470 = vunpack.c.h.b16 %v428
      %v471 = vunpack.c.l.b16 %v429
      %v472 = vunpack.c.h.b16 %v429
      %v473 = vunpack.c.l.b16 %v430
      %v474 = vunpack.c.h.b16 %v430
      %v475 = vunpack.c.l.b16 %v431
      %v476 = vunpack.c.h.b16 %v431
      %v477 = vunpack.c.l.b16 %v432
      %v478 = vunpack.c.h.b16 %v432
      %v479 = vunpack.c.l.b16 %v433
      %v480 = vunpack.c.h.b16 %v433
      %v481 = vunpack.c.l.b16 %v434
      %v482 = vunpack.c.h.b16 %v434
      %v483 = vpack.c.b16 %v451, %v451
      %v484 = vpack.c.b16 %v452, %v452
      %v485 = vpack.c.b16 %v453, %v453
      %v486 = vpack.c.b16 %v454, %v454
      %v487 = vpack.c.b16 %v455, %v455
      %v488 = vpack.c.b16 %v456, %v456
      %v489 = vpack.c.b16 %v457, %v457
      %v490 = vpack.c.b16 %v458, %v458
      %v491 = vpack.c.b16 %v459, %v459
      %v492 = vpack.c.b16 %v460, %v460
      %v493 = vpack.c.b16 %v461, %v461
      %v494 = vpack.c.b16 %v462, %v462
      %v495 = vpack.c.b16 %v463, %v463
      %v496 = vpack.c.b16 %v464, %v464
      %v497 = vpack.c.b16 %v465, %v465
      %v498 = vpack.c.b16 %v466, %v466
      %v499 = vpack.c.b16 %v467, %v467
      %v500 = vpack.c.b16 %v468, %v468
      %v501 = vpack.c.b16 %v469, %v469
      %v502 = vpack.c.b16 %v470, %v470
      %v503 = vpack.c.b16 %v471, %v471
      %v504 = vpack.c.b16 %v472, %v472
      %v505 = vpack.c.b16 %v473, %v473
      %v506 = vpack.c.b16 %v474, %v474
      %v507 = vpack.c.b16 %v475, %v475
      %v508 = vpack.c.b16 %v476, %v476
      %v509 = vpack.c.b16 %v477, %v477
      %v510 = vpack.c.b16 %v478, %v478
      %v511 = vpack.c.b16 %v479, %v479
      %v512 = vpack.c.b16 %v480, %v480
      %v513 = vpack.c.b16 %v481, %v481
      %v514 = vpack.c.b16 %v482, %v482
      %547 = vst [vmem:[%s201] sm:$0xf] %v483
      %548 = vst [vmem:[%s201 + $0x4] sm:$0xf] %v484
      %549 = vst [vmem:[%s201 + $0x8] sm:$0xf] %v485
      %550 = vst [vmem:[%s201 + $0xc] sm:$0xf] %v486
      %551 = vst [vmem:[%s201 + $0x10] sm:$0xf] %v487
      %552 = vst [vmem:[%s201 + $0x14] sm:$0xf] %v488
      %553 = vst [vmem:[%s201 + $0x18] sm:$0xf] %v489
      %554 = vst [vmem:[%s201 + $0x1c] sm:$0xf] %v490
      %555 = vst [vmem:[%s201 + $0x20] sm:$0xf] %v491
      %556 = vst [vmem:[%s201 + $0x24] sm:$0xf] %v492
      %557 = vst [vmem:[%s201 + $0x28] sm:$0xf] %v493
      %558 = vst [vmem:[%s201 + $0x2c] sm:$0xf] %v494
      %559 = vst [vmem:[%s201 + $0x30] sm:$0xf] %v495
      %560 = vst [vmem:[%s201 + $0x34] sm:$0xf] %v496
      %561 = vst [vmem:[%s201 + $0x38] sm:$0xf] %v497
      %562 = vst [vmem:[%s201 + $0x3c] sm:$0xf] %v498
      %563 = vst [vmem:[%s201 + $0x40] sm:$0xf] %v499
      %564 = vst [vmem:[%s201 + $0x44] sm:$0xf] %v500
      %565 = vst [vmem:[%s201 + $0x48] sm:$0xf] %v501
      %566 = vst [vmem:[%s201 + $0x4c] sm:$0xf] %v502
      %567 = vst [vmem:[%s201 + $0x50] sm:$0xf] %v503
      %568 = vst [vmem:[%s201 + $0x54] sm:$0xf] %v504
      %569 = vst [vmem:[%s201 + $0x58] sm:$0xf] %v505
      %570 = vst [vmem:[%s201 + $0x5c] sm:$0xf] %v506
      %571 = vst [vmem:[%s201 + $0x60] sm:$0xf] %v507
      %572 = vst [vmem:[%s201 + $0x64] sm:$0xf] %v508
      %573 = vst [vmem:[%s201 + $0x68] sm:$0xf] %v509
      %574 = vst [vmem:[%s201 + $0x6c] sm:$0xf] %v510
      %575 = vst [vmem:[%s201 + $0x70] sm:$0xf] %v511
      %576 = vst [vmem:[%s201 + $0x74] sm:$0xf] %v512
      %577 = vst [vmem:[%s201 + $0x78] sm:$0xf] %v513
      %578 = vst [vmem:[%s201 + $0x7c] sm:$0xf] %v514
      %s579 = smul.u32 32, %s17
      %p580 = scmp.lt.s32.totalorder %s579, 63
      %s581 = scalar_select %p580, %s579, 63
      %s582 = smul.addr %s581, 4
      %s583 = scalar_lea.vmem %s4, %s582
      // Predicated region
      $region37: #{res_block_forward.5} parent=35 // pred_check
        %p584 = pneg %p124
      $region38: #{res_block_forward.5} parent=35 // pred_check_branch
        %586 = sbr.rel (%p584) target = $region40
      $region39: #{res_block_forward.5} parent=35 // pred_region
        %s587 = smul.u32 32, %s17
      $region40: #{res_block_forward.5} parent=35 // pred_fallthru
        _
    $region36: #{res_block_forward.5} parent=5 // pred_fallthru
      _
    %p588 = scmp.le.s32.totalorder 2, %s12
    // Predicated region
    $region41: #{res_block_forward.5} parent=5 // pred_check
      %p589 = pneg %p588
    $region42: #{res_block_forward.5} parent=5 // pred_check_branch
      %591 = sbr.rel (%p589) target = $region44
    $region43: #{res_block_forward.5} parent=5 // pred_region
      %s592 = ssub.s32 %s12, 2
      // Predicated region
      $region45: #{res_block_forward.5} parent=43 // pred_check
        %p593 = pneg %p130
      $region46: #{res_block_forward.5} parent=43 // pred_check_branch
        %595 = sbr.rel (%p593) target = $region48
      $region47: #{res_block_forward.5} parent=43 // pred_region
        %s596 = smul.u32 32, %s18
        %p597 = scmp.lt.s32.totalorder %s596, 63
        %s598 = scalar_select %p597, %s596, 63
        %s599 = smul.addr %s598, 4
        %s600 = scalar_lea.vmem %s4, %s599
      $region48: #{res_block_forward.5} parent=43 // pred_fallthru
        _
    $region44: #{res_block_forward.5} parent=5 // pred_fallthru
      _
  $region6: #{res_block_forward.5} parent=0 // loop_footer
    %s16 = sadd.s32 1, %s12
  $region7: #{res_block_forward.5} parent=0 // loop_footer_branch
    %11 = sbr.rel target = $region3
  $region8: #{res_block_forward.5} parent=0 // loop_exit
    _

// kernel: res_block_forward.4
$region0: #{res_block_forward.4}
  #allocation0 [shape = 'u32[]', space=smem, size = 0x4, offset = 0x4, fixed_abs, tag = 'smem constant byte address 0x4 - core index']
  #allocation1 [shape = 'u32[144,128]{1,0:T(1,128)}', space=vmem, size = 0x12000, scoped, tag = 'internal scratch']
  #allocation2 [shape = 'f32[128,128]{1,0:T(8,128)}', space=vmem, size = 0x10000, scoped, tag = 'scratch operand']
  %s0 = inlined_call_operand.vmem [shape: bf16[2,18,18,128], index: 0, kind: input, shape index: {}]
  %s1 = inlined_call_operand.vmem [shape: bf16[9,128,128], index: 1, kind: input, shape index: {}]
  %s2 = inlined_call_operand.vmem [shape: f32[2,256,128], index: 2, kind: output, shape index: {0}]
  %s3 = inlined_call_operand.vmem [shape: f32[2,2,2,128], index: 3, kind: output, shape index: {1}]
  %4 = xla_tuple %s2, %s3
  %s5 = sld [smem:[#allocation0]]
  $region49: #{res_block_forward.4} parent=0
    _
  %s7 = ssub.s32 1, %s5
  %s8 = scalar_select 0, %s7, %s5
  loop: start=0, step=1, limit=6
  $region2: #{res_block_forward.4} parent=0 // loop_pre_header
    _
  $region3: #{res_block_forward.4} parent=0 // loop_header
    %s10 = sphi 0, %s14
    %p11 = scmp.ge.s32.totalorder %s10, 6
    %s17 = sphi 0, %s29
    %s18 = sphi 0, %s25
    %s19 = sphi 0, %s17
    %s20 = sphi 0, %s18
    %s21 = sphi 0, %s19
    %s22 = sphi 0, %s20
    %s32 = sphi 0, %s34
    %s35 = sphi 0, %s32
    %s36 = sphi 0, %s35
    %s52 = sphi 0, %s36
    %s56 = sphi 0, %s56
    %s58 = sphi 0, %s56
    %s59 = sphi 0, %s58
    %s73 = sphi 0, %s59
    %s81 = sphi 0, %s83
    %s84 = sphi 0, %s81
    %s85 = sphi 0, %s84
    %s101 = sphi 0, %s85
    %s109 = sphi 0, %s111
    %s112 = sphi 0, %s109
    %s113 = sphi 0, %s112
    %s129 = sphi 0, %s113
  $region4: #{res_block_forward.4} parent=0 // loop_header_branch
    %13 = sbr.rel (%p11) target = $region8
  $region5: #{res_block_forward.4} parent=0 // loop_body
    %s15 = ssub.s32 %s10, 1
    %s16 = ssub.s32 %s10, 2
    %s23 = sadd.s32 1, %s18
    %p24 = scmp.ge.s32.totalorder %s23, 2
    %s25 = scalar_select %p24, 0, %s23
    %s26 = sadd.s32 1, %s17
    %s27 = scalar_select %p24, %s26, %s17
    %p28 = scmp.ge.s32.totalorder %s27, 2
    %s29 = scalar_select %p28, 0, %s27
    %s30 = ssub.s32 %s17, %s29
    %p31 = scmp.eq.s32.totalorder %s30, 0
    %s33 = sadd.s32 %s32, 1
    %s34 = scalar_select %p31, %s32, %s33
    %p37 = pneg %p31
    %p38 = scmp.eq.s32.totalorder %s10, 3
    %p39 = por %p37, %p38
    %p40 = scmp.ne.s32.totalorder %s32, %s35
    %p41 = scmp.eq.s32.totalorder %s10, 0
    %p42 = por %p40, %p41
    %p43 = scmp.ne.s32.totalorder %s32, %s35
    %p44 = scmp.eq.s32.totalorder %s15, 3
    %p45 = por %p43, %p44
    %p46 = scmp.ne.s32.totalorder %s35, %s36
    %p47 = scmp.eq.s32.totalorder %s15, 0
    %p48 = por %p46, %p47
    %p49 = scmp.ne.s32.totalorder %s35, %s36
    %p50 = scmp.eq.s32.totalorder %s16, 3
    %p51 = por %p49, %p50
    %p53 = scmp.ne.s32.totalorder %s36, %s52
    %p54 = scmp.eq.s32.totalorder %s16, 0
    %p55 = por %p53, %p54
    %s57 = sadd.s32 %s56, 1
    %p60 = scmp.eq.s32.totalorder %s10, 3
    %p61 = scmp.ne.s32.totalorder %s56, %s58
    %p62 = scmp.eq.s32.totalorder %s10, 0
    %p63 = por %p61, %p62
    %p64 = scmp.ne.s32.totalorder %s56, %s58
    %p65 = scmp.eq.s32.totalorder %s15, 3
    %p66 = por %p64, %p65
    %p67 = scmp.ne.s32.totalorder %s58, %s59
    %p68 = scmp.eq.s32.totalorder %s15, 0
    %p69 = por %p67, %p68
    %p70 = scmp.ne.s32.totalorder %s58, %s59
    %p71 = scmp.eq.s32.totalorder %s16, 3
    %p72 = por %p70, %p71
    %p74 = scmp.ne.s32.totalorder %s59, %s73
    %p75 = scmp.eq.s32.totalorder %s16, 0
    %p76 = por %p74, %p75
    %s77 = ssub.s32 %s17, %s29
    %s78 = ssub.s32 %s18, %s25
    %s79 = sor.u32 %s77, %s78
    %p80 = scmp.eq.s32.totalorder %s79, 0
    %s82 = sadd.s32 %s81, 1
    %s83 = scalar_select %p80, %s81, %s82
    %p86 = pneg %p80
    %p87 = scmp.eq.s32.totalorder %s10, 3
    %p88 = por %p86, %p87
    %p89 = scmp.ne.s32.totalorder %s81, %s84
    %p90 = scmp.eq.s32.totalorder %s10, 0
    %p91 = por %p89, %p90
    %p92 = scmp.ne.s32.totalorder %s81, %s84
    %p93 = scmp.eq.s32.totalorder %s15, 3
    %p94 = por %p92, %p93
    %p95 = scmp.ne.s32.totalorder %s84, %s85
    %p96 = scmp.eq.s32.totalorder %s15, 0
    %p97 = por %p95, %p96
    %p98 = scmp.ne.s32.totalorder %s84, %s85
    %p99 = scmp.eq.s32.totalorder %s16, 3
    %p100 = por %p98, %p99
    %p102 = scmp.ne.s32.totalorder %s85, %s101
    %p103 = scmp.eq.s32.totalorder %s16, 0
    %p104 = por %p102, %p103
    %s105 = ssub.s32 %s17, %s29
    %s106 = ssub.s32 %s18, %s25
    %s107 = sor.u32 %s105, %s106
    %p108 = scmp.eq.s32.totalorder %s107, 0
    %s110 = sadd.s32 %s109, 1
    %s111 = scalar_select %p108, %s109, %s110
    %p114 = pneg %p108
    %p115 = scmp.eq.s32.totalorder %s10, 3
    %p116 = por %p114, %p115
    %p117 = scmp.ne.s32.totalorder %s109, %s112
    %p118 = scmp.eq.s32.totalorder %s10, 0
    %p119 = por %p117, %p118
    %p120 = scmp.ne.s32.totalorder %s109, %s112
    %p121 = scmp.eq.s32.totalorder %s15, 3
    %p122 = por %p120, %p121
    %p123 = scmp.ne.s32.totalorder %s112, %s113
    %p124 = scmp.eq.s32.totalorder %s15, 0
    %p125 = por %p123, %p124
    %p126 = scmp.ne.s32.totalorder %s112, %s113
    %p127 = scmp.eq.s32.totalorder %s16, 3
    %p128 = por %p126, %p127
    %p130 = scmp.ne.s32.totalorder %s113, %s129
    %p131 = scmp.eq.s32.totalorder %s16, 0
    %p132 = por %p130, %p131
    %p133 = scmp.le.s32.totalorder 1, %s10
    %p134 = scmp.lt.s32.totalorder %s10, 5
    %p135 = pnand %p133, %p134
    %p136 = pneg %p135
    // Predicated region
    $region9: #{res_block_forward.4} parent=5 // pred_check
      _
    $region10: #{res_block_forward.4} parent=5 // pred_check_branch
      %138 = sbr.rel (%p135) target = $region12
    $region11: #{res_block_forward.4} parent=5 // pred_region
      %s139 = ssub.s32 %s10, 1
      // Predicated region
      $region13: #{res_block_forward.4} parent=11 // pred_check
        %p140 = pneg %p69
      $region14: #{res_block_forward.4} parent=11 // pred_check_branch
        %142 = sbr.rel (%p140) target = $region16
      $region15: #{res_block_forward.4} parent=11 // pred_region
        _
      $region16: #{res_block_forward.4} parent=11 // pred_fallthru
        _
    $region12: #{res_block_forward.4} parent=5 // pred_fallthru
      _
    %p143 = scmp.lt.s32.totalorder %s10, 4
    // Predicated region
    $region17: #{res_block_forward.4} parent=5 // pred_check
      %p144 = pneg %p143
    $region18: #{res_block_forward.4} parent=5 // pred_check_branch
      %146 = sbr.rel (%p144) target = $region20
    $region19: #{res_block_forward.4} parent=5 // pred_region
      // Predicated region
      $region21: #{res_block_forward.4} parent=19 // pred_check
        %p147 = pneg %p42
      $region22: #{res_block_forward.4} parent=19 // pred_check_branch
        %149 = sbr.rel (%p147) target = $region24
      $region23: #{res_block_forward.4} parent=19 // pred_region
        %p150 = scmp.lt.s32.totalorder %s17, 1
        %s151 = scalar_select %p150, %s17, 1
        %s152 = smul.addr %s151, 54
        %s153 = smul.addr %s152, 4
        %s154 = scalar_lea.vmem %s0, %s153
      $region24: #{res_block_forward.4} parent=19 // pred_fallthru
        _
    $region20: #{res_block_forward.4} parent=5 // pred_fallthru
      _
    %p155 = scmp.le.s32.totalorder 1, %s10
    %p156 = scmp.lt.s32.totalorder %s10, 5
    %p157 = pnand %p155, %p156
    %p158 = pneg %p157
    // Predicated region
    $region25: #{res_block_forward.4} parent=5 // pred_check
      _
    $region26: #{res_block_forward.4} parent=5 // pred_check_branch
      %160 = sbr.rel (%p157) target = $region28
    $region27: #{res_block_forward.4} parent=5 // pred_region
      %s161 = ssub.s32 %s10, 1
      %p162 = scmp.lt.s32.totalorder %s19, 1
      %s163 = scalar_select %p162, %s19, 1
      %s164 = smul.addr %s163, 54
      %s165 = smul.addr %s164, 4
      %s166 = scalar_lea.vmem %s0, %s165
      %p167 = pneg %p48
      %p168 = pneg %p45
      %p169 = pneg %p69
      %p170 = pneg %p66
      %p171 = pneg %p97
      %p172 = pneg %p94
      %s173 = smul.u32 16, %s20
      %p174 = scmp.lt.s32.totalorder %s19, 1
      %s175 = scalar_select %p174, %s19, 1
      %p176 = scmp.lt.s32.totalorder %s173, 31
      %s177 = scalar_select %p176, %s173, 31
      %s178 = smul.addr %s175, 32
      %s179 = sadd.s32 %s177, %s178
      %s180 = smul.addr %s179, 8
      %s181 = scalar_lea.vmem %s2, %s180
      %p182 = pneg %p125
      %p183 = pneg %p122
      %p184 = scmp.lt.s32.totalorder %s19, 1
      %s185 = scalar_select %p184, %s19, 1
      %p186 = scmp.lt.s32.totalorder %s20, 1
      %s187 = scalar_select %p186, %s20, 1
      %s188 = smul.addr %s185, 2
      %s189 = sadd.s32 %s187, %s188
      %s190 = smul.addr %s189, 2
      %s191 = scalar_lea.vmem %s3, %s190
      %p192 = scmp.lt.s32.totalorder %s19, 1
      %s193 = scalar_select %p192, %s19, 1
      %s194 = smul.addr %s193, 54
      %s195 = smul.addr %s194, 4
      %s196 = scalar_lea.vmem %s0, %s195
      %s197 = smul.u32 16, %s20
      %p198 = scmp.lt.s32.totalorder %s19, 1
      %s199 = scalar_select %p198, %s19, 1
      %p200 = scmp.lt.s32.totalorder %s197, 31
      %s201 = scalar_select %p200, %s197, 31
      %s202 = smul.addr %s199, 32
      %s203 = sadd.s32 %s201, %s202
      %s204 = smul.addr %s203, 8
      %s205 = scalar_lea.vmem %s2, %s204
      %s206 = smul.u32 16, %s20
      %p207 = scmp.lt.s32.totalorder %s19, 1
      %s208 = scalar_select %p207, %s19, 1
      %p209 = scmp.lt.s32.totalorder %s20, 1
      %s210 = scalar_select %p209, %s20, 1
      %s211 = smul.addr %s208, 2
      %s212 = sadd.s32 %s210, %s211
      %s213 = smul.addr %s212, 2
      %s214 = scalar_lea.vmem %s3, %s213
      %s216 = smul.u32 %s20, 8
      %217 = vst [vmem:[#allocation2] sm:$0xff] 0.0
      %218 = vst [vmem:[#allocation2 + $0x8] sm:$0xff] 0.0
      %219 = vst [vmem:[#allocation2 + $0x10] sm:$0xff] 0.0
      %220 = vst [vmem:[#allocation2 + $0x18] sm:$0xff] 0.0
      %221 = vst [vmem:[#allocation2 + $0x20] sm:$0xff] 0.0
      %222 = vst [vmem:[#allocation2 + $0x28] sm:$0xff] 0.0
      %223 = vst [vmem:[#allocation2 + $0x30] sm:$0xff] 0.0
      %224 = vst [vmem:[#allocation2 + $0x38] sm:$0xff] 0.0
      %225 = vst [vmem:[#allocation2 + $0x40] sm:$0xff] 0.0
      %226 = vst [vmem:[#allocation2 + $0x48] sm:$0xff] 0.0
      %227 = vst [vmem:[#allocation2 + $0x50] sm:$0xff] 0.0
      %228 = vst [vmem:[#allocation2 + $0x58] sm:$0xff] 0.0
      %229 = vst [vmem:[#allocation2 + $0x60] sm:$0xff] 0.0
      %230 = vst [vmem:[#allocation2 + $0x68] sm:$0xff] 0.0
      %231 = vst [vmem:[#allocation2 + $0x70] sm:$0xff] 0.0
      %232 = vst [vmem:[#allocation2 + $0x78] sm:$0xff] 0.0
      %s233 = smul.u32 %s216, 3
      %s234 = smul.addr %s233, 4
      %s235 = scalar_lea.vmem %s196, %s234
      %v236 = vld [vmem:[%s235] sm:$0xf]
      %v237 = vld [vmem:[%s235 + $0x4] sm:$0xf]
      %v238 = vld [vmem:[%s235 + $0xc] sm:$0xf]
      %v239 = vld [vmem:[%s235 + $0x10] sm:$0xf]
      %v240 = vld [vmem:[%s235 + $0x18] sm:$0xf]
      %v241 = vld [vmem:[%s235 + $0x1c] sm:$0xf]
      %v242 = vld [vmem:[%s235 + $0x24] sm:$0xf]
      %v243 = vld [vmem:[%s235 + $0x28] sm:$0xf]
      %v244 = vld [vmem:[%s235 + $0x30] sm:$0xf]
      %v245 = vld [vmem:[%s235 + $0x34] sm:$0xf]
      %v246 = vld [vmem:[%s235 + $0x3c] sm:$0xf]
      %v247 = vld [vmem:[%s235 + $0x40] sm:$0xf]
      %v248 = vld [vmem:[%s235 + $0x48] sm:$0xf]
      %v249 = vld [vmem:[%s235 + $0x4c] sm:$0xf]
      %v250 = vld [vmem:[%s235 + $0x54] sm:$0xf]
      %v251 = vld [vmem:[%s235 + $0x58] sm:$0xf]
      %v252 = vld [vmem:[#allocation2] sm:$0xff]
      %v253 = vld [vmem:[#allocation2 + $0x8] sm:$0xff]
      %v254 = vld [vmem:[#allocation2 + $0x10] sm:$0xff]
      %v255 = vld [vmem:[#allocation2 + $0x18] sm:$0xff]
      %v256 = vld [vmem:[#allocation2 + $0x20] sm:$0xff]
      %v257 = vld [vmem:[#allocation2 + $0x28] sm:$0xff]
      %v258 = vld [vmem:[#allocation2 + $0x30] sm:$0xff]
      %v259 = vld [vmem:[#allocation2 + $0x38] sm:$0xff]
      %v260 = vld [vmem:[#allocation2 + $0x40] sm:$0xff]
      %v261 = vld [vmem:[#allocation2 + $0x48] sm:$0xff]
      %v262 = vld [vmem:[#allocation2 + $0x50] sm:$0xff]
      %v263 = vld [vmem:[#allocation2 + $0x58] sm:$0xff]
      %v264 = vld [vmem:[#allocation2 + $0x60] sm:$0xff]
      %v265 = vld [vmem:[#allocation2 + $0x68] sm:$0xff]
      %v266 = vld [vmem:[#allocation2 + $0x70] sm:$0xff]
      %v267 = vld [vmem:[#allocation2 + $0x78] sm:$0xff]
      %v268 = vld [vmem:[%s1] sm:$0xf]
      %v269 = vld [vmem:[%s1 + $0x4] sm:$0xf]
      %v270 = vld [vmem:[%s1 + $0x8] sm:$0xf]
      %v271 = vld [vmem:[%s1 + $0xc] sm:$0xf]
      %v272 = vld [vmem:[%s1 + $0x10] sm:$0xf]
      %v273 = vld [vmem:[%s1 + $0x14] sm:$0xf]
      %v274 = vld [vmem:[%s1 + $0x18] sm:$0xf]
      %v275 = vld [vmem:[%s1 + $0x1c] sm:$0xf]
      %v276 = vld [vmem:[%s1 + $0x20] sm:$0xf]
      %v277 = vld [vmem:[%s1 + $0x24] sm:$0xf]
      %v278 = vld [vmem:[%s1 + $0x28] sm:$0xf]
      %v279 = vld [vmem:[%s1 + $0x2c] sm:$0xf]
      %v280 = vld [vmem:[%s1 + $0x30] sm:$0xf]
      %v281 = vld [vmem:[%s1 + $0x34] sm:$0xf]
      %v282 = vld [vmem:[%s1 + $0x38] sm:$0xf]
      %v283 = vld [vmem:[%s1 + $0x3c] sm:$0xf]
      %v300 = vunpack.c.l.b16 %v236
      %v301 = vunpack.c.l.b16 %v237
      %v302 = vunpack.c.l.b16 %v238
      %v303 = vunpack.c.l.b16 %v239
      %v304 = vunpack.c.l.b16 %v240
      %v305 = vunpack.c.l.b16 %v241
      %v306 = vunpack.c.l.b16 %v242
      %v307 = vunpack.c.l.b16 %v243
      %v308 = vunpack.c.l.b16 %v244
      %v309 = vunpack.c.l.b16 %v245
      %v310 = vunpack.c.l.b16 %v246
      %v311 = vunpack.c.l.b16 %v247
      %v312 = vunpack.c.l.b16 %v248
      %v313 = vunpack.c.l.b16 %v249
      %v314 = vunpack.c.l.b16 %v250
      %v315 = vunpack.c.l.b16 %v251
      %v316 = vpack.c.b16 %v301, %v300
      %v317 = vpack.c.b16 %v303, %v302
      %v318 = vpack.c.b16 %v305, %v304
      %v319 = vpack.c.b16 %v307, %v306
      %v320 = vpack.c.b16 %v309, %v308
      %v321 = vpack.c.b16 %v311, %v310
      %v322 = vpack.c.b16 %v313, %v312
      %v323 = vpack.c.b16 %v315, %v314
      %v348 = vunpack.c.l.b16 %v268
      %v349 = vunpack.c.l.b16 %v269
      %v350 = vunpack.c.l.b16 %v270
      %v351 = vunpack.c.l.b16 %v271
      %v352 = vunpack.c.l.b16 %v272
      %v353 = vunpack.c.l.b16 %v273
      %v354 = vunpack.c.l.b16 %v274
      %v355 = vunpack.c.l.b16 %v275
      %v356 = vunpack.c.l.b16 %v276
      %v357 = vunpack.c.l.b16 %v277
      %v358 = vunpack.c.l.b16 %v278
      %v359 = vunpack.c.l.b16 %v279
      %v360 = vunpack.c.l.b16 %v280
      %v361 = vunpack.c.l.b16 %v281
      %v362 = vunpack.c.l.b16 %v282
      %v363 = vunpack.c.l.b16 %v283
      %v364 = vpack.c.b16 %v349, %v348
      %v365 = vpack.c.b16 %v351, %v350
      %v366 = vpack.c.b16 %v353, %v352
      %v367 = vpack.c.b16 %v355, %v354
      %v368 = vpack.c.b16 %v357, %v356
      %v369 = vpack.c.b16 %v359, %v358
      %v370 = vpack.c.b16 %v361, %v360
      %v371 = vpack.c.b16 %v363, %v362
      %380 = vmatprep.subr.bf16.mxu0 0
      %381 = vmatpush1.bf16.msra.mxu0 %v364
      %382 = vmatprep.subr.bf16.mxu0 0
      %383 = vmatpush1.bf16.msra.mxu0 %v365
      %384 = vmatprep.subr.bf16.mxu0 0
      %385 = vmatpush1.bf16.msra.mxu0 %v366
      %386 = vmatprep.subr.bf16.mxu0 0
      %387 = vmatpush1.bf16.msra.mxu0 %v367
      %388 = vmatprep.subr.bf16.mxu0 0
      %389 = vmatpush1.bf16.msra.mxu0 %v368
      %390 = vmatprep.subr.bf16.mxu0 0
      %391 = vmatpush1.bf16.msra.mxu0 %v369
      %392 = vmatprep.subr.bf16.mxu0 0
      %393 = vmatpush1.bf16.msra.mxu0 %v370
      %394 = vmatprep.subr.bf16.mxu0 0
      %395 = vmatpush1.bf16.msra.mxu0 %v371
      %396 = vmatprep.subr.bf16.mxu0 0
      %397 = vmatpush1.bf16.msra.mxu0 0
      %398 = vmatprep.subr.bf16.mxu0 0
      %399 = vmatpush1.bf16.msra.mxu0 0
      %400 = vmatprep.subr.bf16.mxu0 0
      %401 = vmatpush1.bf16.msra.mxu0 0
      %402 = vmatprep.subr.bf16.mxu0 0
      %403 = vmatpush1.bf16.msra.mxu0 0
      %404 = vmatprep.subr.bf16.mxu0 0
      %405 = vmatpush1.bf16.msra.mxu0 0
      %406 = vmatprep.subr.bf16.mxu0 0
      %407 = vmatpush1.bf16.msra.mxu0 0
      %408 = vmatprep.subr.bf16.mxu0 0
      %409 = vmatpush1.bf16.msra.mxu0 0
      %410 = vmatprep.subr.bf16.mxu0 0
      %411 = vmatpush1.bf16.msra.mxu0 0
      %412 = vmatprep.mubr.bf16.mxu0 0
      %413 = vmatmul.mubr.bf16.gmra.mrb[0].mxu0 %v316
      %v414 = vpop.f32.mrb[0].mxu0
      %v415 = vadd.f32 0.0, %v414
      %v416 = vpop.f32.mrb[0].mxu0
      %v417 = vpop.f32.mrb[0].mxu0
      %v418 = vadd.f32 0.0, %v417
      %v419 = vpop.f32.mrb[0].mxu0
      %420 = vmatprep.mubr.bf16.mxu0 0
      %421 = vmatmul.mubr.bf16.gmra.mrb[0].mxu0 %v317
      %v422 = vpop.f32.mrb[0].mxu0
      %v423 = vadd.f32 0.0, %v422
      %v424 = vpop.f32.mrb[0].mxu0
      %v425 = vpop.f32.mrb[0].mxu0
      %v426 = vadd.f32 0.0, %v425
      %v427 = vpop.f32.mrb[0].mxu0
      %428 = vmatprep.mubr.bf16.mxu0 0
      %429 = vmatmul.mubr.bf16.gmra.mrb[0].mxu0 %v318
      %v430 = vpop.f32.mrb[0].mxu0
      %v431 = vadd.f32 0.0, %v430
      %v432 = vpop.f32.mrb[0].mxu0
      %v433 = vpop.f32.mrb[0].mxu0
      %v434 = vadd.f32 0.0, %v433
      %v435 = vpop.f32.mrb[0].mxu0
      %436 = vmatprep.mubr.bf16.mxu0 0
      %437 = vmatmul.mubr.bf16.gmra.mrb[0].mxu0 %v319
      %v438 = vpop.f32.mrb[0].mxu0
      %v439 = vadd.f32 0.0, %v438
      %v440 = vpop.f32.mrb[0].mxu0
      %v441 = vpop.f32.mrb[0].mxu0
      %v442 = vadd.f32 0.0, %v441
      %v443 = vpop.f32.mrb[0].mxu0
      %444 = vmatprep.mubr.bf16.mxu0 0
      %445 = vmatmul.mubr.bf16.gmra.mrb[0].mxu0 %v320
      %v446 = vpop.f32.mrb[0].mxu0
      %v447 = vadd.f32 0.0, %v446
      %v448 = vpop.f32.mrb[0].mxu0
      %v449 = vpop.f32.mrb[0].mxu0
      %v450 = vadd.f32 0.0, %v449
      %v451 = vpop.f32.mrb[0].mxu0
      %452 = vmatprep.mubr.bf16.mxu0 0
      %453 = vmatmul.mubr.bf16.gmra.mrb[0].mxu0 %v321
      %v454 = vpop.f32.mrb[0].mxu0
      %v455 = vadd.f32 0.0, %v454
      %v456 = vpop.f32.mrb[0].mxu0
      %v457 = vpop.f32.mrb[0].mxu0
      %v458 = vadd.f32 0.0, %v457
      %v459 = vpop.f32.mrb[0].mxu0
      %460 = vmatprep.mubr.bf16.mxu0 0
      %461 = vmatmul.mubr.bf16.gmra.mrb[0].mxu0 %v322
      %v462 = vpop.f32.mrb[0].mxu0
      %v463 = vadd.f32 0.0, %v462
      %v464 = vpop.f32.mrb[0].mxu0
      %v465 = vpop.f32.mrb[0].mxu0
      %v466 = vadd.f32 0.0, %v465
      %v467 = vpop.f32.mrb[0].mxu0
      %468 = vmatprep.mubr.bf16.mxu0 0
      %469 = vmatmul.mubr.bf16.gmra.mrb[0].mxu0 %v323
      %v470 = vpop.f32.mrb[0].mxu0
      %v471 = vadd.f32 0.0, %v470
      %v472 = vpop.f32.mrb[0].mxu0
      %v473 = vpop.f32.mrb[0].mxu0
      %v474 = vadd.f32 0.0, %v473
      %v475 = vpop.f32.mrb[0].mxu0
      %476 = vdwg.mxu0
      %v477 = vadd.f32 %v252, %v415
      %v478 = vadd.f32 %v253, %v418
      %v479 = vadd.f32 %v254, %v423
      %v480 = vadd.f32 %v255, %v426
      %v481 = vadd.f32 %v256, %v431
      %v482 = vadd.f32 %v257, %v434
      %v483 = vadd.f32 %v258, %v439
      %v484 = vadd.f32 %v259, %v442
      %v485 = vadd.f32 %v260, %v447
      %v486 = vadd.f32 %v261, %v450
      %v487 = vadd.f32 %v262, %v455
      %v488 = vadd.f32 %v263, %v458
      %v489 = vadd.f32 %v264, %v463
      %v490 = vadd.f32 %v265, %v466
      %v491 = vadd.f32 %v266, %v471
      %v492 = vadd.f32 %v267, %v474
      %493 = vst [vmem:[#allocation2] sm:$0xff] %v477
      %494 = vst [vmem:[#allocation2 + $0x8] sm:$0xff] %v478
      %495 = vst [vmem:[#allocation2 + $0x10] sm:$0xff] %v479
      %496 = vst [vmem:[#allocation2 + $0x18] sm:$0xff] %v480
      %497 = vst [vmem:[#allocation2 + $0x20] sm:$0xff] %v481
      %498 = vst [vmem:[#allocation2 + $0x28] sm:$0xff] %v482
      %499 = vst [vmem:[#allocation2 + $0x30] sm:$0xff] %v483
      %500 = vst [vmem:[#allocation2 + $0x38] sm:$0xff] %v484
      %501 = vst [vmem:[#allocation2 + $0x40] sm:$0xff] %v485
      %502 = vst [vmem:[#allocation2 + $0x48] sm:$0xff] %v486
      %503 = vst [vmem:[#allocation2 + $0x50] sm:$0xff] %v487
      %504 = vst [vmem:[#allocation2 + $0x58] sm:$0xff] %v488
      %505 = vst [vmem:[#allocation2 + $0x60] sm:$0xff] %v489
      %506 = vst [vmem:[#allocation2 + $0x68] sm:$0xff] %v490
      %507 = vst [vmem:[#allocation2 + $0x70] sm:$0xff] %v491
      %508 = vst [vmem:[#allocation2 + $0x78] sm:$0xff] %v492
      %v509 = vld [vmem:[%s235] sm:$0xf]
      %v510 = vld [vmem:[%s235 + $0x4] sm:$0xf]
      %v511 = vld [vmem:[%s235 + $0x8] sm:$0x1]
      %v512 = vld [vmem:[%s235 + $0xc] sm:$0xf]
      %v513 = vld [vmem:[%s235 + $0x10] sm:$0xf]
      %v514 = vld [vmem:[%s235 + $0x14] sm:$0x1]
      %v515 = vld [vmem:[%s235 + $0x18] sm:$0xf]
      %v516 = vld [vmem:[%s235 + $0x1c] sm:$0xf]
      %v517 = vld [vmem:[%s235 + $0x20] sm:$0x1]
      %v518 = vld [vmem:[%s235 + $0x24] sm:$0xf]
      %v519 = vld [vmem:[%s235 + $0x28] sm:$0xf]
      %v520 = vld [vmem:[%s235 + $0x2c] sm:$0x1]
      %v521 = vld [vmem:[%s235 + $0x30] sm:$0xf]
      %v522 = vld [vmem:[%s235 + $0x34] sm:$0xf]
      %v523 = vld [vmem:[%s235 + $0x38] sm:$0x1]
      %v524 = vld [vmem:[%s235 + $0x3c] sm:$0xf]
      %v525 = vld [vmem:[%s235 + $0x40] sm:$0xf]
      %v526 = vld [vmem:[%s235 + $0x44] sm:$0x1]
      %v527 = vld [vmem:[%s235 + $0x48] sm:$0xf]
      %v528 = vld [vmem:[%s235 + $0x4c] sm:$0xf]
      %v529 = vld [vmem:[%s235 + $0x50] sm:$0x1]
      %v530 = vld [vmem:[%s235 + $0x54] sm:$0xf]
      %v531 = vld [vmem:[%s235 + $0x58] sm:$0xf]
      %v532 = vld [vmem:[%s235 + $0x5c] sm:$0x1]
      %vm533 = vsmask.f32 3328
      %vm534 = vsmask.f32 7440
      %vm535 = vmor %vm533, %vm534
      %v537 = vshrl.u32 %v509, 16
      %v539 = vrot.slane %v537, 4
      %v540 = vshll.u32 %v509, 16
      %v542 = vrot.slane %v540, 5
      %v543 = vor.u32 %v539, %v542
      %v544 = vrot.slane %v543, 4
      %v546 = vshll.u32 %v510, 16
      %v548 = vrot.slane %v546, 5
      %v549 = vsel %vm535, %v544, %v548
      %v550 = vshrl.u32 %v510, 16
      %v552 = vrot.slane %v550, 4
      %v553 = vor.u32 %v552, %v548
      %v554 = vrot.slane %v553, 4
      %v556 = vshll.u32 %v511, 16
      %v558 = vrot.slane %v556, 5
      %v559 = vsel %vm535, %v554, %v558
      %v561 = vshrl.u32 %v512, 16
      %v563 = vrot.slane %v561, 4
      %v564 = vshll.u32 %v512, 16
      %v566 = vrot.slane %v564, 5
      %v567 = vor.u32 %v563, %v566
      %v568 = vrot.slane %v567, 4
      %v570 = vshll.u32 %v513, 16
      %v572 = vrot.slane %v570, 5
      %v573 = vsel %vm535, %v568, %v572
      %v574 = vshrl.u32 %v513, 16
      %v576 = vrot.slane %v574, 4
      %v577 = vor.u32 %v576, %v572
      %v578 = vrot.slane %v577, 4
      %v580 = vshll.u32 %v514, 16
      %v582 = vrot.slane %v580, 5
      %v583 = vsel %vm535, %v578, %v582
      %v585 = vshrl.u32 %v515, 16
      %v587 = vrot.slane %v585, 4
      %v588 = vshll.u32 %v515, 16
      %v590 = vrot.slane %v588, 5
      %v591 = vor.u32 %v587, %v590
      %v592 = vrot.slane %v591, 4
      %v594 = vshll.u32 %v516, 16
      %v596 = vrot.slane %v594, 5
      %v597 = vsel %vm535, %v592, %v596
      %v598 = vshrl.u32 %v516, 16
      %v600 = vrot.slane %v598, 4
      %v601 = vor.u32 %v600, %v596
      %v602 = vrot.slane %v601, 4
      %v604 = vshll.u32 %v517, 16
      %v606 = vrot.slane %v604, 5
      %v607 = vsel %vm535, %v602, %v606
      %v609 = vshrl.u32 %v518, 16
      %v611 = vrot.slane %v609, 4
      %v612 = vshll.u32 %v518, 16
      %v614 = vrot.slane %v612, 5
      %v615 = vor.u32 %v611, %v614
      %v616 = vrot.slane %v615, 4
      %v618 = vshll.u32 %v519, 16
      %v620 = vrot.slane %v618, 5
      %v621 = vsel %vm535, %v616, %v620
      %v622 = vshrl.u32 %v519, 16
      %v624 = vrot.slane %v622, 4
      %v625 = vor.u32 %v624, %v620
      %v626 = vrot.slane %v625, 4
      %v628 = vshll.u32 %v520, 16
      %v630 = vrot.slane %v628, 5
      %v631 = vsel %vm535, %v626, %v630
      %v633 = vshrl.u32 %v521, 16
      %v635 = vrot.slane %v633, 4
      %v636 = vshll.u32 %v521, 16
      %v638 = vrot.slane %v636, 5
      %v639 = vor.u32 %v635, %v638
      %v640 = vrot.slane %v639, 4
      %v642 = vshll.u32 %v522, 16
      %v644 = vrot.slane %v642, 5
      %v645 = vsel %vm535, %v640, %v644
      %v646 = vshrl.u32 %v522, 16
      %v648 = vrot.slane %v646, 4
      %v649 = vor.u32 %v648, %v644
      %v650 = vrot.slane %v649, 4
      %v652 = vshll.u32 %v523, 16
      %v654 = vrot.slane %v652, 5
      %v655 = vsel %vm535, %v650, %v654
      %v657 = vshrl.u32 %v524, 16
      %v659 = vrot.slane %v657, 4
      %v660 = vshll.u32 %v524, 16
      %v662 = vrot.slane %v660, 5
      %v663 = vor.u32 %v659, %v662
      %v664 = vrot.slane %v663, 4
      %v666 = vshll.u32 %v525, 16
      %v668 = vrot.slane %v666, 5
      %v669 = vsel %vm535, %v664, %v668
      %v670 = vshrl.u32 %v525, 16
      %v672 = vrot.slane %v670, 4
      %v673 = vor.u32 %v672, %v668
      %v674 = vrot.slane %v673, 4
      %v676 = vshll.u32 %v526, 16
      %v678 = vrot.slane %v676, 5
      %v679 = vsel %vm535, %v674, %v678
      %v681 = vshrl.u32 %v527, 16
      %v683 = vrot.slane %v681, 4
      %v684 = vshll.u32 %v527, 16
      %v686 = vrot.slane %v684, 5
      %v687 = vor.u32 %v683, %v686
      %v688 = vrot.slane %v687, 4
      %v690 = vshll.u32 %v528, 16
      %v692 = vrot.slane %v690, 5
      %v693 = vsel %vm535, %v688, %v692
      %v694 = vshrl.u32 %v528, 16
      %v696 = vrot.slane %v694, 4
      %v697 = vor.u32 %v696, %v692
      %v698 = vrot.slane %v697, 4
      %v700 = vshll.u32 %v529, 16
      %v702 = vrot.slane %v700, 5
      %v703 = vsel %vm535, %v698, %v702
      %v705 = vshrl.u32 %v530, 16
      %v707 = vrot.slane %v705, 4
      %v708 = vshll.u32 %v530, 16
      %v710 = vrot.slane %v708, 5
      %v711 = vor.u32 %v707, %v710
      %v712 = vrot.slane %v711, 4
      %v714 = vshll.u32 %v531, 16
      %v716 = vrot.slane %v714, 5
      %v717 = vsel %vm535, %v712, %v716
      %v718 = vshrl.u32 %v531, 16
      %v720 = vrot.slane %v718, 4
      %v721 = vor.u32 %v720, %v716
      %v722 = vrot.slane %v721, 4
      %v724 = vshll.u32 %v532, 16
      %v726 = vrot.slane %v724, 5
      %v727 = vsel %vm535, %v722, %v726
      %v728 = vld [vmem:[#allocation2] sm:$0xff]
      %v729 = vld [vmem:[#allocation2 + $0x8] sm:$0xff]
      %v730 = vld [vmem:[#allocation2 + $0x10] sm:$0xff]
      %v731 = vld [vmem:[#allocation2 + $0x18] sm:$0xff]
      %v732 = vld [vmem:[#allocation2 + $0x20] sm:$0xff]
      %v733 = vld [vmem:[#allocation2 + $0x28] sm:$0xff]
      %v734 = vld [vmem:[#allocation2 + $0x30] sm:$0xff]
      %v735 = vld [vmem:[#allocation2 + $0x38] sm:$0xff]
      %v736 = vld [vmem:[#allocation2 + $0x40] sm:$0xff]
      %v737 = vld [vmem:[#allocation2 + $0x48] sm:$0xff]
      %v738 = vld [vmem:[#allocation2 + $0x50] sm:$0xff]
      %v739 = vld [vmem:[#allocation2 + $0x58] sm:$0xff]
      %v740 = vld [vmem:[#allocation2 + $0x60] sm:$0xff]
      %v741 = vld [vmem:[#allocation2 + $0x68] sm:$0xff]
      %v742 = vld [vmem:[#allocation2 + $0x70] sm:$0xff]
      %v743 = vld [vmem:[#allocation2 + $0x78] sm:$0xff]
      %s744 = scalar_lea.vmem %s1, 64
      %v745 = vld [vmem:[%s744] sm:$0xf]
      %v746 = vld [vmem:[%s744 + $0x4] sm:$0xf]
      %v747 = vld [vmem:[%s744 + $0x8] sm:$0xf]
      %v748 = vld [vmem:[%s744 + $0xc] sm:$0xf]
      %v749 = vld [vmem:[%s744 + $0x10] sm:$0xf]
      %v750 = vld [vmem:[%s744 + $0x14] sm:$0xf]
      %v751 = vld [vmem:[%s744 + $0x18] sm:$0xf]
      %v752 = vld [vmem:[%s744 + $0x1c] sm:$0xf]
      %v753 = vld [vmem:[%s744 + $0x20] sm:$0xf]
      %v754 = vld [vmem:[%s744 + $0x24] sm:$0xf]
      %v755 = vld [vmem:[%s744 + $0x28] sm:$0xf]
      %v756 = vld [vmem:[%s744 + $0x2c] sm:$0xf]
      %v757 = vld [vmem:[%s744 + $0x30] sm:$0xf]
      %v758 = vld [vmem:[%s744 + $0x34] sm:$0xf]
      %v759 = vld [vmem:[%s744 + $0x38] sm:$0xf]
      %v760 = vld [vmem:[%s744 + $0x3c] sm:$0xf]
      %v761 = vunpack.c.l.b16 %v549
      %v762 = vunpack.c.l.b16 %v559
      %v763 = vunpack.c.l.b16 %v573
      %v764 = vunpack.c.l.b16 %v583
      %v765 = vunpack.c.l.b16 %v597
      %v766 = vunpack.c.l.b16 %v607
      %v767 = vunpack.c.l.b16 %v621
      %v768 = vunpack.c.l.b16 %v631
      %v769 = vunpack.c.l.b16 %v645
      %v770 = vunpack.c.l.b16 %v655
      %v771 = vunpack.c.l.b16 %v669
      %v772 = vunpack.c.l.b16 %v679
      %v773 = vunpack.c.l.b16 %v693
      %v774 = vunpack.c.l.b16 %v703
      %v775 = vunpack.c.l.b16 %v717
      %v776 = vunpack.c.l.b16 %v727
      %v777 = vpack.c.b16 %v762, %v761
      %v778 = vpack.c.b16 %v764, %v763
      %v779 = vpack.c.b16 %v766, %v765
      %v780 = vpack.c.b16 %v768, %v767
      %v781 = vpack.c.b16 %v770, %v769
      %v782 = vpack.c.b16 %v772, %v771
      %v783 = vpack.c.b16 %v774, %v773
      %v784 = vpack.c.b16 %v776, %v775
      %v809 = vunpack.c.l.b16 %v745
      %v810 = vunpack.c.l.b16 %v746
      %v811 = vunpack.c.l.b16 %v747
      %v812 = vunpack.c.l.b16 %v748
      %v813 = vunpack.c.l.b16 %v749
      %v814 = vunpack.c.l.b16 %v750
      %v815 = vunpack.c.l.b16 %v751
      %v816 = vunpack.c.l.b16 %v752
      %v817 = vunpack.c.l.b16 %v753
      %v818 = vunpack.c.l.b16 %v754
      %v819 = vunpack.c.l.b16 %v755
      %v820 = vunpack.c.l.b16 %v756
      %v821 = vunpack.c.l.b16 %v757
      %v822 = vunpack.c.l.b16 %v758
      %v823 = vunpack.c.l.b16 %v759
      %v824 = vunpack.c.l.b16 %v760
      %v825 = vpack.c.b16 %v810, %v809
      %v826 = vpack.c.b16 %v812, %v811
      %v827 = vpack.c.b16 %v814, %v813
      %v828 = vpack.c.b16 %v816, %v815
      %v829 = vpack.c.b16 %v818, %v817
      %v830 = vpack.c.b16 %v820, %v819
      %v831 = vpack.c.b16 %v822, %v821
      %v832 = vpack.c.b16 %v824, %v823
      %841 = vmatprep.subr.bf16.mxu0 0
      %842 = vmatpush1.bf16.msra.mxu0 %v825
      %843 = vmatprep.subr.bf16.mxu0 0
      %844 = vmatpush1.bf16.msra.mxu0 %v826
      %845 = vmatprep.subr.bf16.mxu0 0
      %846 = vmatpush1.bf16.msra.mxu0 %v827
      %847 = vmatprep.subr.bf16.mxu0 0
      %848 = vmatpush1.bf16.msra.mxu0 %v828
      %849 = vmatprep.subr.bf16.mxu0 0
      %850 = vmatpush1.bf16.msra.mxu0 %v829
      %851 = vmatprep.subr.bf16.mxu0 0
      %852 = vmatpush1.bf16.msra.mxu0 %v830
      %853 = vmatprep.subr.bf16.mxu0 0
      %854 = vmatpush1.bf16.msra.mxu0 %v831
      %855 = vmatprep.subr.bf16.mxu0 0
      %856 = vmatpush1.bf16.msra.mxu0 %v832
      %857 = vmatprep.subr.bf16.mxu0 0
      %858 = vmatpush1.bf16.msra.mxu0 0
      %859 = vmatprep.subr.bf16.mxu0 0
      %860 = vmatpush1.bf16.msra.mxu0 0
      %861 = vmatprep.subr.bf16.mxu0 0
      %862 = vmatpush1.bf16.msra.mxu0 0
      %863 = vmatprep.subr.bf16.mxu0 0
      %864 = vmatpush1.bf16.msra.mxu0 0
      %865 = vmatprep.subr.bf16.mxu0 0
      %866 = vmatpush1.bf16.msra.mxu0 0
      %867 = vmatprep.subr.bf16.mxu0 0
      %868 = vmatpush1.bf16.msra.mxu0 0
      %869 = vmatprep.subr.bf16.mxu0 0
      %870 = vmatpush1.bf16.msra.mxu0 0
      %871 = vmatprep.subr.bf16.mxu0 0
      %872 = vmatpush1.bf16.msra.mxu0 0
      %873 = vmatprep.mubr.bf16.mxu0 0
      %874 = vmatmul.mubr.bf16.gmra.mrb[0].mxu0 %v777
      %v875 = vpop.f32.mrb[0].mxu0
      %v876 = vadd.f32 0.0, %v875
      %v877 = vpop.f32.mrb[0].mxu0
      %v878 = vpop.f32.mrb[0].mxu0
      %v879 = vadd.f32 0.0, %v878
      %v880 = vpop.f32.mrb[0].mxu0
      %881 = vmatprep.mubr.bf16.mxu0 0
      %882 = vmatmul.mubr.bf16.gmra.mrb[0].mxu0 %v778
      %v883 = vpop.f32.mrb[0].mxu0
      %v884 = vadd.f32 0.0, %v883
      %v885 = vpop.f32.mrb[0].mxu0
      %v886 = vpop.f32.mrb[0].mxu0
      %v887 = vadd.f32 0.0, %v886
      %v888 = vpop.f32.mrb[0].mxu0
      %889 = vmatprep.mubr.bf16.mxu0 0
      %890 = vmatmul.mubr.bf16.gmra.mrb[0].mxu0 %v779
      %v891 = vpop.f32.mrb[0].mxu0
      %v892 = vadd.f32 0.0, %v891
      %v893 = vpop.f32.mrb[0].mxu0
      %v894 = vpop.f32.mrb[0].mxu0
      %v895 = vadd.f32 0.0, %v894
      %v896 = vpop.f32.mrb[0].mxu0
      %897 = vmatprep.mubr.bf16.mxu0 0
      %898 = vmatmul.mubr.bf16.gmra.mrb[0].mxu0 %v780
      %v899 = vpop.f32.mrb[0].mxu0
      %v900 = vadd.f32 0.0, %v899
      %v901 = vpop.f32.mrb[0].mxu0
      %v902 = vpop.f32.mrb[0].mxu0
      %v903 = vadd.f32 0.0, %v902
      %v904 = vpop.f32.mrb[0].mxu0
      %905 = vmatprep.mubr.bf16.mxu0 0
      %906 = vmatmul.mubr.bf16.gmra.mrb[0].mxu0 %v781
      %v907 = vpop.f32.mrb[0].mxu0
      %v908 = vadd.f32 0.0, %v907
      %v909 = vpop.f32.mrb[0].mxu0
      %v910 = vpop.f32.mrb[0].mxu0
      %v911 = vadd.f32 0.0, %v910
      %v912 = vpop.f32.mrb[0].mxu0
      %913 = vmatprep.mubr.bf16.mxu0 0
      %914 = vmatmul.mubr.bf16.gmra.mrb[0].mxu0 %v782
      %v915 = vpop.f32.mrb[0].mxu0
      %v916 = vadd.f32 0.0, %v915
      %v917 = vpop.f32.mrb[0].mxu0
      %v918 = vpop.f32.mrb[0].mxu0
      %v919 = vadd.f32 0.0, %v918
      %v920 = vpop.f32.mrb[0].mxu0
      %921 = vmatprep.mubr.bf16.mxu0 0
      %922 = vmatmul.mubr.bf16.gmra.mrb[0].mxu0 %v783
      %v923 = vpop.f32.mrb[0].mxu0
      %v924 = vadd.f32 0.0, %v923
      %v925 = vpop.f32.mrb[0].mxu0
      %v926 = vpop.f32.mrb[0].mxu0
      %v927 = vadd.f32 0.0, %v926
      %v928 = vpop.f32.mrb[0].mxu0
      %929 = vmatprep.mubr.bf16.mxu0 0
      %930 = vmatmul.mubr.bf16.gmra.mrb[0].mxu0 %v784
      %v931 = vpop.f32.mrb[0].mxu0
      %v932 = vadd.f32 0.0, %v931
      %v933 = vpop.f32.mrb[0].mxu0
      %v934 = vpop.f32.mrb[0].mxu0
      %v935 = vadd.f32 0.0, %v934
      %v936 = vpop.f32.mrb[0].mxu0
      %937 = vdwg.mxu0
      %v938 = vadd.f32 %v728, %v876
      %v939 = vadd.f32 %v729, %v879
      %v940 = vadd.f32 %v730, %v884
      %v941 = vadd.f32 %v731, %v887
      %v942 = vadd.f32 %v732, %v892
      %v943 = vadd.f32 %v733, %v895
      %v944 = vadd.f32 %v734, %v900
      %v945 = vadd.f32 %v735, %v903
      %v946 = vadd.f32 %v736, %v908
      %v947 = vadd.f32 %v737, %v911
      %v948 = vadd.f32 %v738, %v916
      %v949 = vadd.f32 %v739, %v919
      %v950 = vadd.f32 %v740, %v924
      %v951 = vadd.f32 %v741, %v927
      %v952 = vadd.f32 %v742, %v932
      %v953 = vadd.f32 %v743, %v935
      %954 = vst [vmem:[#allocation2] sm:$0xff] %v938
      %955 = vst [vmem:[#allocation2 + $0x8] sm:$0xff] %v939
      %956 = vst [vmem:[#allocation2 + $0x10] sm:$0xff] %v940
      %957 = vst [vmem:[#allocation2 + $0x18] sm:$0xff] %v941
      %958 = vst [vmem:[#allocation2 + $0x20] sm:$0xff] %v942
      %959 = vst [vmem:[#allocation2 + $0x28] sm:$0xff] %v943
      %960 = vst [vmem:[#allocation2 + $0x30] sm:$0xff] %v944
      %961 = vst [vmem:[#allocation2 + $0x38] sm:$0xff] %v945
      %962 = vst [vmem:[#allocation2 + $0x40] sm:$0xff] %v946
      %963 = vst [vmem:[#allocation2 + $0x48] sm:$0xff] %v947
      %964 = vst [vmem:[#allocation2 + $0x50] sm:$0xff] %v948
      %965 = vst [vmem:[#allocation2 + $0x58] sm:$0xff] %v949
      %966 = vst [vmem:[#allocation2 + $0x60] sm:$0xff] %v950
      %967 = vst [vmem:[#allocation2 + $0x68] sm:$0xff] %v951
      %968 = vst [vmem:[#allocation2 + $0x70] sm:$0xff] %v952
      %969 = vst [vmem:[#allocation2 + $0x78] sm:$0xff] %v953
      %v970 = vld [vmem:[%s235] sm:$0xe]
      %v971 = vld [vmem:[%s235 + $0x4] sm:$0xf]
      %v972 = vld [vmem:[%s235 + $0x8] sm:$0x1]
      %v973 = vld [vmem:[%s235 + $0xc] sm:$0xe]
      %v974 = vld [vmem:[%s235 + $0x10] sm:$0xf]
      %v975 = vld [vmem:[%s235 + $0x14] sm:$0x1]
      %v976 = vld [vmem:[%s235 + $0x18] sm:$0xe]
      %v977 = vld [vmem:[%s235 + $0x1c] sm:$0xf]
      %v978 = vld [vmem:[%s235 + $0x20] sm:$0x1]
      %v979 = vld [vmem:[%s235 + $0x24] sm:$0xe]
      %v980 = vld [vmem:[%s235 + $0x28] sm:$0xf]
      %v981 = vld [vmem:[%s235 + $0x2c] sm:$0x1]
      %v982 = vld [vmem:[%s235 + $0x30] sm:$0xe]
      %v983 = vld [vmem:[%s235 + $0x34] sm:$0xf]
      %v984 = vld [vmem:[%s235 + $0x38] sm:$0x1]
      %v985 = vld [vmem:[%s235 + $0x3c] sm:$0xe]
      %v986 = vld [vmem:[%s235 + $0x40] sm:$0xf]
      %v987 = vld [vmem:[%s235 + $0x44] sm:$0x1]
      %v988 = vld [vmem:[%s235 + $0x48] sm:$0xe]
      %v989 = vld [vmem:[%s235 + $0x4c] sm:$0xf]
      %v990 = vld [vmem:[%s235 + $0x50] sm:$0x1]
      %v991 = vld [vmem:[%s235 + $0x54] sm:$0xe]
      %v992 = vld [vmem:[%s235 + $0x58] sm:$0xf]
      %v993 = vld [vmem:[%s235 + $0x5c] sm:$0x1]
      %vm1018 = vcmask 1042432
      %vm1019 = vcmask 1046532
      %vm1020 = vmor %vm1018, %vm1019
      %v1021 = vrot.slane %v970, 5
      %v1022 = vrot.slane %v1021, 4
      %v1023 = vrot.slane %v971, 5
      %v1024 = vsel %vm1020, %v1022, %v1023
      %v1025 = vrot.slane %v1023, 4
      %v1026 = vrot.slane %v972, 5
      %v1027 = vsel %vm1020, %v1025, %v1026
      %v1028 = vrot.slane %v973, 5
      %v1029 = vrot.slane %v1028, 4
      %v1030 = vrot.slane %v974, 5
      %v1031 = vsel %vm1020, %v1029, %v1030
      %v1032 = vrot.slane %v1030, 4
      %v1033 = vrot.slane %v975, 5
      %v1034 = vsel %vm1020, %v1032, %v1033
      %v1035 = vrot.slane %v976, 5
      %v1036 = vrot.slane %v1035, 4
      %v1037 = vrot.slane %v977, 5
      %v1038 = vsel %vm1020, %v1036, %v1037
      %v1039 = vrot.slane %v1037, 4
      %v1040 = vrot.slane %v978, 5
      %v1041 = vsel %vm1020, %v1039, %v1040
      %v1042 = vrot.slane %v979, 5
      %v1043 = vrot.slane %v1042, 4
      %v1044 = vrot.slane %v980, 5
      %v1045 = vsel %vm1020, %v1043, %v1044
      %v1046 = vrot.slane %v1044, 4
      %v1047 = vrot.slane %v981, 5
      %v1048 = vsel %vm1020, %v1046, %v1047
      %v1049 = vrot.slane %v982, 5
      %v1050 = vrot.slane %v1049, 4
      %v1051 = vrot.slane %v983, 5
      %v1052 = vsel %vm1020, %v1050, %v1051
      %v1053 = vrot.slane %v1051, 4
      %v1054 = vrot.slane %v984, 5
      %v1055 = vsel %vm1020, %v1053, %v1054
      %v1056 = vrot.slane %v985, 5
      %v1057 = vrot.slane %v1056, 4
      %v1058 = vrot.slane %v986, 5
      %v1059 = vsel %vm1020, %v1057, %v1058
      %v1060 = vrot.slane %v1058, 4
      %v1061 = vrot.slane %v987, 5
      %v1062 = vsel %vm1020, %v1060, %v1061
      %v1063 = vrot.slane %v988, 5
      %v1064 = vrot.slane %v1063, 4
      %v1065 = vrot.slane %v989, 5
      %v1066 = vsel %vm1020, %v1064, %v1065
      %v1067 = vrot.slane %v1065, 4
      %v1068 = vrot.slane %v990, 5
      %v1069 = vsel %vm1020, %v1067, %v1068
      %v1070 = vrot.slane %v991, 5
      %v1071 = vrot.slane %v1070, 4
      %v1072 = vrot.slane %v992, 5
      %v1073 = vsel %vm1020, %v1071, %v1072
      %v1074 = vrot.slane %v1072, 4
      %v1075 = vrot.slane %v993, 5
      %v1076 = vsel %vm1020, %v1074, %v1075
      %v1077 = vld [vmem:[#allocation2] sm:$0xff]
      %v1078 = vld [vmem:[#allocation2 + $0x8] sm:$0xff]
      %v1079 = vld [vmem:[#allocation2 + $0x10] sm:$0xff]
      %v1080 = vld [vmem:[#allocation2 + $0x18] sm:$0xff]
      %v1081 = vld [vmem:[#allocation2 + $0x20] sm:$0xff]
      %v1082 = vld [vmem:[#allocation2 + $0x28] sm:$0xff]
      %v1083 = vld [vmem:[#allocation2 + $0x30] sm:$0xff]
      %v1084 = vld [vmem:[#allocation2 + $0x38] sm:$0xff]
      %v1085 = vld [vmem:[#allocation2 + $0x40] sm:$0xff]
      %v1086 = vld [vmem:[#allocation2 + $0x48] sm:$0xff]
      %v1087 = vld [vmem:[#allocation2 + $0x50] sm:$0xff]
      %v1088 = vld [vmem:[#allocation2 + $0x58] sm:$0xff]
      %v1089 = vld [vmem:[#allocation2 + $0x60] sm:$0xff]
      %v1090 = vld [vmem:[#allocation2 + $0x68] sm:$0xff]
      %v1091 = vld [vmem:[#allocation2 + $0x70] sm:$0xff]
      %v1092 = vld [vmem:[#allocation2 + $0x78] sm:$0xff]
      %s1093 = scalar_lea.vmem %s1, 128
      %v1094 = vld [vmem:[%s1093] sm:$0xf]
      %v1095 = vld [vmem:[%s1093 + $0x4] sm:$0xf]
      %v1096 = vld [vmem:[%s1093 + $0x8] sm:$0xf]
      %v1097 = vld [vmem:[%s1093 + $0xc] sm:$0xf]
      %v1098 = vld [vmem:[%s1093 + $0x10] sm:$0xf]
      %v1099 = vld [vmem:[%s1093 + $0x14] sm:$0xf]
      %v1100 = vld [vmem:[%s1093 + $0x18] sm:$0xf]
      %v1101 = vld [vmem:[%s1093 + $0x1c] sm:$0xf]
      %v1102 = vld [vmem:[%s1093 + $0x20] sm:$0xf]
      %v1103 = vld [vmem:[%s1093 + $0x24] sm:$0xf]
      %v1104 = vld [vmem:[%s1093 + $0x28] sm:$0xf]
      %v1105 = vld [vmem:[%s1093 + $0x2c] sm:$0xf]
      %v1106 = vld [vmem:[%s1093 + $0x30] sm:$0xf]
      %v1107 = vld [vmem:[%s1093 + $0x34] sm:$0xf]
      %v1108 = vld [vmem:[%s1093 + $0x38] sm:$0xf]
      %v1109 = vld [vmem:[%s1093 + $0x3c] sm:$0xf]
      %v1110 = vunpack.c.l.b16 %v1024
      %v1111 = vunpack.c.l.b16 %v1027
      %v1112 = vunpack.c.l.b16 %v1031
      %v1113 = vunpack.c.l.b16 %v1034
      %v1114 = vunpack.c.l.b16 %v1038
      %v1115 = vunpack.c.l.b16 %v1041
      %v1116 = vunpack.c.l.b16 %v1045
      %v1117 = vunpack.c.l.b16 %v1048
      %v1118 = vunpack.c.l.b16 %v1052
      %v1119 = vunpack.c.l.b16 %v1055
      %v1120 = vunpack.c.l.b16 %v1059
      %v1121 = vunpack.c.l.b16 %v1062
      %v1122 = vunpack.c.l.b16 %v1066
      %v1123 = vunpack.c.l.b16 %v1069
      %v1124 = vunpack.c.l.b16 %v1073
      %v1125 = vunpack.c.l.b16 %v1076
      %v1126 = vpack.c.b16 %v1111, %v1110
      %v1127 = vpack.c.b16 %v1113, %v1112
      %v1128 = vpack.c.b16 %v1115, %v1114
      %v1129 = vpack.c.b16 %v1117, %v1116
      %v1130 = vpack.c.b16 %v1119, %v1118
      %v1131 = vpack.c.b16 %v1121, %v1120
      %v1132 = vpack.c.b16 %v1123, %v1122
      %v1133 = vpack.c.b16 %v1125, %v1124
      %v1158 = vunpack.c.l.b16 %v1094
      %v1159 = vunpack.c.l.b16 %v1095
      %v1160 = vunpack.c.l.b16 %v1096
      %v1161 = vunpack.c.l.b16 %v1097
      %v1162 = vunpack.c.l.b16 %v1098
      %v1163 = vunpack.c.l.b16 %v1099
      %v1164 = vunpack.c.l.b16 %v1100
      %v1165 = vunpack.c.l.b16 %v1101
      %v1166 = vunpack.c.l.b16 %v1102
      %v1167 = vunpack.c.l.b16 %v1103
      %v1168 = vunpack.c.l.b16 %v1104
      %v1169 = vunpack.c.l.b16 %v1105
      %v1170 = vunpack.c.l.b16 %v1106
      %v1171 = vunpack.c.l.b16 %v1107
      %v1172 = vunpack.c.l.b16 %v1108
      %v1173 = vunpack.c.l.b16 %v1109
      %v1174 = vpack.c.b16 %v1159, %v1158
      %v1175 = vpack.c.b16 %v1161, %v1160
      %v1176 = vpack.c.b16 %v1163, %v1162
      %v1177 = vpack.c.b16 %v1165, %v1164
      %v1178 = vpack.c.b16 %v1167, %v1166
      %v1179 = vpack.c.b16 %v1169, %v1168
      %v1180 = vpack.c.b16 %v1171, %v1170
      %v1181 = vpack.c.b16 %v1173, %v1172
      %1190 = vmatprep.subr.bf16.mxu0 0
      %1191 = vmatpush1.bf16.msra.mxu0 %v1174
      %1192 = vmatprep.subr.bf16.mxu0 0
      %1193 = vmatpush1.bf16.msra.mxu0 %v1175
      %1194 = vmatprep.subr.bf16.mxu0 0
      %1195 = vmatpush1.bf16.msra.mxu0 %v1176
      %1196 = vmatprep.subr.bf16.mxu0 0
      %1197 = vmatpush1.bf16.msra.mxu0 %v1177
      %1198 = vmatprep.subr.bf16.mxu0 0
      %1199 = vmatpush1.bf16.msra.mxu0 %v1178
      %1200 = vmatprep.subr.bf16.mxu0 0
      %1201 = vmatpush1.bf16.msra.mxu0 %v1179
      %1202 = vmatprep.subr.bf16.mxu0 0
      %1203 = vmatpush1.bf16.msra.mxu0 %v1180
      %1204 = vmatprep.subr.bf16.mxu0 0
      %1205 = vmatpush1.bf16.msra.mxu0 %v1181
      %1206 = vmatprep.subr.bf16.mxu0 0
      %1207 = vmatpush1.bf16.msra.mxu0 0
      %1208 = vmatprep.subr.bf16.mxu0 0
      %1209 = vmatpush1.bf16.msra.mxu0 0
      %1210 = vmatprep.subr.bf16.mxu0 0
      %1211 = vmatpush1.bf16.msra.mxu0 0
      %1212 = vmatprep.subr.bf16.mxu0 0
      %1213 = vmatpush1.bf16.msra.mxu0 0
      %1214 = vmatprep.subr.bf16.mxu0 0
      %1215 = vmatpush1.bf16.msra.mxu0 0
      %1216 = vmatprep.subr.bf16.mxu0 0
      %1217 = vmatpush1.bf16.msra.mxu0 0
      %1218 = vmatprep.subr.bf16.mxu0 0
      %1219 = vmatpush1.bf16.msra.mxu0 0
      %1220 = vmatprep.subr.bf16.mxu0 0
      %1221 = vmatpush1.bf16.msra.mxu0 0
      %1222 = vmatprep.mubr.bf16.mxu0 0
      %1223 = vmatmul.mubr.bf16.gmra.mrb[0].mxu0 %v1126
      %v1224 = vpop.f32.mrb[0].mxu0
      %v1225 = vadd.f32 0.0, %v1224
      %v1226 = vpop.f32.mrb[0].mxu0
      %v1227 = vpop.f32.mrb[0].mxu0
      %v1228 = vadd.f32 0.0, %v1227
      %v1229 = vpop.f32.mrb[0].mxu0
      %1230 = vmatprep.mubr.bf16.mxu0 0
      %1231 = vmatmul.mubr.bf16.gmra.mrb[0].mxu0 %v1127
      %v1232 = vpop.f32.mrb[0].mxu0
      %v1233 = vadd.f32 0.0, %v1232
      %v1234 = vpop.f32.mrb[0].mxu0
      %v1235 = vpop.f32.mrb[0].mxu0
      %v1236 = vadd.f32 0.0, %v1235
      %v1237 = vpop.f32.mrb[0].mxu0
      %1238 = vmatprep.mubr.bf16.mxu0 0
      %1239 = vmatmul.mubr.bf16.gmra.mrb[0].mxu0 %v1128
      %v1240 = vpop.f32.mrb[0].mxu0
      %v1241 = vadd.f32 0.0, %v1240
      %v1242 = vpop.f32.mrb[0].mxu0
      %v1243 = vpop.f32.mrb[0].mxu0
      %v1244 = vadd.f32 0.0, %v1243
      %v1245 = vpop.f32.mrb[0].mxu0
      %1246 = vmatprep.mubr.bf16.mxu0 0
      %1247 = vmatmul.mubr.bf16.gmra.mrb[0].mxu0 %v1129
      %v1248 = vpop.f32.mrb[0].mxu0
      %v1249 = vadd.f32 0.0, %v1248
      %v1250 = vpop.f32.mrb[0].mxu0
      %v1251 = vpop.f32.mrb[0].mxu0
      %v1252 = vadd.f32 0.0, %v1251
      %v1253 = vpop.f32.mrb[0].mxu0
      %1254 = vmatprep.mubr.bf16.mxu0 0
      %1255 = vmatmul.mubr.bf16.gmra.mrb[0].mxu0 %v1130
      %v1256 = vpop.f32.mrb[0].mxu0
      %v1257 = vadd.f32 0.0, %v1256
      %v1258 = vpop.f32.mrb[0].mxu0
      %v1259 = vpop.f32.mrb[0].mxu0
      %v1260 = vadd.f32 0.0, %v1259
      %v1261 = vpop.f32.mrb[0].mxu0
      %1262 = vmatprep.mubr.bf16.mxu0 0
      %1263 = vmatmul.mubr.bf16.gmra.mrb[0].mxu0 %v1131
      %v1264 = vpop.f32.mrb[0].mxu0
      %v1265 = vadd.f32 0.0, %v1264
      %v1266 = vpop.f32.mrb[0].mxu0
      %v1267 = vpop.f32.mrb[0].mxu0
      %v1268 = vadd.f32 0.0, %v1267
      %v1269 = vpop.f32.mrb[0].mxu0
      %1270 = vmatprep.mubr.bf16.mxu0 0
      %1271 = vmatmul.mubr.bf16.gmra.mrb[0].mxu0 %v1132
      %v1272 = vpop.f32.mrb[0].mxu0
      %v1273 = vadd.f32 0.0, %v1272
      %v1274 = vpop.f32.mrb[0].mxu0
      %v1275 = vpop.f32.mrb[0].mxu0
      %v1276 = vadd.f32 0.0, %v1275
      %v1277 = vpop.f32.mrb[0].mxu0
      %1278 = vmatprep.mubr.bf16.mxu0 0
      %1279 = vmatmul.mubr.bf16.gmra.mrb[0].mxu0 %v1133
      %v1280 = vpop.f32.mrb[0].mxu0
      %v1281 = vadd.f32 0.0, %v1280
      %v1282 = vpop.f32.mrb[0].mxu0
      %v1283 = vpop.f32.mrb[0].mxu0
      %v1284 = vadd.f32 0.0, %v1283
      %v1285 = vpop.f32.mrb[0].mxu0
      %1286 = vdwg.mxu0
      %v1287 = vadd.f32 %v1077, %v1225
      %v1288 = vadd.f32 %v1078, %v1228
      %v1289 = vadd.f32 %v1079, %v1233
      %v1290 = vadd.f32 %v1080, %v1236
      %v1291 = vadd.f32 %v1081, %v1241
      %v1292 = vadd.f32 %v1082, %v1244
      %v1293 = vadd.f32 %v1083, %v1249
      %v1294 = vadd.f32 %v1084, %v1252
      %v1295 = vadd.f32 %v1085, %v1257
      %v1296 = vadd.f32 %v1086, %v1260
      %v1297 = vadd.f32 %v1087, %v1265
      %v1298 = vadd.f32 %v1088, %v1268
      %v1299 = vadd.f32 %v1089, %v1273
      %v1300 = vadd.f32 %v1090, %v1276
      %v1301 = vadd.f32 %v1091, %v1281
      %v1302 = vadd.f32 %v1092, %v1284
      %1303 = vst [vmem:[#allocation2] sm:$0xff] %v1287
      %1304 = vst [vmem:[#allocation2 + $0x8] sm:$0xff] %v1288
      %1305 = vst [vmem:[#allocation2 + $0x10] sm:$0xff] %v1289
      %1306 = vst [vmem:[#allocation2 + $0x18] sm:$0xff] %v1290
      %1307 = vst [vmem:[#allocation2 + $0x20] sm:$0xff] %v1291
      %1308 = vst [vmem:[#allocation2 + $0x28] sm:$0xff] %v1292
      %1309 = vst [vmem:[#allocation2 + $0x30] sm:$0xff] %v1293
      %1310 = vst [vmem:[#allocation2 + $0x38] sm:$0xff] %v1294
      %1311 = vst [vmem:[#allocation2 + $0x40] sm:$0xff] %v1295
      %1312 = vst [vmem:[#allocation2 + $0x48] sm:$0xff] %v1296
      %1313 = vst [vmem:[#allocation2 + $0x50] sm:$0xff] %v1297
      %1314 = vst [vmem:[#allocation2 + $0x58] sm:$0xff] %v1298
      %1315 = vst [vmem:[#allocation2 + $0x60] sm:$0xff] %v1299
      %1316 = vst [vmem:[#allocation2 + $0x68] sm:$0xff] %v1300
      %1317 = vst [vmem:[#allocation2 + $0x70] sm:$0xff] %v1301
      %1318 = vst [vmem:[#allocation2 + $0x78] sm:$0xff] %v1302
      %s1319 = sadd.s32 %s216, 1
      %s1320 = smul.u32 %s1319, 3
      %s1321 = smul.addr %s1320, 4
      %s1322 = scalar_lea.vmem %s196, %s1321
      %v1323 = vld [vmem:[%s1322] sm:$0xf]
      %v1324 = vld [vmem:[%s1322 + $0x4] sm:$0xf]
      %v1325 = vld [vmem:[%s1322 + $0xc] sm:$0xf]
      %v1326 = vld [vmem:[%s1322 + $0x10] sm:$0xf]
      %v1327 = vld [vmem:[%s1322 + $0x18] sm:$0xf]
      %v1328 = vld [vmem:[%s1322 + $0x1c] sm:$0xf]
      %v1329 = vld [vmem:[%s1322 + $0x24] sm:$0xf]
      %v1330 = vld [vmem:[%s1322 + $0x28] sm:$0xf]
      %v1331 = vld [vmem:[%s1322 + $0x30] sm:$0xf]
      %v1332 = vld [vmem:[%s1322 + $0x34] sm:$0xf]
      %v1333 = vld [vmem:[%s1322 + $0x3c] sm:$0xf]
      %v1334 = vld [vmem:[%s1322 + $0x40] sm:$0xf]
      %v1335 = vld [vmem:[%s1322 + $0x48] sm:$0xf]
      %v1336 = vld [vmem:[%s1322 + $0x4c] sm:$0xf]
      %v1337 = vld [vmem:[%s1322 + $0x54] sm:$0xf]
      %v1338 = vld [vmem:[%s1322 + $0x58] sm:$0xf]
      %v1339 = vld [vmem:[#allocation2] sm:$0xff]
      %v1340 = vld [vmem:[#allocation2 + $0x8] sm:$0xff]
      %v1341 = vld [vmem:[#allocation2 + $0x10] sm:$0xff]
      %v1342 = vld [vmem:[#allocation2 + $0x18] sm:$0xff]
      %v1343 = vld [vmem:[#allocation2 + $0x20] sm:$0xff]
      %v1344 = vld [vmem:[#allocation2 + $0x28] sm:$0xff]
      %v1345 = vld [vmem:[#allocation2 + $0x30] sm:$0xff]
      %v1346 = vld [vmem:[#allocation2 + $0x38] sm:$0xff]
      %v1347 = vld [vmem:[#allocation2 + $0x40] sm:$0xff]
      %v1348 = vld [vmem:[#allocation2 + $0x48] sm:$0xff]
      %v1349 = vld [vmem:[#allocation2 + $0x50] sm:$0xff]
      %v1350 = vld [vmem:[#allocation2 + $0x58] sm:$0xff]
      %v1351 = vld [vmem:[#allocation2 + $0x60] sm:$0xff]
      %v1352 = vld [vmem:[#allocation2 + $0x68] sm:$0xff]
      %v1353 = vld [vmem:[#allocation2 + $0x70] sm:$0xff]
      %v1354 = vld [vmem:[#allocation2 + $0x78] sm:$0xff]
      %s1355 = scalar_lea.vmem %s1, 192
      %v1356 = vld [vmem:[%s1355] sm:$0xf]
      %v1357 = vld [vmem:[%s1355 + $0x4] sm:$0xf]
      %v1358 = vld [vmem:[%s1355 + $0x8] sm:$0xf]
      %v1359 = vld [vmem:[%s1355 + $0xc] sm:$0xf]
      %v1360 = vld [vmem:[%s1355 + $0x10] sm:$0xf]
      %v1361 = vld [vmem:[%s1355 + $0x14] sm:$0xf]
      %v1362 = vld [vmem:[%s1355 + $0x18] sm:$0xf]
      %v1363 = vld [vmem:[%s1355 + $0x1c] sm:$0xf]
      %v1364 = vld [vmem:[%s1355 + $0x20] sm:$0xf]
      %v1365 = vld [vmem:[%s1355 + $0x24] sm:$0xf]
      %v1366 = vld [vmem:[%s1355 + $0x28] sm:$0xf]
      %v1367 = vld [vmem:[%s1355 + $0x2c] sm:$0xf]
      %v1368 = vld [vmem:[%s1355 + $0x30] sm:$0xf]
      %v1369 = vld [vmem:[%s1355 + $0x34] sm:$0xf]
      %v1370 = vld [vmem:[%s1355 + $0x38] sm:$0xf]
      %v1371 = vld [vmem:[%s1355 + $0x3c] sm:$0xf]
      %v1388 = vunpack.c.l.b16 %v1323
      %v1389 = vunpack.c.l.b16 %v1324
      %v1390 = vunpack.c.l.b16 %v1325
      %v1391 = vunpack.c.l.b16 %v1326
      %v1392 = vunpack.c.l.b16 %v1327
      %v1393 = vunpack.c.l.b16 %v1328
      %v1394 = vunpack.c.l.b16 %v1329
      %v1395 = vunpack.c.l.b16 %v1330
      %v1396 = vunpack.c.l.b16 %v1331
      %v1397 = vunpack.c.l.b16 %v1332
      %v1398 = vunpack.c.l.b16 %v1333
      %v1399 = vunpack.c.l.b16 %v1334
      %v1400 = vunpack.c.l.b16 %v1335
      %v1401 = vunpack.c.l.b16 %v1336
      %v1402 = vunpack.c.l.b16 %v1337
      %v1403 = vunpack.c.l.b16 %v1338
      %v1404 = vpack.c.b16 %v1389, %v1388
      %v1405 = vpack.c.b16 %v1391, %v1390
      %v1406 = vpack.c.b16 %v1393, %v1392
      %v1407 = vpack.c.b16 %v1395, %v1394
      %v1408 = vpack.c.b16 %v1397, %v1396
      %v1409 = vpack.c.b16 %v1399, %v1398
      %v1410 = vpack.c.b16 %v1401, %v1400
      %v1411 = vpack.c.b16 %v1403, %v1402
      %v1436 = vunpack.c.l.b16 %v1356
      %v1437 = vunpack.c.l.b16 %v1357
      %v1438 = vunpack.c.l.b16 %v1358
      %v1439 = vunpack.c.l.b16 %v1359
      %v1440 = vunpack.c.l.b16 %v1360
      %v1441 = vunpack.c.l.b16 %v1361
      %v1442 = vunpack.c.l.b16 %v1362
      %v1443 = vunpack.c.l.b16 %v1363
      %v1444 = vunpack.c.l.b16 %v1364
      %v1445 = vunpack.c.l.b16 %v1365
      %v1446 = vunpack.c.l.b16 %v1366
      %v1447 = vunpack.c.l.b16 %v1367
      %v1448 = vunpack.c.l.b16 %v1368
      %v1449 = vunpack.c.l.b16 %v1369
      %v1450 = vunpack.c.l.b16 %v1370
      %v1451 = vunpack.c.l.b16 %v1371
      %v1452 = vpack.c.b16 %v1437, %v1436
      %v1453 = vpack.c.b16 %v1439, %v1438
      %v1454 = vpack.c.b16 %v1441, %v1440
      %v1455 = vpack.c.b16 %v1443, %v1442
      %v1456 = vpack.c.b16 %v1445, %v1444
      %v1457 = vpack.c.b16 %v1447, %v1446
      %v1458 = vpack.c.b16 %v1449, %v1448
      %v1459 = vpack.c.b16 %v1451, %v1450
      %1468 = vmatprep.subr.bf16.mxu0 0
      %1469 = vmatpush1.bf16.msra.mxu0 %v1452
      %1470 = vmatprep.subr.bf16.mxu0 0
      %1471 = vmatpush1.bf16.msra.mxu0 %v1453
      %1472 = vmatprep.subr.bf16.mxu0 0
      %1473 = vmatpush1.bf16.msra.mxu0 %v1454
      %1474 = vmatprep.subr.bf16.mxu0 0
      %1475 = vmatpush1.bf16.msra.mxu0 %v1455
      %1476 = vmatprep.subr.bf16.mxu0 0
      %1477 = vmatpush1.bf16.msra.mxu0 %v1456
      %1478 = vmatprep.subr.bf16.mxu0 0
      %1479 = vmatpush1.bf16.msra.mxu0 %v1457
      %1480 = vmatprep.subr.bf16.mxu0 0
      %1481 = vmatpush1.bf16.msra.mxu0 %v1458
      %1482 = vmatprep.subr.bf16.mxu0 0
      %1483 = vmatpush1.bf16.msra.mxu0 %v1459
      %1484 = vmatprep.subr.bf16.mxu0 0
      %1485 = vmatpush1.bf16.msra.mxu0 0
      %1486 = vmatprep.subr.bf16.mxu0 0
      %1487 = vmatpush1.bf16.msra.mxu0 0
      %1488 = vmatprep.subr.bf16.mxu0 0
      %1489 = vmatpush1.bf16.msra.mxu0 0
      %1490 = vmatprep.subr.bf16.mxu0 0
      %1491 = vmatpush1.bf16.msra.mxu0 0
      %1492 = vmatprep.subr.bf16.mxu0 0
      %1493 = vmatpush1.bf16.msra.mxu0 0
      %1494 = vmatprep.subr.bf16.mxu0 0
      %1495 = vmatpush1.bf16.msra.mxu0 0
      %1496 = vmatprep.subr.bf16.mxu0 0
      %1497 = vmatpush1.bf16.msra.mxu0 0
      %1498 = vmatprep.subr.bf16.mxu0 0
      %1499 = vmatpush1.bf16.msra.mxu0 0
      %1500 = vmatprep.mubr.bf16.mxu0 0
      %1501 = vmatmul.mubr.bf16.gmra.mrb[0].mxu0 %v1404
      %v1502 = vpop.f32.mrb[0].mxu0
      %v1503 = vadd.f32 0.0, %v1502
      %v1504 = vpop.f32.mrb[0].mxu0
      %v1505 = vpop.f32.mrb[0].mxu0
      %v1506 = vadd.f32 0.0, %v1505
      %v1507 = vpop.f32.mrb[0].mxu0
      %1508 = vmatprep.mubr.bf16.mxu0 0
      %1509 = vmatmul.mubr.bf16.gmra.mrb[0].mxu0 %v1405
      %v1510 = vpop.f32.mrb[0].mxu0
      %v1511 = vadd.f32 0.0, %v1510
      %v1512 = vpop.f32.mrb[0].mxu0
      %v1513 = vpop.f32.mrb[0].mxu0
      %v1514 = vadd.f32 0.0, %v1513
      %v1515 = vpop.f32.mrb[0].mxu0
      %1516 = vmatprep.mubr.bf16.mxu0 0
      %1517 = vmatmul.mubr.bf16.gmra.mrb[0].mxu0 %v1406
      %v1518 = vpop.f32.mrb[0].mxu0
      %v1519 = vadd.f32 0.0, %v1518
      %v1520 = vpop.f32.mrb[0].mxu0
      %v1521 = vpop.f32.mrb[0].mxu0
      %v1522 = vadd.f32 0.0, %v1521
      %v1523 = vpop.f32.mrb[0].mxu0
      %1524 = vmatprep.mubr.bf16.mxu0 0
      %1525 = vmatmul.mubr.bf16.gmra.mrb[0].mxu0 %v1407
      %v1526 = vpop.f32.mrb[0].mxu0
      %v1527 = vadd.f32 0.0, %v1526
      %v1528 = vpop.f32.mrb[0].mxu0
      %v1529 = vpop.f32.mrb[0].mxu0
      %v1530 = vadd.f32 0.0, %v1529
      %v1531 = vpop.f32.mrb[0].mxu0
      %1532 = vmatprep.mubr.bf16.mxu0 0
      %1533 = vmatmul.mubr.bf16.gmra.mrb[0].mxu0 %v1408
      %v1534 = vpop.f32.mrb[0].mxu0
      %v1535 = vadd.f32 0.0, %v1534
      %v1536 = vpop.f32.mrb[0].mxu0
      %v1537 = vpop.f32.mrb[0].mxu0
      %v1538 = vadd.f32 0.0, %v1537
      %v1539 = vpop.f32.mrb[0].mxu0
      %1540 = vmatprep.mubr.bf16.mxu0 0
      %1541 = vmatmul.mubr.bf16.gmra.mrb[0].mxu0 %v1409
      %v1542 = vpop.f32.mrb[0].mxu0
      %v1543 = vadd.f32 0.0, %v1542
      %v1544 = vpop.f32.mrb[0].mxu0
      %v1545 = vpop.f32.mrb[0].mxu0
      %v1546 = vadd.f32 0.0, %v1545
      %v1547 = vpop.f32.mrb[0].mxu0
      %1548 = vmatprep.mubr.bf16.mxu0 0
      %1549 = vmatmul.mubr.bf16.gmra.mrb[0].mxu0 %v1410
      %v1550 = vpop.f32.mrb[0].mxu0
      %v1551 = vadd.f32 0.0, %v1550
      %v1552 = vpop.f32.mrb[0].mxu0
      %v1553 = vpop.f32.mrb[0].mxu0
      %v1554 = vadd.f32 0.0, %v1553
      %v1555 = vpop.f32.mrb[0].mxu0
      %1556 = vmatprep.mubr.bf16.mxu0 0
      %1557 = vmatmul.mubr.bf16.gmra.mrb[0].mxu0 %v1411
      %v1558 = vpop.f32.mrb[0].mxu0
      %v1559 = vadd.f32 0.0, %v1558
      %v1560 = vpop.f32.mrb[0].mxu0
      %v1561 = vpop.f32.mrb[0].mxu0
      %v1562 = vadd.f32 0.0, %v1561
      %v1563 = vpop.f32.mrb[0].mxu0
      %1564 = vdwg.mxu0
      %v1565 = vadd.f32 %v1339, %v1503
      %v1566 = vadd.f32 %v1340, %v1506
      %v1567 = vadd.f32 %v1341, %v1511
      %v1568 = vadd.f32 %v1342, %v1514
      %v1569 = vadd.f32 %v1343, %v1519
      %v1570 = vadd.f32 %v1344, %v1522
      %v1571 = vadd.f32 %v1345, %v1527
      %v1572 = vadd.f32 %v1346, %v1530
      %v1573 = vadd.f32 %v1347, %v1535
      %v1574 = vadd.f32 %v1348, %v1538
      %v1575 = vadd.f32 %v1349, %v1543
      %v1576 = vadd.f32 %v1350, %v1546
      %v1577 = vadd.f32 %v1351, %v1551
      %v1578 = vadd.f32 %v1352, %v1554
      %v1579 = vadd.f32 %v1353, %v1559
      %v1580 = vadd.f32 %v1354, %v1562
      %1581 = vst [vmem:[#allocation2] sm:$0xff] %v1565
      %1582 = vst [vmem:[#allocation2 + $0x8] sm:$0xff] %v1566
      %1583 = vst [vmem:[#allocation2 + $0x10] sm:$0xff] %v1567
      %1584 = vst [vmem:[#allocation2 + $0x18] sm:$0xff] %v1568
      %1585 = vst [vmem:[#allocation2 + $0x20] sm:$0xff] %v1569
      %1586 = vst [vmem:[#allocation2 + $0x28] sm:$0xff] %v1570
      %1587 = vst [vmem:[#allocation2 + $0x30] sm:$0xff] %v1571
      %1588 = vst [vmem:[#allocation2 + $0x38] sm:$0xff] %v1572
      %1589 = vst [vmem:[#allocation2 + $0x40] sm:$0xff] %v1573
      %1590 = vst [vmem:[#allocation2 + $0x48] sm:$0xff] %v1574
      %1591 = vst [vmem:[#allocation2 + $0x50] sm:$0xff] %v1575
      %1592 = vst [vmem:[#allocation2 + $0x58] sm:$0xff] %v1576
      %1593 = vst [vmem:[#allocation2 + $0x60] sm:$0xff] %v1577
      %1594 = vst [vmem:[#allocation2 + $0x68] sm:$0xff] %v1578
      %1595 = vst [vmem:[#allocation2 + $0x70] sm:$0xff] %v1579
      %1596 = vst [vmem:[#allocation2 + $0x78] sm:$0xff] %v1580
      %v1597 = vld [vmem:[%s1322] sm:$0xf]
      %v1598 = vld [vmem:[%s1322 + $0x4] sm:$0xf]
      %v1599 = vld [vmem:[%s1322 + $0x8] sm:$0x1]
      %v1600 = vld [vmem:[%s1322 + $0xc] sm:$0xf]
      %v1601 = vld [vmem:[%s1322 + $0x10] sm:$0xf]
      %v1602 = vld [vmem:[%s1322 + $0x14] sm:$0x1]
      %v1603 = vld [vmem:[%s1322 + $0x18] sm:$0xf]
      %v1604 = vld [vmem:[%s1322 + $0x1c] sm:$0xf]
      %v1605 = vld [vmem:[%s1322 + $0x20] sm:$0x1]
      %v1606 = vld [vmem:[%s1322 + $0x24] sm:$0xf]
      %v1607 = vld [vmem:[%s1322 + $0x28] sm:$0xf]
      %v1608 = vld [vmem:[%s1322 + $0x2c] sm:$0x1]
      %v1609 = vld [vmem:[%s1322 + $0x30] sm:$0xf]
      %v1610 = vld [vmem:[%s1322 + $0x34] sm:$0xf]
      %v1611 = vld [vmem:[%s1322 + $0x38] sm:$0x1]
      %v1612 = vld [vmem:[%s1322 + $0x3c] sm:$0xf]
      %v1613 = vld [vmem:[%s1322 + $0x40] sm:$0xf]
      %v1614 = vld [vmem:[%s1322 + $0x44] sm:$0x1]
      %v1615 = vld [vmem:[%s1322 + $0x48] sm:$0xf]
      %v1616 = vld [vmem:[%s1322 + $0x4c] sm:$0xf]
      %v1617 = vld [vmem:[%s1322 + $0x50] sm:$0x1]
      %v1618 = vld [vmem:[%s1322 + $0x54] sm:$0xf]
      %v1619 = vld [vmem:[%s1322 + $0x58] sm:$0xf]
      %v1620 = vld [vmem:[%s1322 + $0x5c] sm:$0x1]
      %v1622 = vshrl.u32 %v1597, 16
      %v1624 = vrot.slane %v1622, 4
      %v1625 = vshll.u32 %v1597, 16
      %v1627 = vrot.slane %v1625, 5
      %v1628 = vor.u32 %v1624, %v1627
      %v1629 = vrot.slane %v1628, 4
      %v1631 = vshll.u32 %v1598, 16
      %v1633 = vrot.slane %v1631, 5
      %v1634 = vsel %vm535, %v1629, %v1633
      %v1635 = vshrl.u32 %v1598, 16
      %v1637 = vrot.slane %v1635, 4
      %v1638 = vor.u32 %v1637, %v1633
      %v1639 = vrot.slane %v1638, 4
      %v1641 = vshll.u32 %v1599, 16
      %v1643 = vrot.slane %v1641, 5
      %v1644 = vsel %vm535, %v1639, %v1643
      %v1646 = vshrl.u32 %v1600, 16
      %v1648 = vrot.slane %v1646, 4
      %v1649 = vshll.u32 %v1600, 16
      %v1651 = vrot.slane %v1649, 5
      %v1652 = vor.u32 %v1648, %v1651
      %v1653 = vrot.slane %v1652, 4
      %v1655 = vshll.u32 %v1601, 16
      %v1657 = vrot.slane %v1655, 5
      %v1658 = vsel %vm535, %v1653, %v1657
      %v1659 = vshrl.u32 %v1601, 16
      %v1661 = vrot.slane %v1659, 4
      %v1662 = vor.u32 %v1661, %v1657
      %v1663 = vrot.slane %v1662, 4
      %v1665 = vshll.u32 %v1602, 16
      %v1667 = vrot.slane %v1665, 5
      %v1668 = vsel %vm535, %v1663, %v1667
      %v1670 = vshrl.u32 %v1603, 16
      %v1672 = vrot.slane %v1670, 4
      %v1673 = vshll.u32 %v1603, 16
      %v1675 = vrot.slane %v1673, 5
      %v1676 = vor.u32 %v1672, %v1675
      %v1677 = vrot.slane %v1676, 4
      %v1679 = vshll.u32 %v1604, 16
      %v1681 = vrot.slane %v1679, 5
      %v1682 = vsel %vm535, %v1677, %v1681
      %v1683 = vshrl.u32 %v1604, 16
      %v1685 = vrot.slane %v1683, 4
      %v1686 = vor.u32 %v1685, %v1681
      %v1687 = vrot.slane %v1686, 4
      %v1689 = vshll.u32 %v1605, 16
      %v1691 = vrot.slane %v1689, 5
      %v1692 = vsel %vm535, %v1687, %v1691
      %v1694 = vshrl.u32 %v1606, 16
      %v1696 = vrot.slane %v1694, 4
      %v1697 = vshll.u32 %v1606, 16
      %v1699 = vrot.slane %v1697, 5
      %v1700 = vor.u32 %v1696, %v1699
      %v1701 = vrot.slane %v1700, 4
      %v1703 = vshll.u32 %v1607, 16
      %v1705 = vrot.slane %v1703, 5
      %v1706 = vsel %vm535, %v1701, %v1705
      %v1707 = vshrl.u32 %v1607, 16
      %v1709 = vrot.slane %v1707, 4
      %v1710 = vor.u32 %v1709, %v1705
      %v1711 = vrot.slane %v1710, 4
      %v1713 = vshll.u32 %v1608, 16
      %v1715 = vrot.slane %v1713, 5
      %v1716 = vsel %vm535, %v1711, %v1715
      %v1718 = vshrl.u32 %v1609, 16
      %v1720 = vrot.slane %v1718, 4
      %v1721 = vshll.u32 %v1609, 16
      %v1723 = vrot.slane %v1721, 5
      %v1724 = vor.u32 %v1720, %v1723
      %v1725 = vrot.slane %v1724, 4
      %v1727 = vshll.u32 %v1610, 16
      %v1729 = vrot.slane %v1727, 5
      %v1730 = vsel %vm535, %v1725, %v1729
      %v1731 = vshrl.u32 %v1610, 16
      %v1733 = vrot.slane %v1731, 4
      %v1734 = vor.u32 %v1733, %v1729
      %v1735 = vrot.slane %v1734, 4
      %v1737 = vshll.u32 %v1611, 16
      %v1739 = vrot.slane %v1737, 5
      %v1740 = vsel %vm535, %v1735, %v1739
      %v1742 = vshrl.u32 %v1612, 16
      %v1744 = vrot.slane %v1742, 4
      %v1745 = vshll.u32 %v1612, 16
      %v1747 = vrot.slane %v1745, 5
      %v1748 = vor.u32 %v1744, %v1747
      %v1749 = vrot.slane %v1748, 4
      %v1751 = vshll.u32 %v1613, 16
      %v1753 = vrot.slane %v1751, 5
      %v1754 = vsel %vm535, %v1749, %v1753
      %v1755 = vshrl.u32 %v1613, 16
      %v1757 = vrot.slane %v1755, 4
      %v1758 = vor.u32 %v1757, %v1753
      %v1759 = vrot.slane %v1758, 4
      %v1761 = vshll.u32 %v1614, 16
      %v1763 = vrot.slane %v1761, 5
      %v1764 = vsel %vm535, %v1759, %v1763
      %v1766 = vshrl.u32 %v1615, 16
      %v1768 = vrot.slane %v1766, 4
      %v1769 = vshll.u32 %v1615, 16
      %v1771 = vrot.slane %v1769, 5
      %v1772 = vor.u32 %v1768, %v1771
      %v1773 = vrot.slane %v1772, 4
      %v1775 = vshll.u32 %v1616, 16
      %v1777 = vrot.slane %v1775, 5
      %v1778 = vsel %vm535, %v1773, %v1777
      %v1779 = vshrl.u32 %v1616, 16
      %v1781 = vrot.slane %v1779, 4
      %v1782 = vor.u32 %v1781, %v1777
      %v1783 = vrot.slane %v1782, 4
      %v1785 = vshll.u32 %v1617, 16
      %v1787 = vrot.slane %v1785, 5
      %v1788 = vsel %vm535, %v1783, %v1787
      %v1790 = vshrl.u32 %v1618, 16
      %v1792 = vrot.slane %v1790, 4
      %v1793 = vshll.u32 %v1618, 16
      %v1795 = vrot.slane %v1793, 5
      %v1796 = vor.u32 %v1792, %v1795
      %v1797 = vrot.slane %v1796, 4
      %v1799 = vshll.u32 %v1619, 16
      %v1801 = vrot.slane %v1799, 5
      %v1802 = vsel %vm535, %v1797, %v1801
      %v1803 = vshrl.u32 %v1619, 16
      %v1805 = vrot.slane %v1803, 4
      %v1806 = vor.u32 %v1805, %v1801
      %v1807 = vrot.slane %v1806, 4
      %v1809 = vshll.u32 %v1620, 16
      %v1811 = vrot.slane %v1809, 5
      %v1812 = vsel %vm535, %v1807, %v1811
      %v1813 = vld [vmem:[#allocation2] sm:$0xff]
      %v1814 = vld [vmem:[#allocation2 + $0x8] sm:$0xff]
      %v1815 = vld [vmem:[#allocation2 + $0x10] sm:$0xff]
      %v1816 = vld [vmem:[#allocation2 + $0x18] sm:$0xff]
      %v1817 = vld [vmem:[#allocation2 + $0x20] sm:$0xff]
      %v1818 = vld [vmem:[#allocation2 + $0x28] sm:$0xff]
      %v1819 = vld [vmem:[#allocation2 + $0x30] sm:$0xff]
      %v1820 = vld [vmem:[#allocation2 + $0x38] sm:$0xff]
      %v1821 = vld [vmem:[#allocation2 + $0x40] sm:$0xff]
      %v1822 = vld [vmem:[#allocation2 + $0x48] sm:$0xff]
      %v1823 = vld [vmem:[#allocation2 + $0x50] sm:$0xff]
      %v1824 = vld [vmem:[#allocation2 + $0x58] sm:$0xff]
      %v1825 = vld [vmem:[#allocation2 + $0x60] sm:$0xff]
      %v1826 = vld [vmem:[#allocation2 + $0x68] sm:$0xff]
      %v1827 = vld [vmem:[#allocation2 + $0x70] sm:$0xff]
      %v1828 = vld [vmem:[#allocation2 + $0x78] sm:$0xff]
      %s1829 = scalar_lea.vmem %s1, 256
      %v1830 = vld [vmem:[%s1829] sm:$0xf]
      %v1831 = vld [vmem:[%s1829 + $0x4] sm:$0xf]
      %v1832 = vld [vmem:[%s1829 + $0x8] sm:$0xf]
      %v1833 = vld [vmem:[%s1829 + $0xc] sm:$0xf]
      %v1834 = vld [vmem:[%s1829 + $0x10] sm:$0xf]
      %v1835 = vld [vmem:[%s1829 + $0x14] sm:$0xf]
      %v1836 = vld [vmem:[%s1829 + $0x18] sm:$0xf]
      %v1837 = vld [vmem:[%s1829 + $0x1c] sm:$0xf]
      %v1838 = vld [vmem:[%s1829 + $0x20] sm:$0xf]
      %v1839 = vld [vmem:[%s1829 + $0x24] sm:$0xf]
      %v1840 = vld [vmem:[%s1829 + $0x28] sm:$0xf]
      %v1841 = vld [vmem:[%s1829 + $0x2c] sm:$0xf]
      %v1842 = vld [vmem:[%s1829 + $0x30] sm:$0xf]
      %v1843 = vld [vmem:[%s1829 + $0x34] sm:$0xf]
      %v1844 = vld [vmem:[%s1829 + $0x38] sm:$0xf]
      %v1845 = vld [vmem:[%s1829 + $0x3c] sm:$0xf]
      %v1846 = vunpack.c.l.b16 %v1634
      %v1847 = vunpack.c.l.b16 %v1644
      %v1848 = vunpack.c.l.b16 %v1658
      %v1849 = vunpack.c.l.b16 %v1668
      %v1850 = vunpack.c.l.b16 %v1682
      %v1851 = vunpack.c.l.b16 %v1692
      %v1852 = vunpack.c.l.b16 %v1706
      %v1853 = vunpack.c.l.b16 %v1716
      %v1854 = vunpack.c.l.b16 %v1730
      %v1855 = vunpack.c.l.b16 %v1740
      %v1856 = vunpack.c.l.b16 %v1754
      %v1857 = vunpack.c.l.b16 %v1764
      %v1858 = vunpack.c.l.b16 %v1778
      %v1859 = vunpack.c.l.b16 %v1788
      %v1860 = vunpack.c.l.b16 %v1802
      %v1861 = vunpack.c.l.b16 %v1812
      %v1862 = vpack.c.b16 %v1847, %v1846
      %v1863 = vpack.c.b16 %v1849, %v1848
      %v1864 = vpack.c.b16 %v1851, %v1850
      %v1865 = vpack.c.b16 %v1853, %v1852
      %v1866 = vpack.c.b16 %v1855, %v1854
      %v1867 = vpack.c.b16 %v1857, %v1856
      %v1868 = vpack.c.b16 %v1859, %v1858
      %v1869 = vpack.c.b16 %v1861, %v1860
      %v1894 = vunpack.c.l.b16 %v1830
      %v1895 = vunpack.c.l.b16 %v1831
      %v1896 = vunpack.c.l.b16 %v1832
      %v1897 = vunpack.c.l.b16 %v1833
      %v1898 = vunpack.c.l.b16 %v1834
      %v1899 = vunpack.c.l.b16 %v1835
      %v1900 = vunpack.c.l.b16 %v1836
      %v1901 = vunpack.c.l.b16 %v1837
      %v1902 = vunpack.c.l.b16 %v1838
      %v1903 = vunpack.c.l.b16 %v1839
      %v1904 = vunpack.c.l.b16 %v1840
      %v1905 = vunpack.c.l.b16 %v1841
      %v1906 = vunpack.c.l.b16 %v1842
      %v1907 = vunpack.c.l.b16 %v1843
      %v1908 = vunpack.c.l.b16 %v1844
      %v1909 = vunpack.c.l.b16 %v1845
      %v1910 = vpack.c.b16 %v1895, %v1894
      %v1911 = vpack.c.b16 %v1897, %v1896
      %v1912 = vpack.c.b16 %v1899, %v1898
      %v1913 = vpack.c.b16 %v1901, %v1900
      %v1914 = vpack.c.b16 %v1903, %v1902
      %v1915 = vpack.c.b16 %v1905, %v1904
      %v1916 = vpack.c.b16 %v1907, %v1906
      %v1917 = vpack.c.b16 %v1909, %v1908
      %1926 = vmatprep.subr.bf16.mxu0 0
      %1927 = vmatpush1.bf16.msra.mxu0 %v1910
      %1928 = vmatprep.subr.bf16.mxu0 0
      %1929 = vmatpush1.bf16.msra.mxu0 %v1911
      %1930 = vmatprep.subr.bf16.mxu0 0
      %1931 = vmatpush1.bf16.msra.mxu0 %v1912
      %1932 = vmatprep.subr.bf16.mxu0 0
      %1933 = vmatpush1.bf16.msra.mxu0 %v1913
      %1934 = vmatprep.subr.bf16.mxu0 0
      %1935 = vmatpush1.bf16.msra.mxu0 %v1914
      %1936 = vmatprep.subr.bf16.mxu0 0
      %1937 = vmatpush1.bf16.msra.mxu0 %v1915
      %1938 = vmatprep.subr.bf16.mxu0 0
      %1939 = vmatpush1.bf16.msra.mxu0 %v1916
      %1940 = vmatprep.subr.bf16.mxu0 0
      %1941 = vmatpush1.bf16.msra.mxu0 %v1917
      %1942 = vmatprep.subr.bf16.mxu0 0
      %1943 = vmatpush1.bf16.msra.mxu0 0
      %1944 = vmatprep.subr.bf16.mxu0 0
      %1945 = vmatpush1.bf16.msra.mxu0 0
      %1946 = vmatprep.subr.bf16.mxu0 0
      %1947 = vmatpush1.bf16.msra.mxu0 0
      %1948 = vmatprep.subr.bf16.mxu0 0
      %1949 = vmatpush1.bf16.msra.mxu0 0
      %1950 = vmatprep.subr.bf16.mxu0 0
      %1951 = vmatpush1.bf16.msra.mxu0 0
      %1952 = vmatprep.subr.bf16.mxu0 0
      %1953 = vmatpush1.bf16.msra.mxu0 0
      %1954 = vmatprep.subr.bf16.mxu0 0
      %1955 = vmatpush1.bf16.msra.mxu0 0
      %1956 = vmatprep.subr.bf16.mxu0 0
      %1957 = vmatpush1.bf16.msra.mxu0 0
      %1958 = vmatprep.mubr.bf16.mxu0 0
      %1959 = vmatmul.mubr.bf16.gmra.mrb[0].mxu0 %v1862
      %v1960 = vpop.f32.mrb[0].mxu0
      %v1961 = vadd.f32 0.0, %v1960
      %v1962 = vpop.f32.mrb[0].mxu0
      %v1963 = vpop.f32.mrb[0].mxu0
      %v1964 = vadd.f32 0.0, %v1963
      %v1965 = vpop.f32.mrb[0].mxu0
      %1966 = vmatprep.mubr.bf16.mxu0 0
      %1967 = vmatmul.mubr.bf16.gmra.mrb[0].mxu0 %v1863
      %v1968 = vpop.f32.mrb[0].mxu0
      %v1969 = vadd.f32 0.0, %v1968
      %v1970 = vpop.f32.mrb[0].mxu0
      %v1971 = vpop.f32.mrb[0].mxu0
      %v1972 = vadd.f32 0.0, %v1971
      %v1973 = vpop.f32.mrb[0].mxu0
      %1974 = vmatprep.mubr.bf16.mxu0 0
      %1975 = vmatmul.mubr.bf16.gmra.mrb[0].mxu0 %v1864
      %v1976 = vpop.f32.mrb[0].mxu0
      %v1977 = vadd.f32 0.0, %v1976
      %v1978 = vpop.f32.mrb[0].mxu0
      %v1979 = vpop.f32.mrb[0].mxu0
      %v1980 = vadd.f32 0.0, %v1979
      %v1981 = vpop.f32.mrb[0].mxu0
      %1982 = vmatprep.mubr.bf16.mxu0 0
      %1983 = vmatmul.mubr.bf16.gmra.mrb[0].mxu0 %v1865
      %v1984 = vpop.f32.mrb[0].mxu0
      %v1985 = vadd.f32 0.0, %v1984
      %v1986 = vpop.f32.mrb[0].mxu0
      %v1987 = vpop.f32.mrb[0].mxu0
      %v1988 = vadd.f32 0.0, %v1987
      %v1989 = vpop.f32.mrb[0].mxu0
      %1990 = vmatprep.mubr.bf16.mxu0 0
      %1991 = vmatmul.mubr.bf16.gmra.mrb[0].mxu0 %v1866
      %v1992 = vpop.f32.mrb[0].mxu0
      %v1993 = vadd.f32 0.0, %v1992
      %v1994 = vpop.f32.mrb[0].mxu0
      %v1995 = vpop.f32.mrb[0].mxu0
      %v1996 = vadd.f32 0.0, %v1995
      %v1997 = vpop.f32.mrb[0].mxu0
      %1998 = vmatprep.mubr.bf16.mxu0 0
      %1999 = vmatmul.mubr.bf16.gmra.mrb[0].mxu0 %v1867
      %v2000 = vpop.f32.mrb[0].mxu0
      %v2001 = vadd.f32 0.0, %v2000
      %v2002 = vpop.f32.mrb[0].mxu0
      %v2003 = vpop.f32.mrb[0].mxu0
      %v2004 = vadd.f32 0.0, %v2003
      %v2005 = vpop.f32.mrb[0].mxu0
      %2006 = vmatprep.mubr.bf16.mxu0 0
      %2007 = vmatmul.mubr.bf16.gmra.mrb[0].mxu0 %v1868
      %v2008 = vpop.f32.mrb[0].mxu0
      %v2009 = vadd.f32 0.0, %v2008
      %v2010 = vpop.f32.mrb[0].mxu0
      %v2011 = vpop.f32.mrb[0].mxu0
      %v2012 = vadd.f32 0.0, %v2011
      %v2013 = vpop.f32.mrb[0].mxu0
      %2014 = vmatprep.mubr.bf16.mxu0 0
      %2015 = vmatmul.mubr.bf16.gmra.mrb[0].mxu0 %v1869
      %v2016 = vpop.f32.mrb[0].mxu0
      %v2017 = vadd.f32 0.0, %v2016
      %v2018 = vpop.f32.mrb[0].mxu0
      %v2019 = vpop.f32.mrb[0].mxu0
      %v2020 = vadd.f32 0.0, %v2019
      %v2021 = vpop.f32.mrb[0].mxu0
      %2022 = vdwg.mxu0
      %v2023 = vadd.f32 %v1813, %v1961
      %v2024 = vadd.f32 %v1814, %v1964
      %v2025 = vadd.f32 %v1815, %v1969
      %v2026 = vadd.f32 %v1816, %v1972
      %v2027 = vadd.f32 %v1817, %v1977
      %v2028 = vadd.f32 %v1818, %v1980
      %v2029 = vadd.f32 %v1819, %v1985
      %v2030 = vadd.f32 %v1820, %v1988
      %v2031 = vadd.f32 %v1821, %v1993
      %v2032 = vadd.f32 %v1822, %v1996
      %v2033 = vadd.f32 %v1823, %v2001
      %v2034 = vadd.f32 %v1824, %v2004
      %v2035 = vadd.f32 %v1825, %v2009
      %v2036 = vadd.f32 %v1826, %v2012
      %v2037 = vadd.f32 %v1827, %v2017
      %v2038 = vadd.f32 %v1828, %v2020
      %2039 = vst [vmem:[#allocation2] sm:$0xff] %v2023
      %2040 = vst [vmem:[#allocation2 + $0x8] sm:$0xff] %v2024
      %2041 = vst [vmem:[#allocation2 + $0x10] sm:$0xff] %v2025
      %2042 = vst [vmem:[#allocation2 + $0x18] sm:$0xff] %v2026
      %2043 = vst [vmem:[#allocation2 + $0x20] sm:$0xff] %v2027
      %2044 = vst [vmem:[#allocation2 + $0x28] sm:$0xff] %v2028
      %2045 = vst [vmem:[#allocation2 + $0x30] sm:$0xff] %v2029
      %2046 = vst [vmem:[#allocation2 + $0x38] sm:$0xff] %v2030
      %2047 = vst [vmem:[#allocation2 + $0x40] sm:$0xff] %v2031
      %2048 = vst [vmem:[#allocation2 + $0x48] sm:$0xff] %v2032
      %2049 = vst [vmem:[#allocation2 + $0x50] sm:$0xff] %v2033
      %2050 = vst [vmem:[#allocation2 + $0x58] sm:$0xff] %v2034
      %2051 = vst [vmem:[#allocation2 + $0x60] sm:$0xff] %v2035
      %2052 = vst [vmem:[#allocation2 + $0x68] sm:$0xff] %v2036
      %2053 = vst [vmem:[#allocation2 + $0x70] sm:$0xff] %v2037
      %2054 = vst [vmem:[#allocation2 + $0x78] sm:$0xff] %v2038
      %v2055 = vld [vmem:[%s1322] sm:$0xe]
      %v2056 = vld [vmem:[%s1322 + $0x4] sm:$0xf]
      %v2057 = vld [vmem:[%s1322 + $0x8] sm:$0x1]
      %v2058 = vld [vmem:[%s1322 + $0xc] sm:$0xe]
      %v2059 = vld [vmem:[%s1322 + $0x10] sm:$0xf]
      %v2060 = vld [vmem:[%s1322 + $0x14] sm:$0x1]
      %v2061 = vld [vmem:[%s1322 + $0x18] sm:$0xe]
      %v2062 = vld [vmem:[%s1322 + $0x1c] sm:$0xf]
      %v2063 = vld [vmem:[%s1322 + $0x20] sm:$0x1]
      %v2064 = vld [vmem:[%s1322 + $0x24] sm:$0xe]
      %v2065 = vld [vmem:[%s1322 + $0x28] sm:$0xf]
      %v2066 = vld [vmem:[%s1322 + $0x2c] sm:$0x1]
      %v2067 = vld [vmem:[%s1322 + $0x30] sm:$0xe]
      %v2068 = vld [vmem:[%s1322 + $0x34] sm:$0xf]
      %v2069 = vld [vmem:[%s1322 + $0x38] sm:$0x1]
      %v2070 = vld [vmem:[%s1322 + $0x3c] sm:$0xe]
      %v2071 = vld [vmem:[%s1322 + $0x40] sm:$0xf]
      %v2072 = vld [vmem:[%s1322 + $0x44] sm:$0x1]
      %v2073 = vld [vmem:[%s1322 + $0x48] sm:$0xe]
      %v2074 = vld [vmem:[%s1322 + $0x4c] sm:$0xf]
      %v2075 = vld [vmem:[%s1322 + $0x50] sm:$0x1]
      %v2076 = vld [vmem:[%s1322 + $0x54] sm:$0xe]
      %v2077 = vld [vmem:[%s1322 + $0x58] sm:$0xf]
      %v2078 = vld [vmem:[%s1322 + $0x5c] sm:$0x1]
      %v2103 = vrot.slane %v2055, 5
      %v2104 = vrot.slane %v2103, 4
      %v2105 = vrot.slane %v2056, 5
      %v2106 = vsel %vm1020, %v2104, %v2105
      %v2107 = vrot.slane %v2105, 4
      %v2108 = vrot.slane %v2057, 5
      %v2109 = vsel %vm1020, %v2107, %v2108
      %v2110 = vrot.slane %v2058, 5
      %v2111 = vrot.slane %v2110, 4
      %v2112 = vrot.slane %v2059, 5
      %v2113 = vsel %vm1020, %v2111, %v2112
      %v2114 = vrot.slane %v2112, 4
      %v2115 = vrot.slane %v2060, 5
      %v2116 = vsel %vm1020, %v2114, %v2115
      %v2117 = vrot.slane %v2061, 5
      %v2118 = vrot.slane %v2117, 4
      %v2119 = vrot.slane %v2062, 5
      %v2120 = vsel %vm1020, %v2118, %v2119
      %v2121 = vrot.slane %v2119, 4
      %v2122 = vrot.slane %v2063, 5
      %v2123 = vsel %vm1020, %v2121, %v2122
      %v2124 = vrot.slane %v2064, 5
      %v2125 = vrot.slane %v2124, 4
      %v2126 = vrot.slane %v2065, 5
      %v2127 = vsel %vm1020, %v2125, %v2126
      %v2128 = vrot.slane %v2126, 4
      %v2129 = vrot.slane %v2066, 5
      %v2130 = vsel %vm1020, %v2128, %v2129
      %v2131 = vrot.slane %v2067, 5
      %v2132 = vrot.slane %v2131, 4
      %v2133 = vrot.slane %v2068, 5
      %v2134 = vsel %vm1020, %v2132, %v2133
      %v2135 = vrot.slane %v2133, 4
      %v2136 = vrot.slane %v2069, 5
      %v2137 = vsel %vm1020, %v2135, %v2136
      %v2138 = vrot.slane %v2070, 5
      %v2139 = vrot.slane %v2138, 4
      %v2140 = vrot.slane %v2071, 5
      %v2141 = vsel %vm1020, %v2139, %v2140
      %v2142 = vrot.slane %v2140, 4
      %v2143 = vrot.slane %v2072, 5
      %v2144 = vsel %vm1020, %v2142, %v2143
      %v2145 = vrot.slane %v2073, 5
      %v2146 = vrot.slane %v2145, 4
      %v2147 = vrot.slane %v2074, 5
      %v2148 = vsel %vm1020, %v2146, %v2147
      %v2149 = vrot.slane %v2147, 4
      %v2150 = vrot.slane %v2075, 5
      %v2151 = vsel %vm1020, %v2149, %v2150
      %v2152 = vrot.slane %v2076, 5
      %v2153 = vrot.slane %v2152, 4
      %v2154 = vrot.slane %v2077, 5
      %v2155 = vsel %vm1020, %v2153, %v2154
      %v2156 = vrot.slane %v2154, 4
      %v2157 = vrot.slane %v2078, 5
      %v2158 = vsel %vm1020, %v2156, %v2157
      %v2159 = vld [vmem:[#allocation2] sm:$0xff]
      %v2160 = vld [vmem:[#allocation2 + $0x8] sm:$0xff]
      %v2161 = vld [vmem:[#allocation2 + $0x10] sm:$0xff]
      %v2162 = vld [vmem:[#allocation2 + $0x18] sm:$0xff]
      %v2163 = vld [vmem:[#allocation2 + $0x20] sm:$0xff]
      %v2164 = vld [vmem:[#allocation2 + $0x28] sm:$0xff]
      %v2165 = vld [vmem:[#allocation2 + $0x30] sm:$0xff]
      %v2166 = vld [vmem:[#allocation2 + $0x38] sm:$0xff]
      %v2167 = vld [vmem:[#allocation2 + $0x40] sm:$0xff]
      %v2168 = vld [vmem:[#allocation2 + $0x48] sm:$0xff]
      %v2169 = vld [vmem:[#allocation2 + $0x50] sm:$0xff]
      %v2170 = vld [vmem:[#allocation2 + $0x58] sm:$0xff]
      %v2171 = vld [vmem:[#allocation2 + $0x60] sm:$0xff]
      %v2172 = vld [vmem:[#allocation2 + $0x68] sm:$0xff]
      %v2173 = vld [vmem:[#allocation2 + $0x70] sm:$0xff]
      %v2174 = vld [vmem:[#allocation2 + $0x78] sm:$0xff]
      %s2175 = scalar_lea.vmem %s1, 320
      %v2176 = vld [vmem:[%s2175] sm:$0xf]
      %v2177 = vld [vmem:[%s2175 + $0x4] sm:$0xf]
      %v2178 = vld [vmem:[%s2175 + $0x8] sm:$0xf]
      %v2179 = vld [vmem:[%s2175 + $0xc] sm:$0xf]
      %v2180 = vld [vmem:[%s2175 + $0x10] sm:$0xf]
      %v2181 = vld [vmem:[%s2175 + $0x14] sm:$0xf]
      %v2182 = vld [vmem:[%s2175 + $0x18] sm:$0xf]
      %v2183 = vld [vmem:[%s2175 + $0x1c] sm:$0xf]
      %v2184 = vld [vmem:[%s2175 + $0x20] sm:$0xf]
      %v2185 = vld [vmem:[%s2175 + $0x24] sm:$0xf]
      %v2186 = vld [vmem:[%s2175 + $0x28] sm:$0xf]
      %v2187 = vld [vmem:[%s2175 + $0x2c] sm:$0xf]
      %v2188 = vld [vmem:[%s2175 + $0x30] sm:$0xf]
      %v2189 = vld [vmem:[%s2175 + $0x34] sm:$0xf]
      %v2190 = vld [vmem:[%s2175 + $0x38] sm:$0xf]
      %v2191 = vld [vmem:[%s2175 + $0x3c] sm:$0xf]
      %v2192 = vunpack.c.l.b16 %v2106
      %v2193 = vunpack.c.l.b16 %v2109
      %v2194 = vunpack.c.l.b16 %v2113
      %v2195 = vunpack.c.l.b16 %v2116
      %v2196 = vunpack.c.l.b16 %v2120
      %v2197 = vunpack.c.l.b16 %v2123
      %v2198 = vunpack.c.l.b16 %v2127
      %v2199 = vunpack.c.l.b16 %v2130
      %v2200 = vunpack.c.l.b16 %v2134
      %v2201 = vunpack.c.l.b16 %v2137
      %v2202 = vunpack.c.l.b16 %v2141
      %v2203 = vunpack.c.l.b16 %v2144
      %v2204 = vunpack.c.l.b16 %v2148
      %v2205 = vunpack.c.l.b16 %v2151
      %v2206 = vunpack.c.l.b16 %v2155
      %v2207 = vunpack.c.l.b16 %v2158
      %v2208 = vpack.c.b16 %v2193, %v2192
      %v2209 = vpack.c.b16 %v2195, %v2194
      %v2210 = vpack.c.b16 %v2197, %v2196
      %v2211 = vpack.c.b16 %v2199, %v2198
      %v2212 = vpack.c.b16 %v2201, %v2200
      %v2213 = vpack.c.b16 %v2203, %v2202
      %v2214 = vpack.c.b16 %v2205, %v2204
      %v2215 = vpack.c.b16 %v2207, %v2206
      %v2240 = vunpack.c.l.b16 %v2176
      %v2241 = vunpack.c.l.b16 %v2177
      %v2242 = vunpack.c.l.b16 %v2178
      %v2243 = vunpack.c.l.b16 %v2179
      %v2244 = vunpack.c.l.b16 %v2180
      %v2245 = vunpack.c.l.b16 %v2181
      %v2246 = vunpack.c.l.b16 %v2182
      %v2247 = vunpack.c.l.b16 %v2183
      %v2248 = vunpack.c.l.b16 %v2184
      %v2249 = vunpack.c.l.b16 %v2185
      %v2250 = vunpack.c.l.b16 %v2186
      %v2251 = vunpack.c.l.b16 %v2187
      %v2252 = vunpack.c.l.b16 %v2188
      %v2253 = vunpack.c.l.b16 %v2189
      %v2254 = vunpack.c.l.b16 %v2190
      %v2255 = vunpack.c.l.b16 %v2191
      %v2256 = vpack.c.b16 %v2241, %v2240
      %v2257 = vpack.c.b16 %v2243, %v2242
      %v2258 = vpack.c.b16 %v2245, %v2244
      %v2259 = vpack.c.b16 %v2247, %v2246
      %v2260 = vpack.c.b16 %v2249, %v2248
      %v2261 = vpack.c.b16 %v2251, %v2250
      %v2262 = vpack.c.b16 %v2253, %v2252
      %v2263 = vpack.c.b16 %v2255, %v2254
      %2272 = vmatprep.subr.bf16.mxu0 0
      %2273 = vmatpush1.bf16.msra.mxu0 %v2256
      %2274 = vmatprep.subr.bf16.mxu0 0
      %2275 = vmatpush1.bf16.msra.mxu0 %v2257
      %2276 = vmatprep.subr.bf16.mxu0 0
      %2277 = vmatpush1.bf16.msra.mxu0 %v2258
      %2278 = vmatprep.subr.bf16.mxu0 0
      %2279 = vmatpush1.bf16.msra.mxu0 %v2259
      %2280 = vmatprep.subr.bf16.mxu0 0
      %2281 = vmatpush1.bf16.msra.mxu0 %v2260
      %2282 = vmatprep.subr.bf16.mxu0 0
      %2283 = vmatpush1.bf16.msra.mxu0 %v2261
      %2284 = vmatprep.subr.bf16.mxu0 0
      %2285 = vmatpush1.bf16.msra.mxu0 %v2262
      %2286 = vmatprep.subr.bf16.mxu0 0
      %2287 = vmatpush1.bf16.msra.mxu0 %v2263
      %2288 = vmatprep.subr.bf16.mxu0 0
      %2289 = vmatpush1.bf16.msra.mxu0 0
      %2290 = vmatprep.subr.bf16.mxu0 0
      %2291 = vmatpush1.bf16.msra.mxu0 0
      %2292 = vmatprep.subr.bf16.mxu0 0
      %2293 = vmatpush1.bf16.msra.mxu0 0
      %2294 = vmatprep.subr.bf16.mxu0 0
      %2295 = vmatpush1.bf16.msra.mxu0 0
      %2296 = vmatprep.subr.bf16.mxu0 0
      %2297 = vmatpush1.bf16.msra.mxu0 0
      %2298 = vmatprep.subr.bf16.mxu0 0
      %2299 = vmatpush1.bf16.msra.mxu0 0
      %2300 = vmatprep.subr.bf16.mxu0 0
      %2301 = vmatpush1.bf16.msra.mxu0 0
      %2302 = vmatprep.subr.bf16.mxu0 0
      %2303 = vmatpush1.bf16.msra.mxu0 0
      %2304 = vmatprep.mubr.bf16.mxu0 0
      %2305 = vmatmul.mubr.bf16.gmra.mrb[0].mxu0 %v2208
      %v2306 = vpop.f32.mrb[0].mxu0
      %v2307 = vadd.f32 0.0, %v2306
      %v2308 = vpop.f32.mrb[0].mxu0
      %v2309 = vpop.f32.mrb[0].mxu0
      %v2310 = vadd.f32 0.0, %v2309
      %v2311 = vpop.f32.mrb[0].mxu0
      %2312 = vmatprep.mubr.bf16.mxu0 0
      %2313 = vmatmul.mubr.bf16.gmra.mrb[0].mxu0 %v2209
      %v2314 = vpop.f32.mrb[0].mxu0
      %v2315 = vadd.f32 0.0, %v2314
      %v2316 = vpop.f32.mrb[0].mxu0
      %v2317 = vpop.f32.mrb[0].mxu0
      %v2318 = vadd.f32 0.0, %v2317
      %v2319 = vpop.f32.mrb[0].mxu0
      %2320 = vmatprep.mubr.bf16.mxu0 0
      %2321 = vmatmul.mubr.bf16.gmra.mrb[0].mxu0 %v2210
      %v2322 = vpop.f32.mrb[0].mxu0
      %v2323 = vadd.f32 0.0, %v2322
      %v2324 = vpop.f32.mrb[0].mxu0
      %v2325 = vpop.f32.mrb[0].mxu0
      %v2326 = vadd.f32 0.0, %v2325
      %v2327 = vpop.f32.mrb[0].mxu0
      %2328 = vmatprep.mubr.bf16.mxu0 0
      %2329 = vmatmul.mubr.bf16.gmra.mrb[0].mxu0 %v2211
      %v2330 = vpop.f32.mrb[0].mxu0
      %v2331 = vadd.f32 0.0, %v2330
      %v2332 = vpop.f32.mrb[0].mxu0
      %v2333 = vpop.f32.mrb[0].mxu0
      %v2334 = vadd.f32 0.0, %v2333
      %v2335 = vpop.f32.mrb[0].mxu0
      %2336 = vmatprep.mubr.bf16.mxu0 0
      %2337 = vmatmul.mubr.bf16.gmra.mrb[0].mxu0 %v2212
      %v2338 = vpop.f32.mrb[0].mxu0
      %v2339 = vadd.f32 0.0, %v2338
      %v2340 = vpop.f32.mrb[0].mxu0
      %v2341 = vpop.f32.mrb[0].mxu0
      %v2342 = vadd.f32 0.0, %v2341
      %v2343 = vpop.f32.mrb[0].mxu0
      %2344 = vmatprep.mubr.bf16.mxu0 0
      %2345 = vmatmul.mubr.bf16.gmra.mrb[0].mxu0 %v2213
      %v2346 = vpop.f32.mrb[0].mxu0
      %v2347 = vadd.f32 0.0, %v2346
      %v2348 = vpop.f32.mrb[0].mxu0
      %v2349 = vpop.f32.mrb[0].mxu0
      %v2350 = vadd.f32 0.0, %v2349
      %v2351 = vpop.f32.mrb[0].mxu0
      %2352 = vmatprep.mubr.bf16.mxu0 0
      %2353 = vmatmul.mubr.bf16.gmra.mrb[0].mxu0 %v2214
      %v2354 = vpop.f32.mrb[0].mxu0
      %v2355 = vadd.f32 0.0, %v2354
      %v2356 = vpop.f32.mrb[0].mxu0
      %v2357 = vpop.f32.mrb[0].mxu0
      %v2358 = vadd.f32 0.0, %v2357
      %v2359 = vpop.f32.mrb[0].mxu0
      %2360 = vmatprep.mubr.bf16.mxu0 0
      %2361 = vmatmul.mubr.bf16.gmra.mrb[0].mxu0 %v2215
      %v2362 = vpop.f32.mrb[0].mxu0
      %v2363 = vadd.f32 0.0, %v2362
      %v2364 = vpop.f32.mrb[0].mxu0
      %v2365 = vpop.f32.mrb[0].mxu0
      %v2366 = vadd.f32 0.0, %v2365
      %v2367 = vpop.f32.mrb[0].mxu0
      %2368 = vdwg.mxu0
      %v2369 = vadd.f32 %v2159, %v2307
      %v2370 = vadd.f32 %v2160, %v2310
      %v2371 = vadd.f32 %v2161, %v2315
      %v2372 = vadd.f32 %v2162, %v2318
      %v2373 = vadd.f32 %v2163, %v2323
      %v2374 = vadd.f32 %v2164, %v2326
      %v2375 = vadd.f32 %v2165, %v2331
      %v2376 = vadd.f32 %v2166, %v2334
      %v2377 = vadd.f32 %v2167, %v2339
      %v2378 = vadd.f32 %v2168, %v2342
      %v2379 = vadd.f32 %v2169, %v2347
      %v2380 = vadd.f32 %v2170, %v2350
      %v2381 = vadd.f32 %v2171, %v2355
      %v2382 = vadd.f32 %v2172, %v2358
      %v2383 = vadd.f32 %v2173, %v2363
      %v2384 = vadd.f32 %v2174, %v2366
      %2385 = vst [vmem:[#allocation2] sm:$0xff] %v2369
      %2386 = vst [vmem:[#allocation2 + $0x8] sm:$0xff] %v2370
      %2387 = vst [vmem:[#allocation2 + $0x10] sm:$0xff] %v2371
      %2388 = vst [vmem:[#allocation2 + $0x18] sm:$0xff] %v2372
      %2389 = vst [vmem:[#allocation2 + $0x20] sm:$0xff] %v2373
      %2390 = vst [vmem:[#allocation2 + $0x28] sm:$0xff] %v2374
      %2391 = vst [vmem:[#allocation2 + $0x30] sm:$0xff] %v2375
      %2392 = vst [vmem:[#allocation2 + $0x38] sm:$0xff] %v2376
      %2393 = vst [vmem:[#allocation2 + $0x40] sm:$0xff] %v2377
      %2394 = vst [vmem:[#allocation2 + $0x48] sm:$0xff] %v2378
      %2395 = vst [vmem:[#allocation2 + $0x50] sm:$0xff] %v2379
      %2396 = vst [vmem:[#allocation2 + $0x58] sm:$0xff] %v2380
      %2397 = vst [vmem:[#allocation2 + $0x60] sm:$0xff] %v2381
      %2398 = vst [vmem:[#allocation2 + $0x68] sm:$0xff] %v2382
      %2399 = vst [vmem:[#allocation2 + $0x70] sm:$0xff] %v2383
      %2400 = vst [vmem:[#allocation2 + $0x78] sm:$0xff] %v2384
      %s2401 = sadd.s32 %s216, 2
      %s2402 = smul.u32 %s2401, 3
      %s2403 = smul.addr %s2402, 4
      %s2404 = scalar_lea.vmem %s196, %s2403
      %v2405 = vld [vmem:[%s2404] sm:$0xf]
      %v2406 = vld [vmem:[%s2404 + $0x4] sm:$0xf]
      %v2407 = vld [vmem:[%s2404 + $0xc] sm:$0xf]
      %v2408 = vld [vmem:[%s2404 + $0x10] sm:$0xf]
      %v2409 = vld [vmem:[%s2404 + $0x18] sm:$0xf]
      %v2410 = vld [vmem:[%s2404 + $0x1c] sm:$0xf]
      %v2411 = vld [vmem:[%s2404 + $0x24] sm:$0xf]
      %v2412 = vld [vmem:[%s2404 + $0x28] sm:$0xf]
      %v2413 = vld [vmem:[%s2404 + $0x30] sm:$0xf]
      %v2414 = vld [vmem:[%s2404 + $0x34] sm:$0xf]
      %v2415 = vld [vmem:[%s2404 + $0x3c] sm:$0xf]
      %v2416 = vld [vmem:[%s2404 + $0x40] sm:$0xf]
      %v2417 = vld [vmem:[%s2404 + $0x48] sm:$0xf]
      %v2418 = vld [vmem:[%s2404 + $0x4c] sm:$0xf]
      %v2419 = vld [vmem:[%s2404 + $0x54] sm:$0xf]
      %v2420 = vld [vmem:[%s2404 + $0x58] sm:$0xf]
      %v2421 = vld [vmem:[#allocation2] sm:$0xff]
      %v2422 = vld [vmem:[#allocation2 + $0x8] sm:$0xff]
      %v2423 = vld [vmem:[#allocation2 + $0x10] sm:$0xff]
      %v2424 = vld [vmem:[#allocation2 + $0x18] sm:$0xff]
      %v2425 = vld [vmem:[#allocation2 + $0x20] sm:$0xff]
      %v2426 = vld [vmem:[#allocation2 + $0x28] sm:$0xff]
      %v2427 = vld [vmem:[#allocation2 + $0x30] sm:$0xff]
      %v2428 = vld [vmem:[#allocation2 + $0x38] sm:$0xff]
      %v2429 = vld [vmem:[#allocation2 + $0x40] sm:$0xff]
      %v2430 = vld [vmem:[#allocation2 + $0x48] sm:$0xff]
      %v2431 = vld [vmem:[#allocation2 + $0x50] sm:$0xff]
      %v2432 = vld [vmem:[#allocation2 + $0x58] sm:$0xff]
      %v2433 = vld [vmem:[#allocation2 + $0x60] sm:$0xff]
      %v2434 = vld [vmem:[#allocation2 + $0x68] sm:$0xff]
      %v2435 = vld [vmem:[#allocation2 + $0x70] sm:$0xff]
      %v2436 = vld [vmem:[#allocation2 + $0x78] sm:$0xff]
      %s2437 = scalar_lea.vmem %s1, 384
      %v2438 = vld [vmem:[%s2437] sm:$0xf]
      %v2439 = vld [vmem:[%s2437 + $0x4] sm:$0xf]
      %v2440 = vld [vmem:[%s2437 + $0x8] sm:$0xf]
      %v2441 = vld [vmem:[%s2437 + $0xc] sm:$0xf]
      %v2442 = vld [vmem:[%s2437 + $0x10] sm:$0xf]
      %v2443 = vld [vmem:[%s2437 + $0x14] sm:$0xf]
      %v2444 = vld [vmem:[%s2437 + $0x18] sm:$0xf]
      %v2445 = vld [vmem:[%s2437 + $0x1c] sm:$0xf]
      %v2446 = vld [vmem:[%s2437 + $0x20] sm:$0xf]
      %v2447 = vld [vmem:[%s2437 + $0x24] sm:$0xf]
      %v2448 = vld [vmem:[%s2437 + $0x28] sm:$0xf]
      %v2449 = vld [vmem:[%s2437 + $0x2c] sm:$0xf]
      %v2450 = vld [vmem:[%s2437 + $0x30] sm:$0xf]
      %v2451 = vld [vmem:[%s2437 + $0x34] sm:$0xf]
      %v2452 = vld [vmem:[%s2437 + $0x38] sm:$0xf]
      %v2453 = vld [vmem:[%s2437 + $0x3c] sm:$0xf]
      %v2470 = vunpack.c.l.b16 %v2405
      %v2471 = vunpack.c.l.b16 %v2406
      %v2472 = vunpack.c.l.b16 %v2407
      %v2473 = vunpack.c.l.b16 %v2408
      %v2474 = vunpack.c.l.b16 %v2409
      %v2475 = vunpack.c.l.b16 %v2410
      %v2476 = vunpack.c.l.b16 %v2411
      %v2477 = vunpack.c.l.b16 %v2412
      %v2478 = vunpack.c.l.b16 %v2413
      %v2479 = vunpack.c.l.b16 %v2414
      %v2480 = vunpack.c.l.b16 %v2415
      %v2481 = vunpack.c.l.b16 %v2416
      %v2482 = vunpack.c.l.b16 %v2417
      %v2483 = vunpack.c.l.b16 %v2418
      %v2484 = vunpack.c.l.b16 %v2419
      %v2485 = vunpack.c.l.b16 %v2420
      %v2486 = vpack.c.b16 %v2471, %v2470
      %v2487 = vpack.c.b16 %v2473, %v2472
      %v2488 = vpack.c.b16 %v2475, %v2474
      %v2489 = vpack.c.b16 %v2477, %v2476
      %v2490 = vpack.c.b16 %v2479, %v2478
      %v2491 = vpack.c.b16 %v2481, %v2480
      %v2492 = vpack.c.b16 %v2483, %v2482
      %v2493 = vpack.c.b16 %v2485, %v2484
      %v2518 = vunpack.c.l.b16 %v2438
      %v2519 = vunpack.c.l.b16 %v2439
      %v2520 = vunpack.c.l.b16 %v2440
      %v2521 = vunpack.c.l.b16 %v2441
      %v2522 = vunpack.c.l.b16 %v2442
      %v2523 = vunpack.c.l.b16 %v2443
      %v2524 = vunpack.c.l.b16 %v2444
      %v2525 = vunpack.c.l.b16 %v2445
      %v2526 = vunpack.c.l.b16 %v2446
      %v2527 = vunpack.c.l.b16 %v2447
      %v2528 = vunpack.c.l.b16 %v2448
      %v2529 = vunpack.c.l.b16 %v2449
      %v2530 = vunpack.c.l.b16 %v2450
      %v2531 = vunpack.c.l.b16 %v2451
      %v2532 = vunpack.c.l.b16 %v2452
      %v2533 = vunpack.c.l.b16 %v2453
      %v2534 = vpack.c.b16 %v2519, %v2518
      %v2535 = vpack.c.b16 %v2521, %v2520
      %v2536 = vpack.c.b16 %v2523, %v2522
      %v2537 = vpack.c.b16 %v2525, %v2524
      %v2538 = vpack.c.b16 %v2527, %v2526
      %v2539 = vpack.c.b16 %v2529, %v2528
      %v2540 = vpack.c.b16 %v2531, %v2530
      %v2541 = vpack.c.b16 %v2533, %v2532
      %2550 = vmatprep.subr.bf16.mxu0 0
      %2551 = vmatpush1.bf16.msra.mxu0 %v2534
      %2552 = vmatprep.subr.bf16.mxu0 0
      %2553 = vmatpush1.bf16.msra.mxu0 %v2535
      %2554 = vmatprep.subr.bf16.mxu0 0
      %2555 = vmatpush1.bf16.msra.mxu0 %v2536
      %2556 = vmatprep.subr.bf16.mxu0 0
      %2557 = vmatpush1.bf16.msra.mxu0 %v2537
      %2558 = vmatprep.subr.bf16.mxu0 0
      %2559 = vmatpush1.bf16.msra.mxu0 %v2538
      %2560 = vmatprep.subr.bf16.mxu0 0
      %2561 = vmatpush1.bf16.msra.mxu0 %v2539
      %2562 = vmatprep.subr.bf16.mxu0 0
      %2563 = vmatpush1.bf16.msra.mxu0 %v2540
      %2564 = vmatprep.subr.bf16.mxu0 0
      %2565 = vmatpush1.bf16.msra.mxu0 %v2541
      %2566 = vmatprep.subr.bf16.mxu0 0
      %2567 = vmatpush1.bf16.msra.mxu0 0
      %2568 = vmatprep.subr.bf16.mxu0 0
      %2569 = vmatpush1.bf16.msra.mxu0 0
      %2570 = vmatprep.subr.bf16.mxu0 0
      %2571 = vmatpush1.bf16.msra.mxu0 0
      %2572 = vmatprep.subr.bf16.mxu0 0
      %2573 = vmatpush1.bf16.msra.mxu0 0
      %2574 = vmatprep.subr.bf16.mxu0 0
      %2575 = vmatpush1.bf16.msra.mxu0 0
      %2576 = vmatprep.subr.bf16.mxu0 0
      %2577 = vmatpush1.bf16.msra.mxu0 0
      %2578 = vmatprep.subr.bf16.mxu0 0
      %2579 = vmatpush1.bf16.msra.mxu0 0
      %2580 = vmatprep.subr.bf16.mxu0 0
      %2581 = vmatpush1.bf16.msra.mxu0 0
      %2582 = vmatprep.mubr.bf16.mxu0 0
      %2583 = vmatmul.mubr.bf16.gmra.mrb[0].mxu0 %v2486
      %v2584 = vpop.f32.mrb[0].mxu0
      %v2585 = vadd.f32 0.0, %v2584
      %v2586 = vpop.f32.mrb[0].mxu0
      %v2587 = vpop.f32.mrb[0].mxu0
      %v2588 = vadd.f32 0.0, %v2587
      %v2589 = vpop.f32.mrb[0].mxu0
      %2590 = vmatprep.mubr.bf16.mxu0 0
      %2591 = vmatmul.mubr.bf16.gmra.mrb[0].mxu0 %v2487
      %v2592 = vpop.f32.mrb[0].mxu0
      %v2593 = vadd.f32 0.0, %v2592
      %v2594 = vpop.f32.mrb[0].mxu0
      %v2595 = vpop.f32.mrb[0].mxu0
      %v2596 = vadd.f32 0.0, %v2595
      %v2597 = vpop.f32.mrb[0].mxu0
      %2598 = vmatprep.mubr.bf16.mxu0 0
      %2599 = vmatmul.mubr.bf16.gmra.mrb[0].mxu0 %v2488
      %v2600 = vpop.f32.mrb[0].mxu0
      %v2601 = vadd.f32 0.0, %v2600
      %v2602 = vpop.f32.mrb[0].mxu0
      %v2603 = vpop.f32.mrb[0].mxu0
      %v2604 = vadd.f32 0.0, %v2603
      %v2605 = vpop.f32.mrb[0].mxu0
      %2606 = vmatprep.mubr.bf16.mxu0 0
      %2607 = vmatmul.mubr.bf16.gmra.mrb[0].mxu0 %v2489
      %v2608 = vpop.f32.mrb[0].mxu0
      %v2609 = vadd.f32 0.0, %v2608
      %v2610 = vpop.f32.mrb[0].mxu0
      %v2611 = vpop.f32.mrb[0].mxu0
      %v2612 = vadd.f32 0.0, %v2611
      %v2613 = vpop.f32.mrb[0].mxu0
      %2614 = vmatprep.mubr.bf16.mxu0 0
      %2615 = vmatmul.mubr.bf16.gmra.mrb[0].mxu0 %v2490
      %v2616 = vpop.f32.mrb[0].mxu0
      %v2617 = vadd.f32 0.0, %v2616
      %v2618 = vpop.f32.mrb[0].mxu0
      %v2619 = vpop.f32.mrb[0].mxu0
      %v2620 = vadd.f32 0.0, %v2619
      %v2621 = vpop.f32.mrb[0].mxu0
      %2622 = vmatprep.mubr.bf16.mxu0 0
      %2623 = vmatmul.mubr.bf16.gmra.mrb[0].mxu0 %v2491
      %v2624 = vpop.f32.mrb[0].mxu0
      %v2625 = vadd.f32 0.0, %v2624
      %v2626 = vpop.f32.mrb[0].mxu0
      %v2627 = vpop.f32.mrb[0].mxu0
      %v2628 = vadd.f32 0.0, %v2627
      %v2629 = vpop.f32.mrb[0].mxu0
      %2630 = vmatprep.mubr.bf16.mxu0 0
      %2631 = vmatmul.mubr.bf16.gmra.mrb[0].mxu0 %v2492
      %v2632 = vpop.f32.mrb[0].mxu0
      %v2633 = vadd.f32 0.0, %v2632
      %v2634 = vpop.f32.mrb[0].mxu0
      %v2635 = vpop.f32.mrb[0].mxu0
      %v2636 = vadd.f32 0.0, %v2635
      %v2637 = vpop.f32.mrb[0].mxu0
      %2638 = vmatprep.mubr.bf16.mxu0 0
      %2639 = vmatmul.mubr.bf16.gmra.mrb[0].mxu0 %v2493
      %v2640 = vpop.f32.mrb[0].mxu0
      %v2641 = vadd.f32 0.0, %v2640
      %v2642 = vpop.f32.mrb[0].mxu0
      %v2643 = vpop.f32.mrb[0].mxu0
      %v2644 = vadd.f32 0.0, %v2643
      %v2645 = vpop.f32.mrb[0].mxu0
      %2646 = vdwg.mxu0
      %v2647 = vadd.f32 %v2421, %v2585
      %v2648 = vadd.f32 %v2422, %v2588
      %v2649 = vadd.f32 %v2423, %v2593
      %v2650 = vadd.f32 %v2424, %v2596
      %v2651 = vadd.f32 %v2425, %v2601
      %v2652 = vadd.f32 %v2426, %v2604
      %v2653 = vadd.f32 %v2427, %v2609
      %v2654 = vadd.f32 %v2428, %v2612
      %v2655 = vadd.f32 %v2429, %v2617
      %v2656 = vadd.f32 %v2430, %v2620
      %v2657 = vadd.f32 %v2431, %v2625
      %v2658 = vadd.f32 %v2432, %v2628
      %v2659 = vadd.f32 %v2433, %v2633
      %v2660 = vadd.f32 %v2434, %v2636
      %v2661 = vadd.f32 %v2435, %v2641
      %v2662 = vadd.f32 %v2436, %v2644
      %2663 = vst [vmem:[#allocation2] sm:$0xff] %v2647
      %2664 = vst [vmem:[#allocation2 + $0x8] sm:$0xff] %v2648
      %2665 = vst [vmem:[#allocation2 + $0x10] sm:$0xff] %v2649
      %2666 = vst [vmem:[#allocation2 + $0x18] sm:$0xff] %v2650
      %2667 = vst [vmem:[#allocation2 + $0x20] sm:$0xff] %v2651
      %2668 = vst [vmem:[#allocation2 + $0x28] sm:$0xff] %v2652
      %2669 = vst [vmem:[#allocation2 + $0x30] sm:$0xff] %v2653
      %2670 = vst [vmem:[#allocation2 + $0x38] sm:$0xff] %v2654
      %2671 = vst [vmem:[#allocation2 + $0x40] sm:$0xff] %v2655
      %2672 = vst [vmem:[#allocation2 + $0x48] sm:$0xff] %v2656
      %2673 = vst [vmem:[#allocation2 + $0x50] sm:$0xff] %v2657
      %2674 = vst [vmem:[#allocation2 + $0x58] sm:$0xff] %v2658
      %2675 = vst [vmem:[#allocation2 + $0x60] sm:$0xff] %v2659
      %2676 = vst [vmem:[#allocation2 + $0x68] sm:$0xff] %v2660
      %2677 = vst [vmem:[#allocation2 + $0x70] sm:$0xff] %v2661
      %2678 = vst [vmem:[#allocation2 + $0x78] sm:$0xff] %v2662
      %v2679 = vld [vmem:[%s2404] sm:$0xf]
      %v2680 = vld [vmem:[%s2404 + $0x4] sm:$0xf]
      %v2681 = vld [vmem:[%s2404 + $0x8] sm:$0x1]
      %v2682 = vld [vmem:[%s2404 + $0xc] sm:$0xf]
      %v2683 = vld [vmem:[%s2404 + $0x10] sm:$0xf]
      %v2684 = vld [vmem:[%s2404 + $0x14] sm:$0x1]
      %v2685 = vld [vmem:[%s2404 + $0x18] sm:$0xf]
      %v2686 = vld [vmem:[%s2404 + $0x1c] sm:$0xf]
      %v2687 = vld [vmem:[%s2404 + $0x20] sm:$0x1]
      %v2688 = vld [vmem:[%s2404 + $0x24] sm:$0xf]
      %v2689 = vld [vmem:[%s2404 + $0x28] sm:$0xf]
      %v2690 = vld [vmem:[%s2404 + $0x2c] sm:$0x1]
      %v2691 = vld [vmem:[%s2404 + $0x30] sm:$0xf]
      %v2692 = vld [vmem:[%s2404 + $0x34] sm:$0xf]
      %v2693 = vld [vmem:[%s2404 + $0x38] sm:$0x1]
      %v2694 = vld [vmem:[%s2404 + $0x3c] sm:$0xf]
      %v2695 = vld [vmem:[%s2404 + $0x40] sm:$0xf]
      %v2696 = vld [vmem:[%s2404 + $0x44] sm:$0x1]
      %v2697 = vld [vmem:[%s2404 + $0x48] sm:$0xf]
      %v2698 = vld [vmem:[%s2404 + $0x4c] sm:$0xf]
      %v2699 = vld [vmem:[%s2404 + $0x50] sm:$0x1]
      %v2700 = vld [vmem:[%s2404 + $0x54] sm:$0xf]
      %v2701 = vld [vmem:[%s2404 + $0x58] sm:$0xf]
      %v2702 = vld [vmem:[%s2404 + $0x5c] sm:$0x1]
      %v2704 = vshrl.u32 %v2679, 16
      %v2706 = vrot.slane %v2704, 4
      %v2707 = vshll.u32 %v2679, 16
      %v2709 = vrot.slane %v2707, 5
      %v2710 = vor.u32 %v2706, %v2709
      %v2711 = vrot.slane %v2710, 4
      %v2713 = vshll.u32 %v2680, 16
      %v2715 = vrot.slane %v2713, 5
      %v2716 = vsel %vm535, %v2711, %v2715
      %v2717 = vshrl.u32 %v2680, 16
      %v2719 = vrot.slane %v2717, 4
      %v2720 = vor.u32 %v2719, %v2715
      %v2721 = vrot.slane %v2720, 4
      %v2723 = vshll.u32 %v2681, 16
      %v2725 = vrot.slane %v2723, 5
      %v2726 = vsel %vm535, %v2721, %v2725
      %v2728 = vshrl.u32 %v2682, 16
      %v2730 = vrot.slane %v2728, 4
      %v2731 = vshll.u32 %v2682, 16
      %v2733 = vrot.slane %v2731, 5
      %v2734 = vor.u32 %v2730, %v2733
      %v2735 = vrot.slane %v2734, 4
      %v2737 = vshll.u32 %v2683, 16
      %v2739 = vrot.slane %v2737, 5
      %v2740 = vsel %vm535, %v2735, %v2739
      %v2741 = vshrl.u32 %v2683, 16
      %v2743 = vrot.slane %v2741, 4
      %v2744 = vor.u32 %v2743, %v2739
      %v2745 = vrot.slane %v2744, 4
      %v2747 = vshll.u32 %v2684, 16
      %v2749 = vrot.slane %v2747, 5
      %v2750 = vsel %vm535, %v2745, %v2749
      %v2752 = vshrl.u32 %v2685, 16
      %v2754 = vrot.slane %v2752, 4
      %v2755 = vshll.u32 %v2685, 16
      %v2757 = vrot.slane %v2755, 5
      %v2758 = vor.u32 %v2754, %v2757
      %v2759 = vrot.slane %v2758, 4
      %v2761 = vshll.u32 %v2686, 16
      %v2763 = vrot.slane %v2761, 5
      %v2764 = vsel %vm535, %v2759, %v2763
      %v2765 = vshrl.u32 %v2686, 16
      %v2767 = vrot.slane %v2765, 4
      %v2768 = vor.u32 %v2767, %v2763
      %v2769 = vrot.slane %v2768, 4
      %v2771 = vshll.u32 %v2687, 16
      %v2773 = vrot.slane %v2771, 5
      %v2774 = vsel %vm535, %v2769, %v2773
      %v2776 = vshrl.u32 %v2688, 16
      %v2778 = vrot.slane %v2776, 4
      %v2779 = vshll.u32 %v2688, 16
      %v2781 = vrot.slane %v2779, 5
      %v2782 = vor.u32 %v2778, %v2781
      %v2783 = vrot.slane %v2782, 4
      %v2785 = vshll.u32 %v2689, 16
      %v2787 = vrot.slane %v2785, 5
      %v2788 = vsel %vm535, %v2783, %v2787
      %v2789 = vshrl.u32 %v2689, 16
      %v2791 = vrot.slane %v2789, 4
      %v2792 = vor.u32 %v2791, %v2787
      %v2793 = vrot.slane %v2792, 4
      %v2795 = vshll.u32 %v2690, 16
      %v2797 = vrot.slane %v2795, 5
      %v2798 = vsel %vm535, %v2793, %v2797
      %v2800 = vshrl.u32 %v2691, 16
      %v2802 = vrot.slane %v2800, 4
      %v2803 = vshll.u32 %v2691, 16
      %v2805 = vrot.slane %v2803, 5
      %v2806 = vor.u32 %v2802, %v2805
      %v2807 = vrot.slane %v2806, 4
      %v2809 = vshll.u32 %v2692, 16
      %v2811 = vrot.slane %v2809, 5
      %v2812 = vsel %vm535, %v2807, %v2811
      %v2813 = vshrl.u32 %v2692, 16
      %v2815 = vrot.slane %v2813, 4
      %v2816 = vor.u32 %v2815, %v2811
      %v2817 = vrot.slane %v2816, 4
      %v2819 = vshll.u32 %v2693, 16
      %v2821 = vrot.slane %v2819, 5
      %v2822 = vsel %vm535, %v2817, %v2821
      %v2824 = vshrl.u32 %v2694, 16
      %v2826 = vrot.slane %v2824, 4
      %v2827 = vshll.u32 %v2694, 16
      %v2829 = vrot.slane %v2827, 5
      %v2830 = vor.u32 %v2826, %v2829
      %v2831 = vrot.slane %v2830, 4
      %v2833 = vshll.u32 %v2695, 16
      %v2835 = vrot.slane %v2833, 5
      %v2836 = vsel %vm535, %v2831, %v2835
      %v2837 = vshrl.u32 %v2695, 16
      %v2839 = vrot.slane %v2837, 4
      %v2840 = vor.u32 %v2839, %v2835
      %v2841 = vrot.slane %v2840, 4
      %v2843 = vshll.u32 %v2696, 16
      %v2845 = vrot.slane %v2843, 5
      %v2846 = vsel %vm535, %v2841, %v2845
      %v2848 = vshrl.u32 %v2697, 16
      %v2850 = vrot.slane %v2848, 4
      %v2851 = vshll.u32 %v2697, 16
      %v2853 = vrot.slane %v2851, 5
      %v2854 = vor.u32 %v2850, %v2853
      %v2855 = vrot.slane %v2854, 4
      %v2857 = vshll.u32 %v2698, 16
      %v2859 = vrot.slane %v2857, 5
      %v2860 = vsel %vm535, %v2855, %v2859
      %v2861 = vshrl.u32 %v2698, 16
      %v2863 = vrot.slane %v2861, 4
      %v2864 = vor.u32 %v2863, %v2859
      %v2865 = vrot.slane %v2864, 4
      %v2867 = vshll.u32 %v2699, 16
      %v2869 = vrot.slane %v2867, 5
      %v2870 = vsel %vm535, %v2865, %v2869
      %v2872 = vshrl.u32 %v2700, 16
      %v2874 = vrot.slane %v2872, 4
      %v2875 = vshll.u32 %v2700, 16
      %v2877 = vrot.slane %v2875, 5
      %v2878 = vor.u32 %v2874, %v2877
      %v2879 = vrot.slane %v2878, 4
      %v2881 = vshll.u32 %v2701, 16
      %v2883 = vrot.slane %v2881, 5
      %v2884 = vsel %vm535, %v2879, %v2883
      %v2885 = vshrl.u32 %v2701, 16
      %v2887 = vrot.slane %v2885, 4
      %v2888 = vor.u32 %v2887, %v2883
      %v2889 = vrot.slane %v2888, 4
      %v2891 = vshll.u32 %v2702, 16
      %v2893 = vrot.slane %v2891, 5
      %v2894 = vsel %vm535, %v2889, %v2893
      %v2895 = vld [vmem:[#allocation2] sm:$0xff]
      %v2896 = vld [vmem:[#allocation2 + $0x8] sm:$0xff]
      %v2897 = vld [vmem:[#allocation2 + $0x10] sm:$0xff]
      %v2898 = vld [vmem:[#allocation2 + $0x18] sm:$0xff]
      %v2899 = vld [vmem:[#allocation2 + $0x20] sm:$0xff]
      %v2900 = vld [vmem:[#allocation2 + $0x28] sm:$0xff]
      %v2901 = vld [vmem:[#allocation2 + $0x30] sm:$0xff]
      %v2902 = vld [vmem:[#allocation2 + $0x38] sm:$0xff]
      %v2903 = vld [vmem:[#allocation2 + $0x40] sm:$0xff]
      %v2904 = vld [vmem:[#allocation2 + $0x48] sm:$0xff]
      %v2905 = vld [vmem:[#allocation2 + $0x50] sm:$0xff]
      %v2906 = vld [vmem:[#allocation2 + $0x58] sm:$0xff]
      %v2907 = vld [vmem:[#allocation2 + $0x60] sm:$0xff]
      %v2908 = vld [vmem:[#allocation2 + $0x68] sm:$0xff]
      %v2909 = vld [vmem:[#allocation2 + $0x70] sm:$0xff]
      %v2910 = vld [vmem:[#allocation2 + $0x78] sm:$0xff]
      %s2911 = scalar_lea.vmem %s1, 448
      %v2912 = vld [vmem:[%s2911] sm:$0xf]
      %v2913 = vld [vmem:[%s2911 + $0x4] sm:$0xf]
      %v2914 = vld [vmem:[%s2911 + $0x8] sm:$0xf]
      %v2915 = vld [vmem:[%s2911 + $0xc] sm:$0xf]
      %v2916 = vld [vmem:[%s2911 + $0x10] sm:$0xf]
      %v2917 = vld [vmem:[%s2911 + $0x14] sm:$0xf]
      %v2918 = vld [vmem:[%s2911 + $0x18] sm:$0xf]
      %v2919 = vld [vmem:[%s2911 + $0x1c] sm:$0xf]
      %v2920 = vld [vmem:[%s2911 + $0x20] sm:$0xf]
      %v2921 = vld [vmem:[%s2911 + $0x24] sm:$0xf]
      %v2922 = vld [vmem:[%s2911 + $0x28] sm:$0xf]
      %v2923 = vld [vmem:[%s2911 + $0x2c] sm:$0xf]
      %v2924 = vld [vmem:[%s2911 + $0x30] sm:$0xf]
      %v2925 = vld [vmem:[%s2911 + $0x34] sm:$0xf]
      %v2926 = vld [vmem:[%s2911 + $0x38] sm:$0xf]
      %v2927 = vld [vmem:[%s2911 + $0x3c] sm:$0xf]
      %v2928 = vunpack.c.l.b16 %v2716
      %v2929 = vunpack.c.l.b16 %v2726
      %v2930 = vunpack.c.l.b16 %v2740
      %v2931 = vunpack.c.l.b16 %v2750
      %v2932 = vunpack.c.l.b16 %v2764
      %v2933 = vunpack.c.l.b16 %v2774
      %v2934 = vunpack.c.l.b16 %v2788
      %v2935 = vunpack.c.l.b16 %v2798
      %v2936 = vunpack.c.l.b16 %v2812
      %v2937 = vunpack.c.l.b16 %v2822
      %v2938 = vunpack.c.l.b16 %v2836
      %v2939 = vunpack.c.l.b16 %v2846
      %v2940 = vunpack.c.l.b16 %v2860
      %v2941 = vunpack.c.l.b16 %v2870
      %v2942 = vunpack.c.l.b16 %v2884
      %v2943 = vunpack.c.l.b16 %v2894
      %v2944 = vpack.c.b16 %v2929, %v2928
      %v2945 = vpack.c.b16 %v2931, %v2930
      %v2946 = vpack.c.b16 %v2933, %v2932
      %v2947 = vpack.c.b16 %v2935, %v2934
      %v2948 = vpack.c.b16 %v2937, %v2936
      %v2949 = vpack.c.b16 %v2939, %v2938
      %v2950 = vpack.c.b16 %v2941, %v2940
      %v2951 = vpack.c.b16 %v2943, %v2942
      %v2976 = vunpack.c.l.b16 %v2912
      %v2977 = vunpack.c.l.b16 %v2913
      %v2978 = vunpack.c.l.b16 %v2914
      %v2979 = vunpack.c.l.b16 %v2915
      %v2980 = vunpack.c.l.b16 %v2916
      %v2981 = vunpack.c.l.b16 %v2917
      %v2982 = vunpack.c.l.b16 %v2918
      %v2983 = vunpack.c.l.b16 %v2919
      %v2984 = vunpack.c.l.b16 %v2920
      %v2985 = vunpack.c.l.b16 %v2921
      %v2986 = vunpack.c.l.b16 %v2922
      %v2987 = vunpack.c.l.b16 %v2923
      %v2988 = vunpack.c.l.b16 %v2924
      %v2989 = vunpack.c.l.b16 %v2925
      %v2990 = vunpack.c.l.b16 %v2926
      %v2991 = vunpack.c.l.b16 %v2927
      %v2992 = vpack.c.b16 %v2977, %v2976
      %v2993 = vpack.c.b16 %v2979, %v2978
      %v2994 = vpack.c.b16 %v2981, %v2980
      %v2995 = vpack.c.b16 %v2983, %v2982
      %v2996 = vpack.c.b16 %v2985, %v2984
      %v2997 = vpack.c.b16 %v2987, %v2986
      %v2998 = vpack.c.b16 %v2989, %v2988
      %v2999 = vpack.c.b16 %v2991, %v2990
      %3008 = vmatprep.subr.bf16.mxu0 0
      %3009 = vmatpush1.bf16.msra.mxu0 %v2992
      %3010 = vmatprep.subr.bf16.mxu0 0
      %3011 = vmatpush1.bf16.msra.mxu0 %v2993
      %3012 = vmatprep.subr.bf16.mxu0 0
      %3013 = vmatpush1.bf16.msra.mxu0 %v2994
      %3014 = vmatprep.subr.bf16.mxu0 0
      %3015 = vmatpush1.bf16.msra.mxu0 %v2995
      %3016 = vmatprep.subr.bf16.mxu0 0
      %3017 = vmatpush1.bf16.msra.mxu0 %v2996
      %3018 = vmatprep.subr.bf16.mxu0 0
      %3019 = vmatpush1.bf16.msra.mxu0 %v2997
      %3020 = vmatprep.subr.bf16.mxu0 0
      %3021 = vmatpush1.bf16.msra.mxu0 %v2998
      %3022 = vmatprep.subr.bf16.mxu0 0
      %3023 = vmatpush1.bf16.msra.mxu0 %v2999
      %3024 = vmatprep.subr.bf16.mxu0 0
      %3025 = vmatpush1.bf16.msra.mxu0 0
      %3026 = vmatprep.subr.bf16.mxu0 0
      %3027 = vmatpush1.bf16.msra.mxu0 0
      %3028 = vmatprep.subr.bf16.mxu0 0
      %3029 = vmatpush1.bf16.msra.mxu0 0
      %3030 = vmatprep.subr.bf16.mxu0 0
      %3031 = vmatpush1.bf16.msra.mxu0 0
      %3032 = vmatprep.subr.bf16.mxu0 0
      %3033 = vmatpush1.bf16.msra.mxu0 0
      %3034 = vmatprep.subr.bf16.mxu0 0
      %3035 = vmatpush1.bf16.msra.mxu0 0
      %3036 = vmatprep.subr.bf16.mxu0 0
      %3037 = vmatpush1.bf16.msra.mxu0 0
      %3038 = vmatprep.subr.bf16.mxu0 0
      %3039 = vmatpush1.bf16.msra.mxu0 0
      %3040 = vmatprep.mubr.bf16.mxu0 0
      %3041 = vmatmul.mubr.bf16.gmra.mrb[0].mxu0 %v2944
      %v3042 = vpop.f32.mrb[0].mxu0
      %v3043 = vadd.f32 0.0, %v3042
      %v3044 = vpop.f32.mrb[0].mxu0
      %v3045 = vpop.f32.mrb[0].mxu0
      %v3046 = vadd.f32 0.0, %v3045
      %v3047 = vpop.f32.mrb[0].mxu0
      %3048 = vmatprep.mubr.bf16.mxu0 0
      %3049 = vmatmul.mubr.bf16.gmra.mrb[0].mxu0 %v2945
      %v3050 = vpop.f32.mrb[0].mxu0
      %v3051 = vadd.f32 0.0, %v3050
      %v3052 = vpop.f32.mrb[0].mxu0
      %v3053 = vpop.f32.mrb[0].mxu0
      %v3054 = vadd.f32 0.0, %v3053
      %v3055 = vpop.f32.mrb[0].mxu0
      %3056 = vmatprep.mubr.bf16.mxu0 0
      %3057 = vmatmul.mubr.bf16.gmra.mrb[0].mxu0 %v2946
      %v3058 = vpop.f32.mrb[0].mxu0
      %v3059 = vadd.f32 0.0, %v3058
      %v3060 = vpop.f32.mrb[0].mxu0
      %v3061 = vpop.f32.mrb[0].mxu0
      %v3062 = vadd.f32 0.0, %v3061
      %v3063 = vpop.f32.mrb[0].mxu0
      %3064 = vmatprep.mubr.bf16.mxu0 0
      %3065 = vmatmul.mubr.bf16.gmra.mrb[0].mxu0 %v2947
      %v3066 = vpop.f32.mrb[0].mxu0
      %v3067 = vadd.f32 0.0, %v3066
      %v3068 = vpop.f32.mrb[0].mxu0
      %v3069 = vpop.f32.mrb[0].mxu0
      %v3070 = vadd.f32 0.0, %v3069
      %v3071 = vpop.f32.mrb[0].mxu0
      %3072 = vmatprep.mubr.bf16.mxu0 0
      %3073 = vmatmul.mubr.bf16.gmra.mrb[0].mxu0 %v2948
      %v3074 = vpop.f32.mrb[0].mxu0
      %v3075 = vadd.f32 0.0, %v3074
      %v3076 = vpop.f32.mrb[0].mxu0
      %v3077 = vpop.f32.mrb[0].mxu0
      %v3078 = vadd.f32 0.0, %v3077
      %v3079 = vpop.f32.mrb[0].mxu0
      %3080 = vmatprep.mubr.bf16.mxu0 0
      %3081 = vmatmul.mubr.bf16.gmra.mrb[0].mxu0 %v2949
      %v3082 = vpop.f32.mrb[0].mxu0
      %v3083 = vadd.f32 0.0, %v3082
      %v3084 = vpop.f32.mrb[0].mxu0
      %v3085 = vpop.f32.mrb[0].mxu0
      %v3086 = vadd.f32 0.0, %v3085
      %v3087 = vpop.f32.mrb[0].mxu0
      %3088 = vmatprep.mubr.bf16.mxu0 0
      %3089 = vmatmul.mubr.bf16.gmra.mrb[0].mxu0 %v2950
      %v3090 = vpop.f32.mrb[0].mxu0
      %v3091 = vadd.f32 0.0, %v3090
      %v3092 = vpop.f32.mrb[0].mxu0
      %v3093 = vpop.f32.mrb[0].mxu0
      %v3094 = vadd.f32 0.0, %v3093
      %v3095 = vpop.f32.mrb[0].mxu0
      %3096 = vmatprep.mubr.bf16.mxu0 0
      %3097 = vmatmul.mubr.bf16.gmra.mrb[0].mxu0 %v2951
      %v3098 = vpop.f32.mrb[0].mxu0
      %v3099 = vadd.f32 0.0, %v3098
      %v3100 = vpop.f32.mrb[0].mxu0
      %v3101 = vpop.f32.mrb[0].mxu0
      %v3102 = vadd.f32 0.0, %v3101
      %v3103 = vpop.f32.mrb[0].mxu0
      %3104 = vdwg.mxu0
      %v3105 = vadd.f32 %v2895, %v3043
      %v3106 = vadd.f32 %v2896, %v3046
      %v3107 = vadd.f32 %v2897, %v3051
      %v3108 = vadd.f32 %v2898, %v3054
      %v3109 = vadd.f32 %v2899, %v3059
      %v3110 = vadd.f32 %v2900, %v3062
      %v3111 = vadd.f32 %v2901, %v3067
      %v3112 = vadd.f32 %v2902, %v3070
      %v3113 = vadd.f32 %v2903, %v3075
      %v3114 = vadd.f32 %v2904, %v3078
      %v3115 = vadd.f32 %v2905, %v3083
      %v3116 = vadd.f32 %v2906, %v3086
      %v3117 = vadd.f32 %v2907, %v3091
      %v3118 = vadd.f32 %v2908, %v3094
      %v3119 = vadd.f32 %v2909, %v3099
      %v3120 = vadd.f32 %v2910, %v3102
      %3121 = vst [vmem:[#allocation2] sm:$0xff] %v3105
      %3122 = vst [vmem:[#allocation2 + $0x8] sm:$0xff] %v3106
      %3123 = vst [vmem:[#allocation2 + $0x10] sm:$0xff] %v3107
      %3124 = vst [vmem:[#allocation2 + $0x18] sm:$0xff] %v3108
      %3125 = vst [vmem:[#allocation2 + $0x20] sm:$0xff] %v3109
      %3126 = vst [vmem:[#allocation2 + $0x28] sm:$0xff] %v3110
      %3127 = vst [vmem:[#allocation2 + $0x30] sm:$0xff] %v3111
      %3128 = vst [vmem:[#allocation2 + $0x38] sm:$0xff] %v3112
      %3129 = vst [vmem:[#allocation2 + $0x40] sm:$0xff] %v3113
      %3130 = vst [vmem:[#allocation2 + $0x48] sm:$0xff] %v3114
      %3131 = vst [vmem:[#allocation2 + $0x50] sm:$0xff] %v3115
      %3132 = vst [vmem:[#allocation2 + $0x58] sm:$0xff] %v3116
      %3133 = vst [vmem:[#allocation2 + $0x60] sm:$0xff] %v3117
      %3134 = vst [vmem:[#allocation2 + $0x68] sm:$0xff] %v3118
      %3135 = vst [vmem:[#allocation2 + $0x70] sm:$0xff] %v3119
      %3136 = vst [vmem:[#allocation2 + $0x78] sm:$0xff] %v3120
      %v3137 = vld [vmem:[%s2404] sm:$0xe]
      %v3138 = vld [vmem:[%s2404 + $0x4] sm:$0xf]
      %v3139 = vld [vmem:[%s2404 + $0x8] sm:$0x1]
      %v3140 = vld [vmem:[%s2404 + $0xc] sm:$0xe]
      %v3141 = vld [vmem:[%s2404 + $0x10] sm:$0xf]
      %v3142 = vld [vmem:[%s2404 + $0x14] sm:$0x1]
      %v3143 = vld [vmem:[%s2404 + $0x18] sm:$0xe]
      %v3144 = vld [vmem:[%s2404 + $0x1c] sm:$0xf]
      %v3145 = vld [vmem:[%s2404 + $0x20] sm:$0x1]
      %v3146 = vld [vmem:[%s2404 + $0x24] sm:$0xe]
      %v3147 = vld [vmem:[%s2404 + $0x28] sm:$0xf]
      %v3148 = vld [vmem:[%s2404 + $0x2c] sm:$0x1]
      %v3149 = vld [vmem:[%s2404 + $0x30] sm:$0xe]
      %v3150 = vld [vmem:[%s2404 + $0x34] sm:$0xf]
      %v3151 = vld [vmem:[%s2404 + $0x38] sm:$0x1]
      %v3152 = vld [vmem:[%s2404 + $0x3c] sm:$0xe]
      %v3153 = vld [vmem:[%s2404 + $0x40] sm:$0xf]
      %v3154 = vld [vmem:[%s2404 + $0x44] sm:$0x1]
      %v3155 = vld [vmem:[%s2404 + $0x48] sm:$0xe]
      %v3156 = vld [vmem:[%s2404 + $0x4c] sm:$0xf]
      %v3157 = vld [vmem:[%s2404 + $0x50] sm:$0x1]
      %v3158 = vld [vmem:[%s2404 + $0x54] sm:$0xe]
      %v3159 = vld [vmem:[%s2404 + $0x58] sm:$0xf]
      %v3160 = vld [vmem:[%s2404 + $0x5c] sm:$0x1]
      %v3185 = vrot.slane %v3137, 5
      %v3186 = vrot.slane %v3185, 4
      %v3187 = vrot.slane %v3138, 5
      %v3188 = vsel %vm1020, %v3186, %v3187
      %v3189 = vrot.slane %v3187, 4
      %v3190 = vrot.slane %v3139, 5
      %v3191 = vsel %vm1020, %v3189, %v3190
      %v3192 = vrot.slane %v3140, 5
      %v3193 = vrot.slane %v3192, 4
      %v3194 = vrot.slane %v3141, 5
      %v3195 = vsel %vm1020, %v3193, %v3194
      %v3196 = vrot.slane %v3194, 4
      %v3197 = vrot.slane %v3142, 5
      %v3198 = vsel %vm1020, %v3196, %v3197
      %v3199 = vrot.slane %v3143, 5
      %v3200 = vrot.slane %v3199, 4
      %v3201 = vrot.slane %v3144, 5
      %v3202 = vsel %vm1020, %v3200, %v3201
      %v3203 = vrot.slane %v3201, 4
      %v3204 = vrot.slane %v3145, 5
      %v3205 = vsel %vm1020, %v3203, %v3204
      %v3206 = vrot.slane %v3146, 5
      %v3207 = vrot.slane %v3206, 4
      %v3208 = vrot.slane %v3147, 5
      %v3209 = vsel %vm1020, %v3207, %v3208
      %v3210 = vrot.slane %v3208, 4
      %v3211 = vrot.slane %v3148, 5
      %v3212 = vsel %vm1020, %v3210, %v3211
      %v3213 = vrot.slane %v3149, 5
      %v3214 = vrot.slane %v3213, 4
      %v3215 = vrot.slane %v3150, 5
      %v3216 = vsel %vm1020, %v3214, %v3215
      %v3217 = vrot.slane %v3215, 4
      %v3218 = vrot.slane %v3151, 5
      %v3219 = vsel %vm1020, %v3217, %v3218
      %v3220 = vrot.slane %v3152, 5
      %v3221 = vrot.slane %v3220, 4
      %v3222 = vrot.slane %v3153, 5
      %v3223 = vsel %vm1020, %v3221, %v3222
      %v3224 = vrot.slane %v3222, 4
      %v3225 = vrot.slane %v3154, 5
      %v3226 = vsel %vm1020, %v3224, %v3225
      %v3227 = vrot.slane %v3155, 5
      %v3228 = vrot.slane %v3227, 4
      %v3229 = vrot.slane %v3156, 5
      %v3230 = vsel %vm1020, %v3228, %v3229
      %v3231 = vrot.slane %v3229, 4
      %v3232 = vrot.slane %v3157, 5
      %v3233 = vsel %vm1020, %v3231, %v3232
      %v3234 = vrot.slane %v3158, 5
      %v3235 = vrot.slane %v3234, 4
      %v3236 = vrot.slane %v3159, 5
      %v3237 = vsel %vm1020, %v3235, %v3236
      %v3238 = vrot.slane %v3236, 4
      %v3239 = vrot.slane %v3160, 5
      %v3240 = vsel %vm1020, %v3238, %v3239
      %v3241 = vld [vmem:[#allocation2] sm:$0xff]
      %v3242 = vld [vmem:[#allocation2 + $0x8] sm:$0xff]
      %v3243 = vld [vmem:[#allocation2 + $0x10] sm:$0xff]
      %v3244 = vld [vmem:[#allocation2 + $0x18] sm:$0xff]
      %v3245 = vld [vmem:[#allocation2 + $0x20] sm:$0xff]
      %v3246 = vld [vmem:[#allocation2 + $0x28] sm:$0xff]
      %v3247 = vld [vmem:[#allocation2 + $0x30] sm:$0xff]
      %v3248 = vld [vmem:[#allocation2 + $0x38] sm:$0xff]
      %v3249 = vld [vmem:[#allocation2 + $0x40] sm:$0xff]
      %v3250 = vld [vmem:[#allocation2 + $0x48] sm:$0xff]
      %v3251 = vld [vmem:[#allocation2 + $0x50] sm:$0xff]
      %v3252 = vld [vmem:[#allocation2 + $0x58] sm:$0xff]
      %v3253 = vld [vmem:[#allocation2 + $0x60] sm:$0xff]
      %v3254 = vld [vmem:[#allocation2 + $0x68] sm:$0xff]
      %v3255 = vld [vmem:[#allocation2 + $0x70] sm:$0xff]
      %v3256 = vld [vmem:[#allocation2 + $0x78] sm:$0xff]
      %s3257 = scalar_lea.vmem %s1, 512
      %v3258 = vld [vmem:[%s3257] sm:$0xf]
      %v3259 = vld [vmem:[%s3257 + $0x4] sm:$0xf]
      %v3260 = vld [vmem:[%s3257 + $0x8] sm:$0xf]
      %v3261 = vld [vmem:[%s3257 + $0xc] sm:$0xf]
      %v3262 = vld [vmem:[%s3257 + $0x10] sm:$0xf]
      %v3263 = vld [vmem:[%s3257 + $0x14] sm:$0xf]
      %v3264 = vld [vmem:[%s3257 + $0x18] sm:$0xf]
      %v3265 = vld [vmem:[%s3257 + $0x1c] sm:$0xf]
      %v3266 = vld [vmem:[%s3257 + $0x20] sm:$0xf]
      %v3267 = vld [vmem:[%s3257 + $0x24] sm:$0xf]
      %v3268 = vld [vmem:[%s3257 + $0x28] sm:$0xf]
      %v3269 = vld [vmem:[%s3257 + $0x2c] sm:$0xf]
      %v3270 = vld [vmem:[%s3257 + $0x30] sm:$0xf]
      %v3271 = vld [vmem:[%s3257 + $0x34] sm:$0xf]
      %v3272 = vld [vmem:[%s3257 + $0x38] sm:$0xf]
      %v3273 = vld [vmem:[%s3257 + $0x3c] sm:$0xf]
      %v3274 = vunpack.c.l.b16 %v3188
      %v3275 = vunpack.c.l.b16 %v3191
      %v3276 = vunpack.c.l.b16 %v3195
      %v3277 = vunpack.c.l.b16 %v3198
      %v3278 = vunpack.c.l.b16 %v3202
      %v3279 = vunpack.c.l.b16 %v3205
      %v3280 = vunpack.c.l.b16 %v3209
      %v3281 = vunpack.c.l.b16 %v3212
      %v3282 = vunpack.c.l.b16 %v3216
      %v3283 = vunpack.c.l.b16 %v3219
      %v3284 = vunpack.c.l.b16 %v3223
      %v3285 = vunpack.c.l.b16 %v3226
      %v3286 = vunpack.c.l.b16 %v3230
      %v3287 = vunpack.c.l.b16 %v3233
      %v3288 = vunpack.c.l.b16 %v3237
      %v3289 = vunpack.c.l.b16 %v3240
      %v3290 = vpack.c.b16 %v3275, %v3274
      %v3291 = vpack.c.b16 %v3277, %v3276
      %v3292 = vpack.c.b16 %v3279, %v3278
      %v3293 = vpack.c.b16 %v3281, %v3280
      %v3294 = vpack.c.b16 %v3283, %v3282
      %v3295 = vpack.c.b16 %v3285, %v3284
      %v3296 = vpack.c.b16 %v3287, %v3286
      %v3297 = vpack.c.b16 %v3289, %v3288
      %v3322 = vunpack.c.l.b16 %v3258
      %v3323 = vunpack.c.l.b16 %v3259
      %v3324 = vunpack.c.l.b16 %v3260
      %v3325 = vunpack.c.l.b16 %v3261
      %v3326 = vunpack.c.l.b16 %v3262
      %v3327 = vunpack.c.l.b16 %v3263
      %v3328 = vunpack.c.l.b16 %v3264
      %v3329 = vunpack.c.l.b16 %v3265
      %v3330 = vunpack.c.l.b16 %v3266
      %v3331 = vunpack.c.l.b16 %v3267
      %v3332 = vunpack.c.l.b16 %v3268
      %v3333 = vunpack.c.l.b16 %v3269
      %v3334 = vunpack.c.l.b16 %v3270
      %v3335 = vunpack.c.l.b16 %v3271
      %v3336 = vunpack.c.l.b16 %v3272
      %v3337 = vunpack.c.l.b16 %v3273
      %v3338 = vpack.c.b16 %v3323, %v3322
      %v3339 = vpack.c.b16 %v3325, %v3324
      %v3340 = vpack.c.b16 %v3327, %v3326
      %v3341 = vpack.c.b16 %v3329, %v3328
      %v3342 = vpack.c.b16 %v3331, %v3330
      %v3343 = vpack.c.b16 %v3333, %v3332
      %v3344 = vpack.c.b16 %v3335, %v3334
      %v3345 = vpack.c.b16 %v3337, %v3336
      %3354 = vmatprep.subr.bf16.mxu0 0
      %3355 = vmatpush1.bf16.msra.mxu0 %v3338
      %3356 = vmatprep.subr.bf16.mxu0 0
      %3357 = vmatpush1.bf16.msra.mxu0 %v3339
      %3358 = vmatprep.subr.bf16.mxu0 0
      %3359 = vmatpush1.bf16.msra.mxu0 %v3340
      %3360 = vmatprep.subr.bf16.mxu0 0
      %3361 = vmatpush1.bf16.msra.mxu0 %v3341
      %3362 = vmatprep.subr.bf16.mxu0 0
      %3363 = vmatpush1.bf16.msra.mxu0 %v3342
      %3364 = vmatprep.subr.bf16.mxu0 0
      %3365 = vmatpush1.bf16.msra.mxu0 %v3343
      %3366 = vmatprep.subr.bf16.mxu0 0
      %3367 = vmatpush1.bf16.msra.mxu0 %v3344
      %3368 = vmatprep.subr.bf16.mxu0 0
      %3369 = vmatpush1.bf16.msra.mxu0 %v3345
      %3370 = vmatprep.subr.bf16.mxu0 0
      %3371 = vmatpush1.bf16.msra.mxu0 0
      %3372 = vmatprep.subr.bf16.mxu0 0
      %3373 = vmatpush1.bf16.msra.mxu0 0
      %3374 = vmatprep.subr.bf16.mxu0 0
      %3375 = vmatpush1.bf16.msra.mxu0 0
      %3376 = vmatprep.subr.bf16.mxu0 0
      %3377 = vmatpush1.bf16.msra.mxu0 0
      %3378 = vmatprep.subr.bf16.mxu0 0
      %3379 = vmatpush1.bf16.msra.mxu0 0
      %3380 = vmatprep.subr.bf16.mxu0 0
      %3381 = vmatpush1.bf16.msra.mxu0 0
      %3382 = vmatprep.subr.bf16.mxu0 0
      %3383 = vmatpush1.bf16.msra.mxu0 0
      %3384 = vmatprep.subr.bf16.mxu0 0
      %3385 = vmatpush1.bf16.msra.mxu0 0
      %3386 = vmatprep.mubr.bf16.mxu0 0
      %3387 = vmatmul.mubr.bf16.gmra.mrb[0].mxu0 %v3290
      %v3388 = vpop.f32.mrb[0].mxu0
      %v3389 = vadd.f32 0.0, %v3388
      %v3390 = vpop.f32.mrb[0].mxu0
      %v3391 = vpop.f32.mrb[0].mxu0
      %v3392 = vadd.f32 0.0, %v3391
      %v3393 = vpop.f32.mrb[0].mxu0
      %3394 = vmatprep.mubr.bf16.mxu0 0
      %3395 = vmatmul.mubr.bf16.gmra.mrb[0].mxu0 %v3291
      %v3396 = vpop.f32.mrb[0].mxu0
      %v3397 = vadd.f32 0.0, %v3396
      %v3398 = vpop.f32.mrb[0].mxu0
      %v3399 = vpop.f32.mrb[0].mxu0
      %v3400 = vadd.f32 0.0, %v3399
      %v3401 = vpop.f32.mrb[0].mxu0
      %3402 = vmatprep.mubr.bf16.mxu0 0
      %3403 = vmatmul.mubr.bf16.gmra.mrb[0].mxu0 %v3292
      %v3404 = vpop.f32.mrb[0].mxu0
      %v3405 = vadd.f32 0.0, %v3404
      %v3406 = vpop.f32.mrb[0].mxu0
      %v3407 = vpop.f32.mrb[0].mxu0
      %v3408 = vadd.f32 0.0, %v3407
      %v3409 = vpop.f32.mrb[0].mxu0
      %3410 = vmatprep.mubr.bf16.mxu0 0
      %3411 = vmatmul.mubr.bf16.gmra.mrb[0].mxu0 %v3293
      %v3412 = vpop.f32.mrb[0].mxu0
      %v3413 = vadd.f32 0.0, %v3412
      %v3414 = vpop.f32.mrb[0].mxu0
      %v3415 = vpop.f32.mrb[0].mxu0
      %v3416 = vadd.f32 0.0, %v3415
      %v3417 = vpop.f32.mrb[0].mxu0
      %3418 = vmatprep.mubr.bf16.mxu0 0
      %3419 = vmatmul.mubr.bf16.gmra.mrb[0].mxu0 %v3294
      %v3420 = vpop.f32.mrb[0].mxu0
      %v3421 = vadd.f32 0.0, %v3420
      %v3422 = vpop.f32.mrb[0].mxu0
      %v3423 = vpop.f32.mrb[0].mxu0
      %v3424 = vadd.f32 0.0, %v3423
      %v3425 = vpop.f32.mrb[0].mxu0
      %3426 = vmatprep.mubr.bf16.mxu0 0
      %3427 = vmatmul.mubr.bf16.gmra.mrb[0].mxu0 %v3295
      %v3428 = vpop.f32.mrb[0].mxu0
      %v3429 = vadd.f32 0.0, %v3428
      %v3430 = vpop.f32.mrb[0].mxu0
      %v3431 = vpop.f32.mrb[0].mxu0
      %v3432 = vadd.f32 0.0, %v3431
      %v3433 = vpop.f32.mrb[0].mxu0
      %3434 = vmatprep.mubr.bf16.mxu0 0
      %3435 = vmatmul.mubr.bf16.gmra.mrb[0].mxu0 %v3296
      %v3436 = vpop.f32.mrb[0].mxu0
      %v3437 = vadd.f32 0.0, %v3436
      %v3438 = vpop.f32.mrb[0].mxu0
      %v3439 = vpop.f32.mrb[0].mxu0
      %v3440 = vadd.f32 0.0, %v3439
      %v3441 = vpop.f32.mrb[0].mxu0
      %3442 = vmatprep.mubr.bf16.mxu0 0
      %3443 = vmatmul.mubr.bf16.gmra.mrb[0].mxu0 %v3297
      %v3444 = vpop.f32.mrb[0].mxu0
      %v3445 = vadd.f32 0.0, %v3444
      %v3446 = vpop.f32.mrb[0].mxu0
      %v3447 = vpop.f32.mrb[0].mxu0
      %v3448 = vadd.f32 0.0, %v3447
      %v3449 = vpop.f32.mrb[0].mxu0
      %3450 = vdwg.mxu0
      %v3451 = vadd.f32 %v3241, %v3389
      %v3452 = vadd.f32 %v3242, %v3392
      %v3453 = vadd.f32 %v3243, %v3397
      %v3454 = vadd.f32 %v3244, %v3400
      %v3455 = vadd.f32 %v3245, %v3405
      %v3456 = vadd.f32 %v3246, %v3408
      %v3457 = vadd.f32 %v3247, %v3413
      %v3458 = vadd.f32 %v3248, %v3416
      %v3459 = vadd.f32 %v3249, %v3421
      %v3460 = vadd.f32 %v3250, %v3424
      %v3461 = vadd.f32 %v3251, %v3429
      %v3462 = vadd.f32 %v3252, %v3432
      %v3463 = vadd.f32 %v3253, %v3437
      %v3464 = vadd.f32 %v3254, %v3440
      %v3465 = vadd.f32 %v3255, %v3445
      %v3466 = vadd.f32 %v3256, %v3448
      %3467 = vst [vmem:[#allocation2] sm:$0xff] %v3451
      %3468 = vst [vmem:[#allocation2 + $0x8] sm:$0xff] %v3452
      %3469 = vst [vmem:[#allocation2 + $0x10] sm:$0xff] %v3453
      %3470 = vst [vmem:[#allocation2 + $0x18] sm:$0xff] %v3454
      %3471 = vst [vmem:[#allocation2 + $0x20] sm:$0xff] %v3455
      %3472 = vst [vmem:[#allocation2 + $0x28] sm:$0xff] %v3456
      %3473 = vst [vmem:[#allocation2 + $0x30] sm:$0xff] %v3457
      %3474 = vst [vmem:[#allocation2 + $0x38] sm:$0xff] %v3458
      %3475 = vst [vmem:[#allocation2 + $0x40] sm:$0xff] %v3459
      %3476 = vst [vmem:[#allocation2 + $0x48] sm:$0xff] %v3460
      %3477 = vst [vmem:[#allocation2 + $0x50] sm:$0xff] %v3461
      %3478 = vst [vmem:[#allocation2 + $0x58] sm:$0xff] %v3462
      %3479 = vst [vmem:[#allocation2 + $0x60] sm:$0xff] %v3463
      %3480 = vst [vmem:[#allocation2 + $0x68] sm:$0xff] %v3464
      %3481 = vst [vmem:[#allocation2 + $0x70] sm:$0xff] %v3465
      %3482 = vst [vmem:[#allocation2 + $0x78] sm:$0xff] %v3466
      %v3483 = vld [vmem:[#allocation2] sm:$0xff]
      %v3484 = vld [vmem:[#allocation2 + $0x8] sm:$0xff]
      %v3485 = vld [vmem:[#allocation2 + $0x10] sm:$0xff]
      %v3486 = vld [vmem:[#allocation2 + $0x18] sm:$0xff]
      %v3487 = vld [vmem:[#allocation2 + $0x20] sm:$0xff]
      %v3488 = vld [vmem:[#allocation2 + $0x28] sm:$0xff]
      %v3489 = vld [vmem:[#allocation2 + $0x30] sm:$0xff]
      %v3490 = vld [vmem:[#allocation2 + $0x38] sm:$0xff]
      %v3491 = vld [vmem:[#allocation2 + $0x40] sm:$0xff]
      %v3492 = vld [vmem:[#allocation2 + $0x48] sm:$0xff]
      %v3493 = vld [vmem:[#allocation2 + $0x50] sm:$0xff]
      %v3494 = vld [vmem:[#allocation2 + $0x58] sm:$0xff]
      %v3495 = vld [vmem:[#allocation2 + $0x60] sm:$0xff]
      %v3496 = vld [vmem:[#allocation2 + $0x68] sm:$0xff]
      %v3497 = vld [vmem:[#allocation2 + $0x70] sm:$0xff]
      %v3498 = vld [vmem:[#allocation2 + $0x78] sm:$0xff]
      %3499 = vst [vmem:[%s205] sm:$0xff] %v3483
      %3500 = vst [vmem:[%s205 + $0x8] sm:$0xff] %v3484
      %3501 = vst [vmem:[%s205 + $0x10] sm:$0xff] %v3485
      %3502 = vst [vmem:[%s205 + $0x18] sm:$0xff] %v3486
      %3503 = vst [vmem:[%s205 + $0x20] sm:$0xff] %v3487
      %3504 = vst [vmem:[%s205 + $0x28] sm:$0xff] %v3488
      %3505 = vst [vmem:[%s205 + $0x30] sm:$0xff] %v3489
      %3506 = vst [vmem:[%s205 + $0x38] sm:$0xff] %v3490
      %3507 = vst [vmem:[%s205 + $0x40] sm:$0xff] %v3491
      %3508 = vst [vmem:[%s205 + $0x48] sm:$0xff] %v3492
      %3509 = vst [vmem:[%s205 + $0x50] sm:$0xff] %v3493
      %3510 = vst [vmem:[%s205 + $0x58] sm:$0xff] %v3494
      %3511 = vst [vmem:[%s205 + $0x60] sm:$0xff] %v3495
      %3512 = vst [vmem:[%s205 + $0x68] sm:$0xff] %v3496
      %3513 = vst [vmem:[%s205 + $0x70] sm:$0xff] %v3497
      %3514 = vst [vmem:[%s205 + $0x78] sm:$0xff] %v3498
      %v3515 = vadd.f32 %v3483, %v3484
      %v3516 = vadd.f32 %v3515, %v3485
      %v3517 = vadd.f32 %v3516, %v3486
      %v3518 = vadd.f32 %v3517, %v3487
      %v3519 = vadd.f32 %v3518, %v3488
      %v3520 = vadd.f32 %v3519, %v3489
      %v3521 = vadd.f32 %v3520, %v3490
      %v3522 = vadd.f32 %v3521, %v3491
      %v3523 = vadd.f32 %v3522, %v3492
      %v3524 = vadd.f32 %v3523, %v3493
      %v3525 = vadd.f32 %v3524, %v3494
      %v3526 = vadd.f32 %v3525, %v3495
      %v3527 = vadd.f32 %v3526, %v3496
      %v3528 = vadd.f32 %v3527, %v3497
      %v3529 = vadd.f32 %v3528, %v3498
      %v3530 = vrot.slane %v3529, 4
      %v3531 = vadd.f32 %v3529, %v3530
      %v3532 = vrot.slane %v3531, 2
      %v3533 = vadd.f32 %v3531, %v3532
      %v3534 = vrot.slane %v3533, 1
      %v3535 = vadd.f32 %v3533, %v3534
      %3536 = vst [vmem:[%s214] sm:$0x1] %v3535
      %v3537 = vmul.f32 %v3483, %v3483
      %v3538 = vmul.f32 %v3484, %v3484
      %v3539 = vmul.f32 %v3485, %v3485
      %v3540 = vmul.f32 %v3486, %v3486
      %v3541 = vmul.f32 %v3487, %v3487
      %v3542 = vmul.f32 %v3488, %v3488
      %v3543 = vmul.f32 %v3489, %v3489
      %v3544 = vmul.f32 %v3490, %v3490
      %v3545 = vmul.f32 %v3491, %v3491
      %v3546 = vmul.f32 %v3492, %v3492
      %v3547 = vmul.f32 %v3493, %v3493
      %v3548 = vmul.f32 %v3494, %v3494
      %v3549 = vmul.f32 %v3495, %v3495
      %v3550 = vmul.f32 %v3496, %v3496
      %v3551 = vmul.f32 %v3497, %v3497
      %v3552 = vmul.f32 %v3498, %v3498
      %v3553 = vadd.f32 %v3537, %v3538
      %v3554 = vadd.f32 %v3553, %v3539
      %v3555 = vadd.f32 %v3554, %v3540
      %v3556 = vadd.f32 %v3555, %v3541
      %v3557 = vadd.f32 %v3556, %v3542
      %v3558 = vadd.f32 %v3557, %v3543
      %v3559 = vadd.f32 %v3558, %v3544
      %v3560 = vadd.f32 %v3559, %v3545
      %v3561 = vadd.f32 %v3560, %v3546
      %v3562 = vadd.f32 %v3561, %v3547
      %v3563 = vadd.f32 %v3562, %v3548
      %v3564 = vadd.f32 %v3563, %v3549
      %v3565 = vadd.f32 %v3564, %v3550
      %v3566 = vadd.f32 %v3565, %v3551
      %v3567 = vadd.f32 %v3566, %v3552
      %v3568 = vrot.slane %v3567, 4
      %v3569 = vadd.f32 %v3567, %v3568
      %v3570 = vrot.slane %v3569, 2
      %v3571 = vadd.f32 %v3569, %v3570
      %v3572 = vrot.slane %v3571, 1
      %v3573 = vadd.f32 %v3571, %v3572
      %3574 = vst [vmem:[%s214 + $0x1] sm:$0x1] %v3573
      %s3575 = smul.u32 16, %s20
      %p3576 = scmp.lt.s32.totalorder %s19, 1
      %s3577 = scalar_select %p3576, %s19, 1
      %p3578 = scmp.lt.s32.totalorder %s3575, 31
      %s3579 = scalar_select %p3578, %s3575, 31
      %s3580 = smul.addr %s3577, 32
      %s3581 = sadd.s32 %s3579, %s3580
      %s3582 = smul.addr %s3581, 8
      %s3583 = scalar_lea.vmem %s2, %s3582
      %p3584 = scmp.lt.s32.totalorder %s19, 1
      %s3585 = scalar_select %p3584, %s19, 1
      %p3586 = scmp.lt.s32.totalorder %s20, 1
      %s3587 = scalar_select %p3586, %s20, 1
      %s3588 = smul.addr %s3585, 2
      %s3589 = sadd.s32 %s3587, %s3588
      %s3590 = smul.addr %s3589, 2
      %s3591 = scalar_lea.vmem %s3, %s3590
      // Predicated region
      $region29: #{res_block_forward.4} parent=27 // pred_check
        %p3592 = pneg %p94
      $region30: #{res_block_forward.4} parent=27 // pred_check_branch
        %3594 = sbr.rel (%p3592) target = $region32
      $region31: #{res_block_forward.4} parent=27 // pred_region
        %s3595 = smul.u32 16, %s20
      $region32: #{res_block_forward.4} parent=27 // pred_fallthru
        _
      // Predicated region
      $region33: #{res_block_forward.4} parent=27 // pred_check
        %p3596 = pneg %p122
      $region34: #{res_block_forward.4} parent=27 // pred_check_branch
        %3598 = sbr.rel (%p3596) target = $region36
      $region35: #{res_block_forward.4} parent=27 // pred_region
        _
      $region36: #{res_block_forward.4} parent=27 // pred_fallthru
        _
    $region28: #{res_block_forward.4} parent=5 // pred_fallthru
      _
    %p3599 = scmp.le.s32.totalorder 2, %s10
    // Predicated region
    $region37: #{res_block_forward.4} parent=5 // pred_check
      %p3600 = pneg %p3599
    $region38: #{res_block_forward.4} parent=5 // pred_check_branch
      %3602 = sbr.rel (%p3600) target = $region40
    $region39: #{res_block_forward.4} parent=5 // pred_region
      %s3603 = ssub.s32 %s10, 2
      // Predicated region
      $region41: #{res_block_forward.4} parent=39 // pred_check
        %p3604 = pneg %p100
      $region42: #{res_block_forward.4} parent=39 // pred_check_branch
        %3606 = sbr.rel (%p3604) target = $region44
      $region43: #{res_block_forward.4} parent=39 // pred_region
        %s3607 = smul.u32 16, %s22
        %p3608 = scmp.lt.s32.totalorder %s21, 1
        %s3609 = scalar_select %p3608, %s21, 1
        %p3610 = scmp.lt.s32.totalorder %s3607, 31
        %s3611 = scalar_select %p3610, %s3607, 31
        %s3612 = smul.addr %s3609, 32
        %s3613 = sadd.s32 %s3611, %s3612
        %s3614 = smul.addr %s3613, 8
        %s3615 = scalar_lea.vmem %s2, %s3614
      $region44: #{res_block_forward.4} parent=39 // pred_fallthru
        _
      // Predicated region
      $region45: #{res_block_forward.4} parent=39 // pred_check
        %p3616 = pneg %p128
      $region46: #{res_block_forward.4} parent=39 // pred_check_branch
        %3618 = sbr.rel (%p3616) target = $region48
      $region47: #{res_block_forward.4} parent=39 // pred_region
        %p3619 = scmp.lt.s32.totalorder %s21, 1
        %s3620 = scalar_select %p3619, %s21, 1
        %p3621 = scmp.lt.s32.totalorder %s22, 1
        %s3622 = scalar_select %p3621, %s22, 1
        %s3623 = smul.addr %s3620, 2
        %s3624 = sadd.s32 %s3622, %s3623
        %s3625 = smul.addr %s3624, 2
        %s3626 = scalar_lea.vmem %s3, %s3625
      $region48: #{res_block_forward.4} parent=39 // pred_fallthru
        _
    $region40: #{res_block_forward.4} parent=5 // pred_fallthru
      _
  $region6: #{res_block_forward.4} parent=0 // loop_footer
    %s14 = sadd.s32 1, %s10
  $region7: #{res_block_forward.4} parent=0 // loop_footer_branch
    %9 = sbr.rel target = $region3
  $region8: #{res_block_forward.4} parent=0 // loop_exit
    _

</llo_original>
